<compile_context>
chip_gen: v7x
topology: tpu7x:2x2x1
jax: 0.10.0
libtpu: 0.0.40
codegen_flags: <defaults>
</compile_context>

<pallas_src>
import functools
import math

import jax
import jax.numpy as jnp
from jax.experimental import pallas as pl
from jax.experimental.pallas import tpu as pltpu


def _softmax_last(x):
    """Numerically-stable softmax over the last axis (f32), EUP reciprocal."""
    m = jnp.max(x, axis=-1, keepdims=True)
    e = jnp.exp(x - m)
    return e * pl.reciprocal(jnp.sum(e, axis=-1, keepdims=True), approx=True)


def _pick_batch_block(B, max_bb=8):
    """Largest divisor of B that is <= max_bb (batch elements per grid step)."""
    for bb in range(min(B, max_bb), 0, -1):
        if B % bb == 0:
            return bb
    return 1


def _dep_parse_head_kernel(
    x_ref, mask_ref,
    w_qkv_ref, b_qkv_ref, w_o_ref, b_o_ref,
    w_qk2_ref, b_qk2_ref,
    w_dense_ref, b_dense_ref, w_out_ref, b_out_ref,
    attn_ref, label_ref,
    o_acc_ref,
    *, nhead,
):
    Bt, T, D = x_ref.shape
    dh = D // nhead
    f32 = jnp.float32
    bf16 = jnp.bfloat16

    mask = mask_ref[...]                                   # (Bt, 1, T) additive 0/-1e9
    x2d = x_ref[...].reshape(Bt * T, D).astype(bf16)       # (Bt*T, D) bf16

    # ---- head_attn_pre: fused QKV projection (one bf16 MXU pass) ----
    qkv = jnp.dot(x2d, w_qkv_ref[...], preferred_element_type=f32) + b_qkv_ref[...]
    qkv = qkv.reshape(Bt, T, 3 * D)                        # f32
    scale = 1.0 / math.sqrt(dh)
    q = (qkv[..., :D] * scale).astype(bf16)                # pre-scaled query
    k = qkv[..., D:2 * D].astype(bf16)
    v = qkv[..., 2 * D:].astype(bf16)

    # Per-head attention, batched over the Bt batch elements in this block.
    # Head outputs are written into a VMEM scratch so the output projection
    # below is a single K=D matmul instead of nhead K=dh matmuls.
    for h in range(nhead):
        sl = slice(h * dh, (h + 1) * dh)
        s = jnp.einsum("bqd,bkd->bqk", q[..., sl], k[..., sl],
                       preferred_element_type=f32)          # (Bt, T, T) f32
        p = _softmax_last(s + mask).astype(bf16)
        oh = jnp.einsum("bqk,bkd->bqd", p, v[..., sl],
                        preferred_element_type=f32)          # (Bt, T, dh) f32
        o_acc_ref[:, sl] = oh.reshape(Bt * T, dh)

    # fused multi-head output projection
    x3 = jnp.dot(o_acc_ref[...].astype(bf16), w_o_ref[...],
                 preferred_element_type=f32) + b_o_ref[...]  # (Bt*T, D) f32
    x3 = x3.astype(bf16)

    # ---- head_attn_post (1 head): only the attention weights are needed ----
    qk2 = jnp.dot(x3, w_qk2_ref[...], preferred_element_type=f32) + b_qk2_ref[...]
    qk2 = qk2.reshape(Bt, T, 2 * D)
    q2 = (qk2[..., :D] * (1.0 / math.sqrt(D))).astype(bf16)
    k2 = qk2[..., D:].astype(bf16)
    s2 = jnp.einsum("bqd,bkd->bqk", q2, k2, preferred_element_type=f32)
    attn_ref[...] = _softmax_last(s2 + mask)                # (Bt, T, T) f32

    # ---- label branch: dense -> relu -> out_proj on the RAW features ----
    hid = jnp.dot(x2d, w_dense_ref[...], preferred_element_type=f32) + b_dense_ref[...]
    hid = jnp.maximum(hid, 0.0).astype(bf16)
    lab = jnp.dot(hid, w_out_ref[...], preferred_element_type=f32) + b_out_ref[...]
    label_ref[...] = lab.reshape(label_ref.shape)           # (Bt, T, Cpad) f32


def dependency_parse_head(features, masks, params, *, nhead=8, batch_block=None):
    """features: (B, T, D) f32, masks: (B, T) bool (True = padding).

    Returns (attn, label) with attn: (B, T, T) f32, label: (B, T, C) f32.
    """
    B, T, D = features.shape
    C = params["out_proj_w"].shape[0]
    assert D % nhead == 0, "d_model must be divisible by nhead"

    if batch_block is None:
        batch_block = _pick_batch_block(B)
    assert B % batch_block == 0
    nb = B // batch_block

    f32, bf16 = jnp.float32, jnp.bfloat16
    Cpad = max(128, ((C + 127) // 128) * 128)               # lane-dense label output

    # Additive key-padding mask, broadcast over query rows: (B, 1, T).
    mask_add = jnp.where(masks, -1e9, 0.0).astype(f32).reshape(B, 1, T)

    # Pre-transpose / pre-slice / pad the PyTorch-layout weights so the kernel
    # contains no transposes and no weight-tensor slicing.
    w_qkv = params["pre_in_w"].T.astype(bf16)                      # (D, 3D)
    b_qkv = params["pre_in_b"].reshape(1, 3 * D).astype(f32)
    w_o = params["pre_out_w"].T.astype(bf16)                       # (D, D)
    b_o = params["pre_out_b"].reshape(1, D).astype(f32)
    w_qk2 = params["post_in_w"][:2 * D, :].T.astype(bf16)          # (D, 2D); V unused
    b_qk2 = params["post_in_b"][:2 * D].reshape(1, 2 * D).astype(f32)
    w_dense = params["dense_w"].T.astype(bf16)                     # (D, D)
    b_dense = params["dense_b"].reshape(1, D).astype(f32)
    w_out = jnp.zeros((D, Cpad), bf16).at[:, :C].set(params["out_proj_w"].T.astype(bf16))
    b_out = jnp.zeros((1, Cpad), f32).at[:, :C].set(params["out_proj_b"].reshape(1, C).astype(f32))

    wmap = lambda b: (0, 0)   # constant index_map: weights DMA'd once
    in_specs = [
        pl.BlockSpec((batch_block, T, D), lambda b: (b, 0, 0)),    # features
        pl.BlockSpec((batch_block, 1, T), lambda b: (b, 0, 0)),    # additive mask
        pl.BlockSpec((D, 3 * D), wmap),                            # fused QKV W
        pl.BlockSpec((1, 3 * D), wmap),                            # fused QKV b
        pl.BlockSpec((D, D), wmap),                                # attn out_proj W
        pl.BlockSpec((1, D), wmap),                                # attn out_proj b
        pl.BlockSpec((D, 2 * D), wmap),                            # post-attn QK W
        pl.BlockSpec((1, 2 * D), wmap),                            # post-attn QK b
        pl.BlockSpec((D, D), wmap),                                # dense W
        pl.BlockSpec((1, D), wmap),                                # dense b
        pl.BlockSpec((D, Cpad), wmap),                             # label out_proj W (padded)
        pl.BlockSpec((1, Cpad), wmap),                             # label out_proj b (padded)
    ]
    out_specs = [
        pl.BlockSpec((batch_block, T, T), lambda b: (b, 0, 0)),    # attention weights
        pl.BlockSpec((batch_block, T, Cpad), lambda b: (b, 0, 0)), # label logits (padded)
    ]
    out_shape = [
        jax.ShapeDtypeStruct((B, T, T), f32),
        jax.ShapeDtypeStruct((B, T, Cpad), f32),
    ]

    kernel = functools.partial(_dep_parse_head_kernel, nhead=nhead)
    attn, label_pad = pl.pallas_call(
        kernel,
        grid=(nb,),
        in_specs=in_specs,
        out_specs=out_specs,
        out_shape=out_shape,
        scratch_shapes=[pltpu.VMEM((batch_block * T, D), f32)],    # concat of head outputs
        compiler_params=pltpu.CompilerParams(
            dimension_semantics=("parallel",),
            vmem_limit_bytes=64 * 1024 * 1024,
        ),
    )(
        features, mask_add,
        w_qkv, b_qkv, w_o, b_o,
        w_qk2, b_qk2,
        w_dense, b_dense, w_out, b_out,
    )
    return attn, label_pad[..., :C]


def init_params(key, d_model, num_classes0):
    """PyTorch-layout parameters (nn.Linear / nn.MultiheadAttention shapes)."""
    ks = jax.random.split(key, 10)
    scale = 0.02

    def n(k, shape):
        return (scale * jax.random.normal(k, shape)).astype(jnp.float32)

    return dict(
        pre_in_w=n(ks[0], (3 * d_model, d_model)),
        pre_in_b=n(ks[1], (3 * d_model,)),
        pre_out_w=n(ks[2], (d_model, d_model)),
        pre_out_b=n(ks[3], (d_model,)),
        post_in_w=n(ks[4], (3 * d_model, d_model)),
        post_in_b=n(ks[5], (3 * d_model,)),
        dense_w=n(ks[6], (d_model, d_model)),
        dense_b=n(ks[7], (d_model,)),
        out_proj_w=n(ks[8], (num_classes0, d_model)),
        out_proj_b=n(ks[9], (num_classes0,)),
    )


if __name__ == "__main__":
    key = jax.random.PRNGKey(0)
    k_feat, k_params = jax.random.split(key)

    B, T, D, H, C = 2, 8, 32, 8, 5   # batch, seq, d_model, nhead, num_classes0
    features = jax.random.normal(k_feat, (B, T, D), dtype=jnp.float32)
    # key_padding_mask: True == padding; pad last two positions of batch 1
    masks = jnp.zeros((B, T), dtype=bool).at[1, -2:].set(True)

    params = init_params(k_params, D, C)

    attn, label = dependency_parse_head(features, masks, params, nhead=H)
    jax.block_until_ready((attn, label))

    assert attn.shape == (B, T, T) and attn.dtype == jnp.float32
    assert label.shape == (B, T, C) and label.dtype == jnp.float32
    assert bool(jnp.all(jnp.isfinite(attn))) and bool(jnp.all(jnp.isfinite(label)))
    print("KERNEL_OK")
</pallas_src>

<mosaic_0001>
module attributes {stable_mosaic.version = 11 : i64} {
  func.func @_dep_parse_head_kernel(%arg0: i32, %arg1: memref<2x8x32xf32, #tpu.memory_space<vmem>>, %arg2: memref<2x1x8xf32, #tpu.memory_space<vmem>>, %arg3: memref<32x96xbf16, #tpu.memory_space<vmem>>, %arg4: memref<1x96xf32, #tpu.memory_space<vmem>>, %arg5: memref<32x32xbf16, #tpu.memory_space<vmem>>, %arg6: memref<1x32xf32, #tpu.memory_space<vmem>>, %arg7: memref<32x64xbf16, #tpu.memory_space<vmem>>, %arg8: memref<1x64xf32, #tpu.memory_space<vmem>>, %arg9: memref<32x32xbf16, #tpu.memory_space<vmem>>, %arg10: memref<1x32xf32, #tpu.memory_space<vmem>>, %arg11: memref<32x128xbf16, #tpu.memory_space<vmem>>, %arg12: memref<1x128xf32, #tpu.memory_space<vmem>>, %arg13: memref<2x8x8xf32, #tpu.memory_space<vmem>>, %arg14: memref<2x8x128xf32, #tpu.memory_space<vmem>>, %arg15: memref<16x32xf32, #tpu.memory_space<vmem>>) attributes {dimension_semantics = [#tpu.dimension_semantics<parallel>], iteration_bounds = array<i64: 1>, scalar_prefetch = 0 : i64, scratch_operands = 1 : i64, tpu.core_type = #tpu.core_type<tc>, window_params = [{transform_indices = @transform_0, window_bounds = array<i64: 2, 8, 32>}, {transform_indices = @transform_1, window_bounds = array<i64: 2, 1, 8>}, {pipeline_mode = #tpu.pipeline_mode<synchronous>, transform_indices = @transform_2, window_bounds = array<i64: 32, 96>}, {pipeline_mode = #tpu.pipeline_mode<synchronous>, transform_indices = @transform_3, window_bounds = array<i64: 1, 96>}, {pipeline_mode = #tpu.pipeline_mode<synchronous>, transform_indices = @transform_4, window_bounds = array<i64: 32, 32>}, {pipeline_mode = #tpu.pipeline_mode<synchronous>, transform_indices = @transform_5, window_bounds = array<i64: 1, 32>}, {pipeline_mode = #tpu.pipeline_mode<synchronous>, transform_indices = @transform_6, window_bounds = array<i64: 32, 64>}, {pipeline_mode = #tpu.pipeline_mode<synchronous>, transform_indices = @transform_7, window_bounds = array<i64: 1, 64>}, {pipeline_mode = #tpu.pipeline_mode<synchronous>, transform_indices = @transform_8, window_bounds = array<i64: 32, 32>}, {pipeline_mode = #tpu.pipeline_mode<synchronous>, transform_indices = @transform_9, window_bounds = array<i64: 1, 32>}, {pipeline_mode = #tpu.pipeline_mode<synchronous>, transform_indices = @transform_10, window_bounds = array<i64: 32, 128>}, {pipeline_mode = #tpu.pipeline_mode<synchronous>, transform_indices = @transform_11, window_bounds = array<i64: 1, 128>}, {transform_indices = @transform_12, window_bounds = array<i64: 2, 8, 8>}, {transform_indices = @transform_13, window_bounds = array<i64: 2, 8, 128>}]} {
    %c0 = arith.constant 0 : index
    %c0_0 = arith.constant 0 : index
    %c0_1 = arith.constant 0 : index
    %0 = vector.load %arg2[%c0, %c0_0, %c0_1] : memref<2x1x8xf32, #tpu.memory_space<vmem>>, vector<2x1x8xf32>
    %c0_2 = arith.constant 0 : index
    %c0_3 = arith.constant 0 : index
    %c0_4 = arith.constant 0 : index
    %1 = vector.load %arg1[%c0_2, %c0_3, %c0_4] : memref<2x8x32xf32, #tpu.memory_space<vmem>>, vector<2x8x32xf32>
    %2 = vector.shape_cast %1 : vector<2x8x32xf32> to vector<16x32xf32>
    %3 = arith.truncf %2 : vector<16x32xf32> to vector<16x32xbf16>
    %c0_5 = arith.constant 0 : index
    %c0_6 = arith.constant 0 : index
    %4 = vector.load %arg3[%c0_5, %c0_6] : memref<32x96xbf16, #tpu.memory_space<vmem>>, vector<32x96xbf16>
    %cst = arith.constant dense<0.000000e+00> : vector<16x96xf32>
    %5 = tpu.matmul %3, %4, %cst {dimension_numbers = #tpu.dot_dimension_numbers<[1], [0], [0], [1], [0, 0, 1, 1], [], []>} : vector<16x32xbf16>, vector<32x96xbf16>, vector<16x96xf32> -> vector<16x96xf32>
    %c0_7 = arith.constant 0 : index
    %c0_8 = arith.constant 0 : index
    %6 = vector.load %arg4[%c0_7, %c0_8] : memref<1x96xf32, #tpu.memory_space<vmem>>, vector<1x96xf32>
    %7 = vector.broadcast %6 : vector<1x96xf32> to vector<16x96xf32>
    %8 = arith.addf %5, %7 : vector<16x96xf32>
    %9 = vector.shape_cast %8 : vector<16x96xf32> to vector<2x8x96xf32>
    %10 = vector.extract_strided_slice %9 {offsets = [0, 0, 0], sizes = [2, 8, 32], strides = [1, 1, 1]} : vector<2x8x96xf32> to vector<2x8x32xf32>
    %cst_9 = arith.constant 5.000000e-01 : f32
    %11 = vector.broadcast %cst_9 : f32 to vector<2x8x32xf32>
    %12 = arith.mulf %10, %11 : vector<2x8x32xf32>
    %13 = arith.truncf %12 : vector<2x8x32xf32> to vector<2x8x32xbf16>
    %14 = vector.extract_strided_slice %9 {offsets = [0, 0, 32], sizes = [2, 8, 32], strides = [1, 1, 1]} : vector<2x8x96xf32> to vector<2x8x32xf32>
    %15 = arith.truncf %14 : vector<2x8x32xf32> to vector<2x8x32xbf16>
    %16 = vector.extract_strided_slice %9 {offsets = [0, 0, 64], sizes = [2, 8, 32], strides = [1, 1, 1]} : vector<2x8x96xf32> to vector<2x8x32xf32>
    %17 = arith.truncf %16 : vector<2x8x32xf32> to vector<2x8x32xbf16>
    %18 = vector.extract_strided_slice %13 {offsets = [0, 0, 0], sizes = [2, 8, 4], strides = [1, 1, 1]} : vector<2x8x32xbf16> to vector<2x8x4xbf16>
    %19 = vector.extract_strided_slice %15 {offsets = [0, 0, 0], sizes = [2, 8, 4], strides = [1, 1, 1]} : vector<2x8x32xbf16> to vector<2x8x4xbf16>
    "tpu.trace_start"() <{level = 10 : i32, message = "bqd,bkd->bqk"}> : () -> ()
    %cst_10 = arith.constant dense<0.000000e+00> : vector<2x8x8xf32>
    %20 = tpu.matmul %18, %19, %cst_10 {dimension_numbers = #tpu.dot_dimension_numbers<[2], [2], [1], [1], [0, 0, 0, 1, 1, 1], [0], [0]>} : vector<2x8x4xbf16>, vector<2x8x4xbf16>, vector<2x8x8xf32> -> vector<2x8x8xf32>
    "tpu.trace_stop"() : () -> ()
    %21 = vector.broadcast %0 : vector<2x1x8xf32> to vector<2x8x8xf32>
    %22 = arith.addf %20, %21 : vector<2x8x8xf32>
    %cst_11 = arith.constant dense<0xFF800000> : vector<2x8xf32>
    %23 = vector.multi_reduction <maximumf>, %22, %cst_11 [2] : vector<2x8x8xf32> to vector<2x8xf32>
    %24 = vector.shape_cast %23 : vector<2x8xf32> to vector<2x8x1xf32>
    %25 = vector.broadcast %24 : vector<2x8x1xf32> to vector<2x8x8xf32>
    %26 = arith.subf %22, %25 : vector<2x8x8xf32>
    %27 = math.exp %26 : vector<2x8x8xf32>
    %cst_12 = arith.constant dense<0.000000e+00> : vector<2x8xf32>
    %28 = vector.multi_reduction <add>, %27, %cst_12 [2] : vector<2x8x8xf32> to vector<2x8xf32>
    %29 = vector.shape_cast %28 : vector<2x8xf32> to vector<2x8x1xf32>
    %30 = tpu.reciprocal %29 {approx = true} : vector<2x8x1xf32> -> vector<2x8x1xf32>
    %31 = vector.broadcast %30 : vector<2x8x1xf32> to vector<2x8x8xf32>
    %32 = arith.mulf %27, %31 : vector<2x8x8xf32>
    %33 = arith.truncf %32 : vector<2x8x8xf32> to vector<2x8x8xbf16>
    %34 = vector.extract_strided_slice %17 {offsets = [0, 0, 0], sizes = [2, 8, 4], strides = [1, 1, 1]} : vector<2x8x32xbf16> to vector<2x8x4xbf16>
    "tpu.trace_start"() <{level = 10 : i32, message = "bqk,bkd->bqd"}> : () -> ()
    %cst_13 = arith.constant dense<0.000000e+00> : vector<2x8x4xf32>
    %35 = tpu.matmul %33, %34, %cst_13 {dimension_numbers = #tpu.dot_dimension_numbers<[2], [1], [1], [2], [0, 0, 0, 1, 1, 2], [0], [0]>} : vector<2x8x8xbf16>, vector<2x8x4xbf16>, vector<2x8x4xf32> -> vector<2x8x4xf32>
    "tpu.trace_stop"() : () -> ()
    %36 = vector.shape_cast %35 : vector<2x8x4xf32> to vector<16x4xf32>
    %c0_14 = arith.constant 0 : index
    %c0_15 = arith.constant 0 : index
    %37 = vector.load %arg15[%c0_14, %c0_15] : memref<16x32xf32, #tpu.memory_space<vmem>>, vector<16x4xf32>
    tpu.vector_store %arg15[%c0_14, %c0_15], %36 {strides = array<i32>} : memref<16x32xf32, #tpu.memory_space<vmem>>, vector<16x4xf32>,
    %38 = vector.extract_strided_slice %13 {offsets = [0, 0, 4], sizes = [2, 8, 4], strides = [1, 1, 1]} : vector<2x8x32xbf16> to vector<2x8x4xbf16>
    %39 = vector.extract_strided_slice %15 {offsets = [0, 0, 4], sizes = [2, 8, 4], strides = [1, 1, 1]} : vector<2x8x32xbf16> to vector<2x8x4xbf16>
    "tpu.trace_start"() <{level = 10 : i32, message = "bqd,bkd->bqk"}> : () -> ()
    %cst_16 = arith.constant dense<0.000000e+00> : vector<2x8x8xf32>
    %40 = tpu.matmul %38, %39, %cst_16 {dimension_numbers = #tpu.dot_dimension_numbers<[2], [2], [1], [1], [0, 0, 0, 1, 1, 1], [0], [0]>} : vector<2x8x4xbf16>, vector<2x8x4xbf16>, vector<2x8x8xf32> -> vector<2x8x8xf32>
    "tpu.trace_stop"() : () -> ()
    %41 = vector.broadcast %0 : vector<2x1x8xf32> to vector<2x8x8xf32>
    %42 = arith.addf %40, %41 : vector<2x8x8xf32>
    %cst_17 = arith.constant dense<0xFF800000> : vector<2x8xf32>
    %43 = vector.multi_reduction <maximumf>, %42, %cst_17 [2] : vector<2x8x8xf32> to vector<2x8xf32>
    %44 = vector.shape_cast %43 : vector<2x8xf32> to vector<2x8x1xf32>
    %45 = vector.broadcast %44 : vector<2x8x1xf32> to vector<2x8x8xf32>
    %46 = arith.subf %42, %45 : vector<2x8x8xf32>
    %47 = math.exp %46 : vector<2x8x8xf32>
    %cst_18 = arith.constant dense<0.000000e+00> : vector<2x8xf32>
    %48 = vector.multi_reduction <add>, %47, %cst_18 [2] : vector<2x8x8xf32> to vector<2x8xf32>
    %49 = vector.shape_cast %48 : vector<2x8xf32> to vector<2x8x1xf32>
    %50 = tpu.reciprocal %49 {approx = true} : vector<2x8x1xf32> -> vector<2x8x1xf32>
    %51 = vector.broadcast %50 : vector<2x8x1xf32> to vector<2x8x8xf32>
    %52 = arith.mulf %47, %51 : vector<2x8x8xf32>
    %53 = arith.truncf %52 : vector<2x8x8xf32> to vector<2x8x8xbf16>
    %54 = vector.extract_strided_slice %17 {offsets = [0, 0, 4], sizes = [2, 8, 4], strides = [1, 1, 1]} : vector<2x8x32xbf16> to vector<2x8x4xbf16>
    "tpu.trace_start"() <{level = 10 : i32, message = "bqk,bkd->bqd"}> : () -> ()
    %cst_19 = arith.constant dense<0.000000e+00> : vector<2x8x4xf32>
    %55 = tpu.matmul %53, %54, %cst_19 {dimension_numbers = #tpu.dot_dimension_numbers<[2], [1], [1], [2], [0, 0, 0, 1, 1, 2], [0], [0]>} : vector<2x8x8xbf16>, vector<2x8x4xbf16>, vector<2x8x4xf32> -> vector<2x8x4xf32>
    "tpu.trace_stop"() : () -> ()
    %56 = vector.shape_cast %55 : vector<2x8x4xf32> to vector<16x4xf32>
    %c0_20 = arith.constant 0 : index
    %c4 = arith.constant 4 : index
    %57 = vector.load %arg15[%c0_20, %c4] : memref<16x32xf32, #tpu.memory_space<vmem>>, vector<16x4xf32>
    tpu.vector_store %arg15[%c0_20, %c4], %56 {strides = array<i32>} : memref<16x32xf32, #tpu.memory_space<vmem>>, vector<16x4xf32>,
    %58 = vector.extract_strided_slice %13 {offsets = [0, 0, 8], sizes = [2, 8, 4], strides = [1, 1, 1]} : vector<2x8x32xbf16> to vector<2x8x4xbf16>
    %59 = vector.extract_strided_slice %15 {offsets = [0, 0, 8], sizes = [2, 8, 4], strides = [1, 1, 1]} : vector<2x8x32xbf16> to vector<2x8x4xbf16>
    "tpu.trace_start"() <{level = 10 : i32, message = "bqd,bkd->bqk"}> : () -> ()
    %cst_21 = arith.constant dense<0.000000e+00> : vector<2x8x8xf32>
    %60 = tpu.matmul %58, %59, %cst_21 {dimension_numbers = #tpu.dot_dimension_numbers<[2], [2], [1], [1], [0, 0, 0, 1, 1, 1], [0], [0]>} : vector<2x8x4xbf16>, vector<2x8x4xbf16>, vector<2x8x8xf32> -> vector<2x8x8xf32>
    "tpu.trace_stop"() : () -> ()
    %61 = vector.broadcast %0 : vector<2x1x8xf32> to vector<2x8x8xf32>
    %62 = arith.addf %60, %61 : vector<2x8x8xf32>
    %cst_22 = arith.constant dense<0xFF800000> : vector<2x8xf32>
    %63 = vector.multi_reduction <maximumf>, %62, %cst_22 [2] : vector<2x8x8xf32> to vector<2x8xf32>
    %64 = vector.shape_cast %63 : vector<2x8xf32> to vector<2x8x1xf32>
    %65 = vector.broadcast %64 : vector<2x8x1xf32> to vector<2x8x8xf32>
    %66 = arith.subf %62, %65 : vector<2x8x8xf32>
    %67 = math.exp %66 : vector<2x8x8xf32>
    %cst_23 = arith.constant dense<0.000000e+00> : vector<2x8xf32>
    %68 = vector.multi_reduction <add>, %67, %cst_23 [2] : vector<2x8x8xf32> to vector<2x8xf32>
    %69 = vector.shape_cast %68 : vector<2x8xf32> to vector<2x8x1xf32>
    %70 = tpu.reciprocal %69 {approx = true} : vector<2x8x1xf32> -> vector<2x8x1xf32>
    %71 = vector.broadcast %70 : vector<2x8x1xf32> to vector<2x8x8xf32>
    %72 = arith.mulf %67, %71 : vector<2x8x8xf32>
    %73 = arith.truncf %72 : vector<2x8x8xf32> to vector<2x8x8xbf16>
    %74 = vector.extract_strided_slice %17 {offsets = [0, 0, 8], sizes = [2, 8, 4], strides = [1, 1, 1]} : vector<2x8x32xbf16> to vector<2x8x4xbf16>
    "tpu.trace_start"() <{level = 10 : i32, message = "bqk,bkd->bqd"}> : () -> ()
    %cst_24 = arith.constant dense<0.000000e+00> : vector<2x8x4xf32>
    %75 = tpu.matmul %73, %74, %cst_24 {dimension_numbers = #tpu.dot_dimension_numbers<[2], [1], [1], [2], [0, 0, 0, 1, 1, 2], [0], [0]>} : vector<2x8x8xbf16>, vector<2x8x4xbf16>, vector<2x8x4xf32> -> vector<2x8x4xf32>
    "tpu.trace_stop"() : () -> ()
    %76 = vector.shape_cast %75 : vector<2x8x4xf32> to vector<16x4xf32>
    %c0_25 = arith.constant 0 : index
    %c8 = arith.constant 8 : index
    %77 = vector.load %arg15[%c0_25, %c8] : memref<16x32xf32, #tpu.memory_space<vmem>>, vector<16x4xf32>
    tpu.vector_store %arg15[%c0_25, %c8], %76 {strides = array<i32>} : memref<16x32xf32, #tpu.memory_space<vmem>>, vector<16x4xf32>,
    %78 = vector.extract_strided_slice %13 {offsets = [0, 0, 12], sizes = [2, 8, 4], strides = [1, 1, 1]} : vector<2x8x32xbf16> to vector<2x8x4xbf16>
    %79 = vector.extract_strided_slice %15 {offsets = [0, 0, 12], sizes = [2, 8, 4], strides = [1, 1, 1]} : vector<2x8x32xbf16> to vector<2x8x4xbf16>
    "tpu.trace_start"() <{level = 10 : i32, message = "bqd,bkd->bqk"}> : () -> ()
    %cst_26 = arith.constant dense<0.000000e+00> : vector<2x8x8xf32>
    %80 = tpu.matmul %78, %79, %cst_26 {dimension_numbers = #tpu.dot_dimension_numbers<[2], [2], [1], [1], [0, 0, 0, 1, 1, 1], [0], [0]>} : vector<2x8x4xbf16>, vector<2x8x4xbf16>, vector<2x8x8xf32> -> vector<2x8x8xf32>
    "tpu.trace_stop"() : () -> ()
    %81 = vector.broadcast %0 : vector<2x1x8xf32> to vector<2x8x8xf32>
    %82 = arith.addf %80, %81 : vector<2x8x8xf32>
    %cst_27 = arith.constant dense<0xFF800000> : vector<2x8xf32>
    %83 = vector.multi_reduction <maximumf>, %82, %cst_27 [2] : vector<2x8x8xf32> to vector<2x8xf32>
    %84 = vector.shape_cast %83 : vector<2x8xf32> to vector<2x8x1xf32>
    %85 = vector.broadcast %84 : vector<2x8x1xf32> to vector<2x8x8xf32>
    %86 = arith.subf %82, %85 : vector<2x8x8xf32>
    %87 = math.exp %86 : vector<2x8x8xf32>
    %cst_28 = arith.constant dense<0.000000e+00> : vector<2x8xf32>
    %88 = vector.multi_reduction <add>, %87, %cst_28 [2] : vector<2x8x8xf32> to vector<2x8xf32>
    %89 = vector.shape_cast %88 : vector<2x8xf32> to vector<2x8x1xf32>
    %90 = tpu.reciprocal %89 {approx = true} : vector<2x8x1xf32> -> vector<2x8x1xf32>
    %91 = vector.broadcast %90 : vector<2x8x1xf32> to vector<2x8x8xf32>
    %92 = arith.mulf %87, %91 : vector<2x8x8xf32>
    %93 = arith.truncf %92 : vector<2x8x8xf32> to vector<2x8x8xbf16>
    %94 = vector.extract_strided_slice %17 {offsets = [0, 0, 12], sizes = [2, 8, 4], strides = [1, 1, 1]} : vector<2x8x32xbf16> to vector<2x8x4xbf16>
    "tpu.trace_start"() <{level = 10 : i32, message = "bqk,bkd->bqd"}> : () -> ()
    %cst_29 = arith.constant dense<0.000000e+00> : vector<2x8x4xf32>
    %95 = tpu.matmul %93, %94, %cst_29 {dimension_numbers = #tpu.dot_dimension_numbers<[2], [1], [1], [2], [0, 0, 0, 1, 1, 2], [0], [0]>} : vector<2x8x8xbf16>, vector<2x8x4xbf16>, vector<2x8x4xf32> -> vector<2x8x4xf32>
    "tpu.trace_stop"() : () -> ()
    %96 = vector.shape_cast %95 : vector<2x8x4xf32> to vector<16x4xf32>
    %c0_30 = arith.constant 0 : index
    %c12 = arith.constant 12 : index
    %97 = vector.load %arg15[%c0_30, %c12] : memref<16x32xf32, #tpu.memory_space<vmem>>, vector<16x4xf32>
    tpu.vector_store %arg15[%c0_30, %c12], %96 {strides = array<i32>} : memref<16x32xf32, #tpu.memory_space<vmem>>, vector<16x4xf32>,
    %98 = vector.extract_strided_slice %13 {offsets = [0, 0, 16], sizes = [2, 8, 4], strides = [1, 1, 1]} : vector<2x8x32xbf16> to vector<2x8x4xbf16>
    %99 = vector.extract_strided_slice %15 {offsets = [0, 0, 16], sizes = [2, 8, 4], strides = [1, 1, 1]} : vector<2x8x32xbf16> to vector<2x8x4xbf16>
    "tpu.trace_start"() <{level = 10 : i32, message = "bqd,bkd->bqk"}> : () -> ()
    %cst_31 = arith.constant dense<0.000000e+00> : vector<2x8x8xf32>
    %100 = tpu.matmul %98, %99, %cst_31 {dimension_numbers = #tpu.dot_dimension_numbers<[2], [2], [1], [1], [0, 0, 0, 1, 1, 1], [0], [0]>} : vector<2x8x4xbf16>, vector<2x8x4xbf16>, vector<2x8x8xf32> -> vector<2x8x8xf32>
    "tpu.trace_stop"() : () -> ()
    %101 = vector.broadcast %0 : vector<2x1x8xf32> to vector<2x8x8xf32>
    %102 = arith.addf %100, %101 : vector<2x8x8xf32>
    %cst_32 = arith.constant dense<0xFF800000> : vector<2x8xf32>
    %103 = vector.multi_reduction <maximumf>, %102, %cst_32 [2] : vector<2x8x8xf32> to vector<2x8xf32>
    %104 = vector.shape_cast %103 : vector<2x8xf32> to vector<2x8x1xf32>
    %105 = vector.broadcast %104 : vector<2x8x1xf32> to vector<2x8x8xf32>
    %106 = arith.subf %102, %105 : vector<2x8x8xf32>
    %107 = math.exp %106 : vector<2x8x8xf32>
    %cst_33 = arith.constant dense<0.000000e+00> : vector<2x8xf32>
    %108 = vector.multi_reduction <add>, %107, %cst_33 [2] : vector<2x8x8xf32> to vector<2x8xf32>
    %109 = vector.shape_cast %108 : vector<2x8xf32> to vector<2x8x1xf32>
    %110 = tpu.reciprocal %109 {approx = true} : vector<2x8x1xf32> -> vector<2x8x1xf32>
    %111 = vector.broadcast %110 : vector<2x8x1xf32> to vector<2x8x8xf32>
    %112 = arith.mulf %107, %111 : vector<2x8x8xf32>
    %113 = arith.truncf %112 : vector<2x8x8xf32> to vector<2x8x8xbf16>
    %114 = vector.extract_strided_slice %17 {offsets = [0, 0, 16], sizes = [2, 8, 4], strides = [1, 1, 1]} : vector<2x8x32xbf16> to vector<2x8x4xbf16>
    "tpu.trace_start"() <{level = 10 : i32, message = "bqk,bkd->bqd"}> : () -> ()
    %cst_34 = arith.constant dense<0.000000e+00> : vector<2x8x4xf32>
    %115 = tpu.matmul %113, %114, %cst_34 {dimension_numbers = #tpu.dot_dimension_numbers<[2], [1], [1], [2], [0, 0, 0, 1, 1, 2], [0], [0]>} : vector<2x8x8xbf16>, vector<2x8x4xbf16>, vector<2x8x4xf32> -> vector<2x8x4xf32>
    "tpu.trace_stop"() : () -> ()
    %116 = vector.shape_cast %115 : vector<2x8x4xf32> to vector<16x4xf32>
    %c0_35 = arith.constant 0 : index
    %c16 = arith.constant 16 : index
    %117 = vector.load %arg15[%c0_35, %c16] : memref<16x32xf32, #tpu.memory_space<vmem>>, vector<16x4xf32>
    tpu.vector_store %arg15[%c0_35, %c16], %116 {strides = array<i32>} : memref<16x32xf32, #tpu.memory_space<vmem>>, vector<16x4xf32>,
    %118 = vector.extract_strided_slice %13 {offsets = [0, 0, 20], sizes = [2, 8, 4], strides = [1, 1, 1]} : vector<2x8x32xbf16> to vector<2x8x4xbf16>
    %119 = vector.extract_strided_slice %15 {offsets = [0, 0, 20], sizes = [2, 8, 4], strides = [1, 1, 1]} : vector<2x8x32xbf16> to vector<2x8x4xbf16>
    "tpu.trace_start"() <{level = 10 : i32, message = "bqd,bkd->bqk"}> : () -> ()
    %cst_36 = arith.constant dense<0.000000e+00> : vector<2x8x8xf32>
    %120 = tpu.matmul %118, %119, %cst_36 {dimension_numbers = #tpu.dot_dimension_numbers<[2], [2], [1], [1], [0, 0, 0, 1, 1, 1], [0], [0]>} : vector<2x8x4xbf16>, vector<2x8x4xbf16>, vector<2x8x8xf32> -> vector<2x8x8xf32>
    "tpu.trace_stop"() : () -> ()
    %121 = vector.broadcast %0 : vector<2x1x8xf32> to vector<2x8x8xf32>
    %122 = arith.addf %120, %121 : vector<2x8x8xf32>
    %cst_37 = arith.constant dense<0xFF800000> : vector<2x8xf32>
    %123 = vector.multi_reduction <maximumf>, %122, %cst_37 [2] : vector<2x8x8xf32> to vector<2x8xf32>
    %124 = vector.shape_cast %123 : vector<2x8xf32> to vector<2x8x1xf32>
    %125 = vector.broadcast %124 : vector<2x8x1xf32> to vector<2x8x8xf32>
    %126 = arith.subf %122, %125 : vector<2x8x8xf32>
    %127 = math.exp %126 : vector<2x8x8xf32>
    %cst_38 = arith.constant dense<0.000000e+00> : vector<2x8xf32>
    %128 = vector.multi_reduction <add>, %127, %cst_38 [2] : vector<2x8x8xf32> to vector<2x8xf32>
    %129 = vector.shape_cast %128 : vector<2x8xf32> to vector<2x8x1xf32>
    %130 = tpu.reciprocal %129 {approx = true} : vector<2x8x1xf32> -> vector<2x8x1xf32>
    %131 = vector.broadcast %130 : vector<2x8x1xf32> to vector<2x8x8xf32>
    %132 = arith.mulf %127, %131 : vector<2x8x8xf32>
    %133 = arith.truncf %132 : vector<2x8x8xf32> to vector<2x8x8xbf16>
    %134 = vector.extract_strided_slice %17 {offsets = [0, 0, 20], sizes = [2, 8, 4], strides = [1, 1, 1]} : vector<2x8x32xbf16> to vector<2x8x4xbf16>
    "tpu.trace_start"() <{level = 10 : i32, message = "bqk,bkd->bqd"}> : () -> ()
    %cst_39 = arith.constant dense<0.000000e+00> : vector<2x8x4xf32>
    %135 = tpu.matmul %133, %134, %cst_39 {dimension_numbers = #tpu.dot_dimension_numbers<[2], [1], [1], [2], [0, 0, 0, 1, 1, 2], [0], [0]>} : vector<2x8x8xbf16>, vector<2x8x4xbf16>, vector<2x8x4xf32> -> vector<2x8x4xf32>
    "tpu.trace_stop"() : () -> ()
    %136 = vector.shape_cast %135 : vector<2x8x4xf32> to vector<16x4xf32>
    %c0_40 = arith.constant 0 : index
    %c20 = arith.constant 20 : index
    %137 = vector.load %arg15[%c0_40, %c20] : memref<16x32xf32, #tpu.memory_space<vmem>>, vector<16x4xf32>
    tpu.vector_store %arg15[%c0_40, %c20], %136 {strides = array<i32>} : memref<16x32xf32, #tpu.memory_space<vmem>>, vector<16x4xf32>,
    %138 = vector.extract_strided_slice %13 {offsets = [0, 0, 24], sizes = [2, 8, 4], strides = [1, 1, 1]} : vector<2x8x32xbf16> to vector<2x8x4xbf16>
    %139 = vector.extract_strided_slice %15 {offsets = [0, 0, 24], sizes = [2, 8, 4], strides = [1, 1, 1]} : vector<2x8x32xbf16> to vector<2x8x4xbf16>
    "tpu.trace_start"() <{level = 10 : i32, message = "bqd,bkd->bqk"}> : () -> ()
    %cst_41 = arith.constant dense<0.000000e+00> : vector<2x8x8xf32>
    %140 = tpu.matmul %138, %139, %cst_41 {dimension_numbers = #tpu.dot_dimension_numbers<[2], [2], [1], [1], [0, 0, 0, 1, 1, 1], [0], [0]>} : vector<2x8x4xbf16>, vector<2x8x4xbf16>, vector<2x8x8xf32> -> vector<2x8x8xf32>
    "tpu.trace_stop"() : () -> ()
    %141 = vector.broadcast %0 : vector<2x1x8xf32> to vector<2x8x8xf32>
    %142 = arith.addf %140, %141 : vector<2x8x8xf32>
    %cst_42 = arith.constant dense<0xFF800000> : vector<2x8xf32>
    %143 = vector.multi_reduction <maximumf>, %142, %cst_42 [2] : vector<2x8x8xf32> to vector<2x8xf32>
    %144 = vector.shape_cast %143 : vector<2x8xf32> to vector<2x8x1xf32>
    %145 = vector.broadcast %144 : vector<2x8x1xf32> to vector<2x8x8xf32>
    %146 = arith.subf %142, %145 : vector<2x8x8xf32>
    %147 = math.exp %146 : vector<2x8x8xf32>
    %cst_43 = arith.constant dense<0.000000e+00> : vector<2x8xf32>
    %148 = vector.multi_reduction <add>, %147, %cst_43 [2] : vector<2x8x8xf32> to vector<2x8xf32>
    %149 = vector.shape_cast %148 : vector<2x8xf32> to vector<2x8x1xf32>
    %150 = tpu.reciprocal %149 {approx = true} : vector<2x8x1xf32> -> vector<2x8x1xf32>
    %151 = vector.broadcast %150 : vector<2x8x1xf32> to vector<2x8x8xf32>
    %152 = arith.mulf %147, %151 : vector<2x8x8xf32>
    %153 = arith.truncf %152 : vector<2x8x8xf32> to vector<2x8x8xbf16>
    %154 = vector.extract_strided_slice %17 {offsets = [0, 0, 24], sizes = [2, 8, 4], strides = [1, 1, 1]} : vector<2x8x32xbf16> to vector<2x8x4xbf16>
    "tpu.trace_start"() <{level = 10 : i32, message = "bqk,bkd->bqd"}> : () -> ()
    %cst_44 = arith.constant dense<0.000000e+00> : vector<2x8x4xf32>
    %155 = tpu.matmul %153, %154, %cst_44 {dimension_numbers = #tpu.dot_dimension_numbers<[2], [1], [1], [2], [0, 0, 0, 1, 1, 2], [0], [0]>} : vector<2x8x8xbf16>, vector<2x8x4xbf16>, vector<2x8x4xf32> -> vector<2x8x4xf32>
    "tpu.trace_stop"() : () -> ()
    %156 = vector.shape_cast %155 : vector<2x8x4xf32> to vector<16x4xf32>
    %c0_45 = arith.constant 0 : index
    %c24 = arith.constant 24 : index
    %157 = vector.load %arg15[%c0_45, %c24] : memref<16x32xf32, #tpu.memory_space<vmem>>, vector<16x4xf32>
    tpu.vector_store %arg15[%c0_45, %c24], %156 {strides = array<i32>} : memref<16x32xf32, #tpu.memory_space<vmem>>, vector<16x4xf32>,
    %158 = vector.extract_strided_slice %13 {offsets = [0, 0, 28], sizes = [2, 8, 4], strides = [1, 1, 1]} : vector<2x8x32xbf16> to vector<2x8x4xbf16>
    %159 = vector.extract_strided_slice %15 {offsets = [0, 0, 28], sizes = [2, 8, 4], strides = [1, 1, 1]} : vector<2x8x32xbf16> to vector<2x8x4xbf16>
    "tpu.trace_start"() <{level = 10 : i32, message = "bqd,bkd->bqk"}> : () -> ()
    %cst_46 = arith.constant dense<0.000000e+00> : vector<2x8x8xf32>
    %160 = tpu.matmul %158, %159, %cst_46 {dimension_numbers = #tpu.dot_dimension_numbers<[2], [2], [1], [1], [0, 0, 0, 1, 1, 1], [0], [0]>} : vector<2x8x4xbf16>, vector<2x8x4xbf16>, vector<2x8x8xf32> -> vector<2x8x8xf32>
    "tpu.trace_stop"() : () -> ()
    %161 = vector.broadcast %0 : vector<2x1x8xf32> to vector<2x8x8xf32>
    %162 = arith.addf %160, %161 : vector<2x8x8xf32>
    %cst_47 = arith.constant dense<0xFF800000> : vector<2x8xf32>
    %163 = vector.multi_reduction <maximumf>, %162, %cst_47 [2] : vector<2x8x8xf32> to vector<2x8xf32>
    %164 = vector.shape_cast %163 : vector<2x8xf32> to vector<2x8x1xf32>
    %165 = vector.broadcast %164 : vector<2x8x1xf32> to vector<2x8x8xf32>
    %166 = arith.subf %162, %165 : vector<2x8x8xf32>
    %167 = math.exp %166 : vector<2x8x8xf32>
    %cst_48 = arith.constant dense<0.000000e+00> : vector<2x8xf32>
    %168 = vector.multi_reduction <add>, %167, %cst_48 [2] : vector<2x8x8xf32> to vector<2x8xf32>
    %169 = vector.shape_cast %168 : vector<2x8xf32> to vector<2x8x1xf32>
    %170 = tpu.reciprocal %169 {approx = true} : vector<2x8x1xf32> -> vector<2x8x1xf32>
    %171 = vector.broadcast %170 : vector<2x8x1xf32> to vector<2x8x8xf32>
    %172 = arith.mulf %167, %171 : vector<2x8x8xf32>
    %173 = arith.truncf %172 : vector<2x8x8xf32> to vector<2x8x8xbf16>
    %174 = vector.extract_strided_slice %17 {offsets = [0, 0, 28], sizes = [2, 8, 4], strides = [1, 1, 1]} : vector<2x8x32xbf16> to vector<2x8x4xbf16>
    "tpu.trace_start"() <{level = 10 : i32, message = "bqk,bkd->bqd"}> : () -> ()
    %cst_49 = arith.constant dense<0.000000e+00> : vector<2x8x4xf32>
    %175 = tpu.matmul %173, %174, %cst_49 {dimension_numbers = #tpu.dot_dimension_numbers<[2], [1], [1], [2], [0, 0, 0, 1, 1, 2], [0], [0]>} : vector<2x8x8xbf16>, vector<2x8x4xbf16>, vector<2x8x4xf32> -> vector<2x8x4xf32>
    "tpu.trace_stop"() : () -> ()
    %176 = vector.shape_cast %175 : vector<2x8x4xf32> to vector<16x4xf32>
    %c0_50 = arith.constant 0 : index
    %c28 = arith.constant 28 : index
    %177 = vector.load %arg15[%c0_50, %c28] : memref<16x32xf32, #tpu.memory_space<vmem>>, vector<16x4xf32>
    tpu.vector_store %arg15[%c0_50, %c28], %176 {strides = array<i32>} : memref<16x32xf32, #tpu.memory_space<vmem>>, vector<16x4xf32>,
    %c0_51 = arith.constant 0 : index
    %c0_52 = arith.constant 0 : index
    %178 = vector.load %arg15[%c0_51, %c0_52] : memref<16x32xf32, #tpu.memory_space<vmem>>, vector<16x32xf32>
    %179 = arith.truncf %178 : vector<16x32xf32> to vector<16x32xbf16>
    %c0_53 = arith.constant 0 : index
    %c0_54 = arith.constant 0 : index
    %180 = vector.load %arg5[%c0_53, %c0_54] : memref<32x32xbf16, #tpu.memory_space<vmem>>, vector<32x32xbf16>
    %cst_55 = arith.constant dense<0.000000e+00> : vector<16x32xf32>
    %181 = tpu.matmul %179, %180, %cst_55 {dimension_numbers = #tpu.dot_dimension_numbers<[1], [0], [0], [1], [0, 0, 1, 1], [], []>} : vector<16x32xbf16>, vector<32x32xbf16>, vector<16x32xf32> -> vector<16x32xf32>
    %c0_56 = arith.constant 0 : index
    %c0_57 = arith.constant 0 : index
    %182 = vector.load %arg6[%c0_56, %c0_57] : memref<1x32xf32, #tpu.memory_space<vmem>>, vector<1x32xf32>
    %183 = vector.broadcast %182 : vector<1x32xf32> to vector<16x32xf32>
    %184 = arith.addf %181, %183 : vector<16x32xf32>
    %185 = arith.truncf %184 : vector<16x32xf32> to vector<16x32xbf16>
    %c0_58 = arith.constant 0 : index
    %c0_59 = arith.constant 0 : index
    %186 = vector.load %arg7[%c0_58, %c0_59] : memref<32x64xbf16, #tpu.memory_space<vmem>>, vector<32x64xbf16>
    %cst_60 = arith.constant dense<0.000000e+00> : vector<16x64xf32>
    %187 = tpu.matmul %185, %186, %cst_60 {dimension_numbers = #tpu.dot_dimension_numbers<[1], [0], [0], [1], [0, 0, 1, 1], [], []>} : vector<16x32xbf16>, vector<32x64xbf16>, vector<16x64xf32> -> vector<16x64xf32>
    %c0_61 = arith.constant 0 : index
    %c0_62 = arith.constant 0 : index
    %188 = vector.load %arg8[%c0_61, %c0_62] : memref<1x64xf32, #tpu.memory_space<vmem>>, vector<1x64xf32>
    %189 = vector.broadcast %188 : vector<1x64xf32> to vector<16x64xf32>
    %190 = arith.addf %187, %189 : vector<16x64xf32>
    %191 = vector.shape_cast %190 : vector<16x64xf32> to vector<2x8x64xf32>
    %192 = vector.extract_strided_slice %191 {offsets = [0, 0, 0], sizes = [2, 8, 32], strides = [1, 1, 1]} : vector<2x8x64xf32> to vector<2x8x32xf32>
    %cst_63 = arith.constant 0.176776692 : f32
    %193 = vector.broadcast %cst_63 : f32 to vector<2x8x32xf32>
    %194 = arith.mulf %192, %193 : vector<2x8x32xf32>
    %195 = arith.truncf %194 : vector<2x8x32xf32> to vector<2x8x32xbf16>
    %196 = vector.extract_strided_slice %191 {offsets = [0, 0, 32], sizes = [2, 8, 32], strides = [1, 1, 1]} : vector<2x8x64xf32> to vector<2x8x32xf32>
    %197 = arith.truncf %196 : vector<2x8x32xf32> to vector<2x8x32xbf16>
    "tpu.trace_start"() <{level = 10 : i32, message = "bqd,bkd->bqk"}> : () -> ()
    %cst_64 = arith.constant dense<0.000000e+00> : vector<2x8x8xf32>
    %198 = tpu.matmul %195, %197, %cst_64 {dimension_numbers = #tpu.dot_dimension_numbers<[2], [2], [1], [1], [0, 0, 0, 1, 1, 1], [0], [0]>} : vector<2x8x32xbf16>, vector<2x8x32xbf16>, vector<2x8x8xf32> -> vector<2x8x8xf32>
    "tpu.trace_stop"() : () -> ()
    %199 = vector.broadcast %0 : vector<2x1x8xf32> to vector<2x8x8xf32>
    %200 = arith.addf %198, %199 : vector<2x8x8xf32>
    %cst_65 = arith.constant dense<0xFF800000> : vector<2x8xf32>
    %201 = vector.multi_reduction <maximumf>, %200, %cst_65 [2] : vector<2x8x8xf32> to vector<2x8xf32>
    %202 = vector.shape_cast %201 : vector<2x8xf32> to vector<2x8x1xf32>
    %203 = vector.broadcast %202 : vector<2x8x1xf32> to vector<2x8x8xf32>
    %204 = arith.subf %200, %203 : vector<2x8x8xf32>
    %205 = math.exp %204 : vector<2x8x8xf32>
    %cst_66 = arith.constant dense<0.000000e+00> : vector<2x8xf32>
    %206 = vector.multi_reduction <add>, %205, %cst_66 [2] : vector<2x8x8xf32> to vector<2x8xf32>
    %207 = vector.shape_cast %206 : vector<2x8xf32> to vector<2x8x1xf32>
    %208 = tpu.reciprocal %207 {approx = true} : vector<2x8x1xf32> -> vector<2x8x1xf32>
    %209 = vector.broadcast %208 : vector<2x8x1xf32> to vector<2x8x8xf32>
    %210 = arith.mulf %205, %209 : vector<2x8x8xf32>
    %c0_67 = arith.constant 0 : index
    %c0_68 = arith.constant 0 : index
    %c0_69 = arith.constant 0 : index
    %211 = vector.load %arg13[%c0_67, %c0_68, %c0_69] : memref<2x8x8xf32, #tpu.memory_space<vmem>>, vector<2x8x8xf32>
    tpu.vector_store %arg13[%c0_67, %c0_68, %c0_69], %210 {strides = array<i32>} : memref<2x8x8xf32, #tpu.memory_space<vmem>>, vector<2x8x8xf32>,
    %c0_70 = arith.constant 0 : index
    %c0_71 = arith.constant 0 : index
    %212 = vector.load %arg9[%c0_70, %c0_71] : memref<32x32xbf16, #tpu.memory_space<vmem>>, vector<32x32xbf16>
    %cst_72 = arith.constant dense<0.000000e+00> : vector<16x32xf32>
    %213 = tpu.matmul %3, %212, %cst_72 {dimension_numbers = #tpu.dot_dimension_numbers<[1], [0], [0], [1], [0, 0, 1, 1], [], []>} : vector<16x32xbf16>, vector<32x32xbf16>, vector<16x32xf32> -> vector<16x32xf32>
    %c0_73 = arith.constant 0 : index
    %c0_74 = arith.constant 0 : index
    %214 = vector.load %arg10[%c0_73, %c0_74] : memref<1x32xf32, #tpu.memory_space<vmem>>, vector<1x32xf32>
    %215 = vector.broadcast %214 : vector<1x32xf32> to vector<16x32xf32>
    %216 = arith.addf %213, %215 : vector<16x32xf32>
    %cst_75 = arith.constant 0.000000e+00 : f32
    %217 = vector.broadcast %cst_75 : f32 to vector<16x32xf32>
    %218 = arith.maximumf %216, %217 : vector<16x32xf32>
    %219 = arith.truncf %218 : vector<16x32xf32> to vector<16x32xbf16>
    %c0_76 = arith.constant 0 : index
    %c0_77 = arith.constant 0 : index
    %220 = vector.load %arg11[%c0_76, %c0_77] : memref<32x128xbf16, #tpu.memory_space<vmem>>, vector<32x128xbf16>
    %cst_78 = arith.constant dense<0.000000e+00> : vector<16x128xf32>
    %221 = tpu.matmul %219, %220, %cst_78 {dimension_numbers = #tpu.dot_dimension_numbers<[1], [0], [0], [1], [0, 0, 1, 1], [], []>} : vector<16x32xbf16>, vector<32x128xbf16>, vector<16x128xf32> -> vector<16x128xf32>
    %c0_79 = arith.constant 0 : index
    %c0_80 = arith.constant 0 : index
    %222 = vector.load %arg12[%c0_79, %c0_80] : memref<1x128xf32, #tpu.memory_space<vmem>>, vector<1x128xf32>
    %223 = vector.broadcast %222 : vector<1x128xf32> to vector<16x128xf32>
    %224 = arith.addf %221, %223 : vector<16x128xf32>
    %225 = vector.shape_cast %224 : vector<16x128xf32> to vector<2x8x128xf32>
    %c0_81 = arith.constant 0 : index
    %c0_82 = arith.constant 0 : index
    %c0_83 = arith.constant 0 : index
    %226 = vector.load %arg14[%c0_81, %c0_82, %c0_83] : memref<2x8x128xf32, #tpu.memory_space<vmem>>, vector<2x8x128xf32>
    tpu.vector_store %arg14[%c0_81, %c0_82, %c0_83], %225 {strides = array<i32>} : memref<2x8x128xf32, #tpu.memory_space<vmem>>, vector<2x8x128xf32>,
    return
  }
  func.func @transform_0(%arg0: i32) -> (i32, i32, i32) {
    %c0_i32 = arith.constant 0 : i32
    %c0_i32_0 = arith.constant 0 : i32
    %c0_i32_1 = arith.constant 0 : i32
    return %arg0, %c0_i32, %c0_i32_0 : i32, i32, i32
  }
  func.func @transform_1(%arg0: i32) -> (i32, i32, i32) {
    %c0_i32 = arith.constant 0 : i32
    %c0_i32_0 = arith.constant 0 : i32
    %c0_i32_1 = arith.constant 0 : i32
    return %arg0, %c0_i32, %c0_i32_0 : i32, i32, i32
  }
  func.func @transform_2(%arg0: i32) -> (i32, i32) {
    %c0_i32 = arith.constant 0 : i32
    %c0_i32_0 = arith.constant 0 : i32
    %c0_i32_1 = arith.constant 0 : i32
    return %c0_i32, %c0_i32_0 : i32, i32
  }
  func.func @transform_3(%arg0: i32) -> (i32, i32) {
    %c0_i32 = arith.constant 0 : i32
    %c0_i32_0 = arith.constant 0 : i32
    %c0_i32_1 = arith.constant 0 : i32
    return %c0_i32, %c0_i32_0 : i32, i32
  }
  func.func @transform_4(%arg0: i32) -> (i32, i32) {
    %c0_i32 = arith.constant 0 : i32
    %c0_i32_0 = arith.constant 0 : i32
    %c0_i32_1 = arith.constant 0 : i32
    return %c0_i32, %c0_i32_0 : i32, i32
  }
  func.func @transform_5(%arg0: i32) -> (i32, i32) {
    %c0_i32 = arith.constant 0 : i32
    %c0_i32_0 = arith.constant 0 : i32
    %c0_i32_1 = arith.constant 0 : i32
    return %c0_i32, %c0_i32_0 : i32, i32
  }
  func.func @transform_6(%arg0: i32) -> (i32, i32) {
    %c0_i32 = arith.constant 0 : i32
    %c0_i32_0 = arith.constant 0 : i32
    %c0_i32_1 = arith.constant 0 : i32
    return %c0_i32, %c0_i32_0 : i32, i32
  }
  func.func @transform_7(%arg0: i32) -> (i32, i32) {
    %c0_i32 = arith.constant 0 : i32
    %c0_i32_0 = arith.constant 0 : i32
    %c0_i32_1 = arith.constant 0 : i32
    return %c0_i32, %c0_i32_0 : i32, i32
  }
  func.func @transform_8(%arg0: i32) -> (i32, i32) {
    %c0_i32 = arith.constant 0 : i32
    %c0_i32_0 = arith.constant 0 : i32
    %c0_i32_1 = arith.constant 0 : i32
    return %c0_i32, %c0_i32_0 : i32, i32
  }
  func.func @transform_9(%arg0: i32) -> (i32, i32) {
    %c0_i32 = arith.constant 0 : i32
    %c0_i32_0 = arith.constant 0 : i32
    %c0_i32_1 = arith.constant 0 : i32
    return %c0_i32, %c0_i32_0 : i32, i32
  }
  func.func @transform_10(%arg0: i32) -> (i32, i32) {
    %c0_i32 = arith.constant 0 : i32
    %c0_i32_0 = arith.constant 0 : i32
    %c0_i32_1 = arith.constant 0 : i32
    return %c0_i32, %c0_i32_0 : i32, i32
  }
  func.func @transform_11(%arg0: i32) -> (i32, i32) {
    %c0_i32 = arith.constant 0 : i32
    %c0_i32_0 = arith.constant 0 : i32
    %c0_i32_1 = arith.constant 0 : i32
    return %c0_i32, %c0_i32_0 : i32, i32
  }
  func.func @transform_12(%arg0: i32) -> (i32, i32, i32) {
    %c0_i32 = arith.constant 0 : i32
    %c0_i32_0 = arith.constant 0 : i32
    %c0_i32_1 = arith.constant 0 : i32
    return %arg0, %c0_i32, %c0_i32_0 : i32, i32, i32
  }
  func.func @transform_13(%arg0: i32) -> (i32, i32, i32) {
    %c0_i32 = arith.constant 0 : i32
    %c0_i32_0 = arith.constant 0 : i32
    %c0_i32_1 = arith.constant 0 : i32
    return %arg0, %c0_i32, %c0_i32_0 : i32, i32, i32
  }
}

</mosaic_0001>

<llo_original>
// kernel: tpu_custom_call.1
$region0: #{tpu_custom_call.1}
  #allocation0 [shape = 'u32[]', space=smem, size = 0x4, offset = 0x4, fixed_abs, tag = 'smem constant byte address 0x4 - core index']
  #allocation1 [shape = 'u32[144,128]{1,0:T(1,128)}', space=vmem, size = 0x12000, scoped, tag = 'internal scratch']
  #allocation2 [shape = 'f32[16,32]{1,0:T(8,128)}', space=vmem, size = 0x2000, scoped, tag = 'scratch operand']
  %s0 = inlined_call_operand.hbm [shape: f32[2,8,32], index: 0, kind: input, shape index: {}]
  %s1 = inlined_call_operand.hbm [shape: f32[2,1,8], index: 1, kind: input, shape index: {}]
  %s2 = inlined_call_operand.hbm [shape: bf16[32,96], index: 2, kind: input, shape index: {}]
  %s3 = inlined_call_operand.hbm [shape: f32[1,96], index: 3, kind: input, shape index: {}]
  %s4 = inlined_call_operand.hbm [shape: bf16[32,32], index: 4, kind: input, shape index: {}]
  %s5 = inlined_call_operand.hbm [shape: f32[1,32], index: 5, kind: input, shape index: {}]
  %s6 = inlined_call_operand.hbm [shape: bf16[32,64], index: 6, kind: input, shape index: {}]
  %s7 = inlined_call_operand.hbm [shape: f32[1,64], index: 7, kind: input, shape index: {}]
  %s8 = inlined_call_operand.hbm [shape: bf16[32,32], index: 8, kind: input, shape index: {}]
  %s9 = inlined_call_operand.hbm [shape: f32[1,32], index: 9, kind: input, shape index: {}]
  %s10 = inlined_call_operand.hbm [shape: bf16[32,128], index: 10, kind: input, shape index: {}]
  %s11 = inlined_call_operand.hbm [shape: f32[1,128], index: 11, kind: input, shape index: {}]
  %s12 = inlined_call_operand.hbm [shape: f32[2,8,8], index: 12, kind: output, shape index: {0}]
  %s13 = inlined_call_operand.hbm [shape: f32[2,8,128], index: 13, kind: output, shape index: {1}]
  %14 = xla_tuple %s12, %s13
  %s15 = sld [smem:[#allocation0]]
  $region114: #{tpu_custom_call.1} parent=0
    _
  %s17 = ssub.s32 1, %s15
  %s18 = scalar_select 0, %s17, %s15
  $region1: #{tpu_custom_call.1} parent=0
    #allocation3 [shape = 'u8[8192]{0}', space=vmem, size = 0x2000, scoped, tag = 'input window, operand 0, single buffered']
    #allocation4 [shape = 's32[1]{0}', space=sflag, size = 0x4, scoped, tag = 'scoped memory for tpu_custom_call.1']
    #allocation5 [shape = 's32[1]{0}', space=sflag, size = 0x4, scoped, tag = 'scoped memory for tpu_custom_call.1']
    #allocation6 [shape = 'u8[1024]{0}', space=vmem, size = 0x400, scoped, tag = 'input window, operand 1, single buffered']
    #allocation7 [shape = 's32[1]{0}', space=sflag, size = 0x4, scoped, tag = 'scoped memory for tpu_custom_call.1']
    #allocation8 [shape = 'u8[8192]{0}', space=vmem, size = 0x2000, scoped, tag = 'input window, operand 2, single buffered']
    #allocation9 [shape = 'u8[512]{0}', space=vmem, size = 0x400, scoped, tag = 'input window, operand 3, single buffered']
    #allocation10 [shape = 's32[1]{0}', space=sflag, size = 0x4, scoped, tag = 'scoped memory for tpu_custom_call.1']
    #allocation11 [shape = 'u8[8192]{0}', space=vmem, size = 0x2000, scoped, tag = 'input window, operand 4, single buffered']
    #allocation12 [shape = 'u8[512]{0}', space=vmem, size = 0x400, scoped, tag = 'input window, operand 5, single buffered']
    #allocation13 [shape = 's32[1]{0}', space=sflag, size = 0x4, scoped, tag = 'scoped memory for tpu_custom_call.1']
    #allocation14 [shape = 'u8[8192]{0}', space=vmem, size = 0x2000, scoped, tag = 'input window, operand 6, single buffered']
    #allocation15 [shape = 'u8[512]{0}', space=vmem, size = 0x400, scoped, tag = 'input window, operand 7, single buffered']
    #allocation16 [shape = 's32[1]{0}', space=sflag, size = 0x4, scoped, tag = 'scoped memory for tpu_custom_call.1']
    #allocation17 [shape = 'u8[8192]{0}', space=vmem, size = 0x2000, scoped, tag = 'input window, operand 8, single buffered']
    #allocation18 [shape = 'u8[512]{0}', space=vmem, size = 0x400, scoped, tag = 'input window, operand 9, single buffered']
    #allocation19 [shape = 's32[1]{0}', space=sflag, size = 0x4, scoped, tag = 'scoped memory for tpu_custom_call.1']
    #allocation20 [shape = 'u8[8192]{0}', space=vmem, size = 0x2000, scoped, tag = 'input window, operand 10, single buffered']
    #allocation21 [shape = 'u8[512]{0}', space=vmem, size = 0x400, scoped, tag = 'input window, operand 11, single buffered']
    #allocation22 [shape = 's32[1]{0}', space=sflag, size = 0x4, scoped, tag = 'scoped memory for tpu_custom_call.1']
    #allocation23 [shape = 'u8[8192]{0}', space=vmem, size = 0x2000, scoped, tag = 'output window, operand 0, single buffered']
    #allocation24 [shape = 'u8[8192]{0}', space=vmem, size = 0x2000, scoped, tag = 'output window, operand 1, single buffered']
    #allocation25 [shape = 's32[1]{0}', space=sflag, size = 0x4, scoped, tag = 'scoped memory for tpu_custom_call.1']
    %19 = vsyncpa [#allocation4], 0
    %20 = vsyncpa [#allocation7], 0
    %21 = vsyncpa [#allocation10], 0
    %22 = vsyncpa [#allocation13], 0
    %23 = vsyncpa [#allocation16], 0
    %24 = vsyncpa [#allocation19], 0
    %25 = vsyncpa [#allocation22], 0
    %26 = vsyncpa [#allocation5], 0
    %27 = vsyncpa [#allocation25], 0
    // Predicated region
    $region2: #{tpu_custom_call.1} parent=1 // pred_check
      _
    $region3: #{tpu_custom_call.1} parent=1 // pred_check_branch
      %29 = sbr.rel (0) target = $region5
    $region4: #{tpu_custom_call.1} parent=1 // pred_region
      %s31 = ssub.s32 256, 256
      %32 = vsyncadd [#allocation4], %s31
      %s33 = sshll.u32 [#allocation3], 4
      %s34 = int_to_ptr.vmem [resolvable:$true] %s33
      %39 = dma.hbm_to_vmem [thread:$0]  %s0, 256, %s34, [#allocation4], 128, 128, 8
    $region5: #{tpu_custom_call.1} parent=1 // pred_fallthru
      _
    // Predicated region
    $region6: #{tpu_custom_call.1} parent=1 // pred_check
      _
    $region7: #{tpu_custom_call.1} parent=1 // pred_check_branch
      %41 = sbr.rel (0) target = $region9
    $region8: #{tpu_custom_call.1} parent=1 // pred_region
      %s43 = ssub.s32 32, 32
      %44 = vsyncadd [#allocation7], %s43
      %s45 = sshll.u32 [#allocation6], 4
      %s46 = int_to_ptr.vmem [resolvable:$true] %s45
      %51 = dma.hbm_to_vmem [thread:$0]  %s1, 32, %s46, [#allocation7], 16, 16, 1
    $region9: #{tpu_custom_call.1} parent=1 // pred_fallthru
      _
    // Predicated region
    $region10: #{tpu_custom_call.1} parent=1 // pred_check
      _
    $region11: #{tpu_custom_call.1} parent=1 // pred_check_branch
      %53 = sbr.rel (0) target = $region13
    $region12: #{tpu_custom_call.1} parent=1 // pred_region
      %s55 = ssub.s32 256, 256
      %56 = vsyncadd [#allocation7], %s55
      %s57 = sshll.u32 [#allocation8], 4
      %s58 = int_to_ptr.vmem [resolvable:$true] %s57
      %63 = dma.hbm_to_vmem [thread:$0]  %s2, 256, %s58, [#allocation7], 64, 64, 4
    $region13: #{tpu_custom_call.1} parent=1 // pred_fallthru
      _
    // Predicated region
    $region14: #{tpu_custom_call.1} parent=1 // pred_check
      _
    $region15: #{tpu_custom_call.1} parent=1 // pred_check_branch
      %65 = sbr.rel (0) target = $region17
    $region16: #{tpu_custom_call.1} parent=1 // pred_region
      %s67 = ssub.s32 16, 16
      %68 = vsyncadd [#allocation10], %s67
      %s70 = sshll.u32 [#allocation9], 4
      %s71 = int_to_ptr.vmem [resolvable:$true] %s70
      %73 = dma.hbm_to_vmem [thread:$0]  %s3, 16, %s71, [#allocation10]
    $region17: #{tpu_custom_call.1} parent=1 // pred_fallthru
      _
    // Predicated region
    $region18: #{tpu_custom_call.1} parent=1 // pred_check
      _
    $region19: #{tpu_custom_call.1} parent=1 // pred_check_branch
      %75 = sbr.rel (0) target = $region21
    $region20: #{tpu_custom_call.1} parent=1 // pred_region
      %s77 = ssub.s32 256, 256
      %78 = vsyncadd [#allocation10], %s77
      %s79 = sshll.u32 [#allocation11], 4
      %s80 = int_to_ptr.vmem [resolvable:$true] %s79
      %85 = dma.hbm_to_vmem [thread:$0]  %s4, 256, %s80, [#allocation10], 64, 64, 4
    $region21: #{tpu_custom_call.1} parent=1 // pred_fallthru
      _
    // Predicated region
    $region22: #{tpu_custom_call.1} parent=1 // pred_check
      _
    $region23: #{tpu_custom_call.1} parent=1 // pred_check_branch
      %87 = sbr.rel (0) target = $region25
    $region24: #{tpu_custom_call.1} parent=1 // pred_region
      %s89 = ssub.s32 16, 16
      %90 = vsyncadd [#allocation13], %s89
      %s92 = sshll.u32 [#allocation12], 4
      %s93 = int_to_ptr.vmem [resolvable:$true] %s92
      %95 = dma.hbm_to_vmem [thread:$0]  %s5, 16, %s93, [#allocation13]
    $region25: #{tpu_custom_call.1} parent=1 // pred_fallthru
      _
    // Predicated region
    $region26: #{tpu_custom_call.1} parent=1 // pred_check
      _
    $region27: #{tpu_custom_call.1} parent=1 // pred_check_branch
      %97 = sbr.rel (0) target = $region29
    $region28: #{tpu_custom_call.1} parent=1 // pred_region
      %s99 = ssub.s32 256, 256
      %100 = vsyncadd [#allocation13], %s99
      %s101 = sshll.u32 [#allocation14], 4
      %s102 = int_to_ptr.vmem [resolvable:$true] %s101
      %107 = dma.hbm_to_vmem [thread:$0]  %s6, 256, %s102, [#allocation13], 64, 64, 4
    $region29: #{tpu_custom_call.1} parent=1 // pred_fallthru
      _
    // Predicated region
    $region30: #{tpu_custom_call.1} parent=1 // pred_check
      _
    $region31: #{tpu_custom_call.1} parent=1 // pred_check_branch
      %109 = sbr.rel (0) target = $region33
    $region32: #{tpu_custom_call.1} parent=1 // pred_region
      %s111 = ssub.s32 16, 16
      %112 = vsyncadd [#allocation16], %s111
      %s114 = sshll.u32 [#allocation15], 4
      %s115 = int_to_ptr.vmem [resolvable:$true] %s114
      %117 = dma.hbm_to_vmem [thread:$0]  %s7, 16, %s115, [#allocation16]
    $region33: #{tpu_custom_call.1} parent=1 // pred_fallthru
      _
    // Predicated region
    $region34: #{tpu_custom_call.1} parent=1 // pred_check
      _
    $region35: #{tpu_custom_call.1} parent=1 // pred_check_branch
      %119 = sbr.rel (0) target = $region37
    $region36: #{tpu_custom_call.1} parent=1 // pred_region
      %s121 = ssub.s32 256, 256
      %122 = vsyncadd [#allocation16], %s121
      %s123 = sshll.u32 [#allocation17], 4
      %s124 = int_to_ptr.vmem [resolvable:$true] %s123
      %129 = dma.hbm_to_vmem [thread:$0]  %s8, 256, %s124, [#allocation16], 64, 64, 4
    $region37: #{tpu_custom_call.1} parent=1 // pred_fallthru
      _
    // Predicated region
    $region38: #{tpu_custom_call.1} parent=1 // pred_check
      _
    $region39: #{tpu_custom_call.1} parent=1 // pred_check_branch
      %131 = sbr.rel (0) target = $region41
    $region40: #{tpu_custom_call.1} parent=1 // pred_region
      %s133 = ssub.s32 16, 16
      %134 = vsyncadd [#allocation19], %s133
      %s136 = sshll.u32 [#allocation18], 4
      %s137 = int_to_ptr.vmem [resolvable:$true] %s136
      %139 = dma.hbm_to_vmem [thread:$0]  %s9, 16, %s137, [#allocation19]
    $region41: #{tpu_custom_call.1} parent=1 // pred_fallthru
      _
    // Predicated region
    $region42: #{tpu_custom_call.1} parent=1 // pred_check
      _
    $region43: #{tpu_custom_call.1} parent=1 // pred_check_branch
      %141 = sbr.rel (0) target = $region45
    $region44: #{tpu_custom_call.1} parent=1 // pred_region
      %s143 = ssub.s32 256, 256
      %144 = vsyncadd [#allocation19], %s143
      %s145 = sshll.u32 [#allocation20], 4
      %s146 = int_to_ptr.vmem [resolvable:$true] %s145
      %151 = dma.hbm_to_vmem [thread:$0]  %s10, 256, %s146, [#allocation19], 64, 64, 4
    $region45: #{tpu_custom_call.1} parent=1 // pred_fallthru
      _
    // Predicated region
    $region46: #{tpu_custom_call.1} parent=1 // pred_check
      _
    $region47: #{tpu_custom_call.1} parent=1 // pred_check_branch
      %153 = sbr.rel (0) target = $region49
    $region48: #{tpu_custom_call.1} parent=1 // pred_region
      %s155 = ssub.s32 16, 16
      %156 = vsyncadd [#allocation22], %s155
      %s158 = sshll.u32 [#allocation21], 4
      %s159 = int_to_ptr.vmem [resolvable:$true] %s158
      %161 = dma.hbm_to_vmem [thread:$0]  %s11, 16, %s159, [#allocation22]
    $region49: #{tpu_custom_call.1} parent=1 // pred_fallthru
      _
    // Predicated region
    $region50: #{tpu_custom_call.1} parent=1 // pred_check
      _
    $region51: #{tpu_custom_call.1} parent=1 // pred_check_branch
      %163 = sbr.rel (0) target = $region53
    $region52: #{tpu_custom_call.1} parent=1 // pred_region
      %164 = dma.done [#allocation4], 256
    $region53: #{tpu_custom_call.1} parent=1 // pred_fallthru
      _
    // Predicated region
    $region54: #{tpu_custom_call.1} parent=1 // pred_check
      _
    $region55: #{tpu_custom_call.1} parent=1 // pred_check_branch
      %166 = sbr.rel (0) target = $region57
    $region56: #{tpu_custom_call.1} parent=1 // pred_region
      %167 = dma.done [#allocation7], 32
    $region57: #{tpu_custom_call.1} parent=1 // pred_fallthru
      _
    // Predicated region
    $region58: #{tpu_custom_call.1} parent=1 // pred_check
      _
    $region59: #{tpu_custom_call.1} parent=1 // pred_check_branch
      %169 = sbr.rel (0) target = $region61
    $region60: #{tpu_custom_call.1} parent=1 // pred_region
      %170 = dma.done [#allocation7], 256
    $region61: #{tpu_custom_call.1} parent=1 // pred_fallthru
      _
    // Predicated region
    $region62: #{tpu_custom_call.1} parent=1 // pred_check
      _
    $region63: #{tpu_custom_call.1} parent=1 // pred_check_branch
      %172 = sbr.rel (0) target = $region65
    $region64: #{tpu_custom_call.1} parent=1 // pred_region
      %173 = dma.done [#allocation10], 16
    $region65: #{tpu_custom_call.1} parent=1 // pred_fallthru
      _
    // Predicated region
    $region66: #{tpu_custom_call.1} parent=1 // pred_check
      _
    $region67: #{tpu_custom_call.1} parent=1 // pred_check_branch
      %175 = sbr.rel (0) target = $region69
    $region68: #{tpu_custom_call.1} parent=1 // pred_region
      %176 = dma.done [#allocation10], 256
    $region69: #{tpu_custom_call.1} parent=1 // pred_fallthru
      _
    // Predicated region
    $region70: #{tpu_custom_call.1} parent=1 // pred_check
      _
    $region71: #{tpu_custom_call.1} parent=1 // pred_check_branch
      %178 = sbr.rel (0) target = $region73
    $region72: #{tpu_custom_call.1} parent=1 // pred_region
      %179 = dma.done [#allocation13], 16
    $region73: #{tpu_custom_call.1} parent=1 // pred_fallthru
      _
    // Predicated region
    $region74: #{tpu_custom_call.1} parent=1 // pred_check
      _
    $region75: #{tpu_custom_call.1} parent=1 // pred_check_branch
      %181 = sbr.rel (0) target = $region77
    $region76: #{tpu_custom_call.1} parent=1 // pred_region
      %182 = dma.done [#allocation13], 256
    $region77: #{tpu_custom_call.1} parent=1 // pred_fallthru
      _
    // Predicated region
    $region78: #{tpu_custom_call.1} parent=1 // pred_check
      _
    $region79: #{tpu_custom_call.1} parent=1 // pred_check_branch
      %184 = sbr.rel (0) target = $region81
    $region80: #{tpu_custom_call.1} parent=1 // pred_region
      %185 = dma.done [#allocation16], 16
    $region81: #{tpu_custom_call.1} parent=1 // pred_fallthru
      _
    // Predicated region
    $region82: #{tpu_custom_call.1} parent=1 // pred_check
      _
    $region83: #{tpu_custom_call.1} parent=1 // pred_check_branch
      %187 = sbr.rel (0) target = $region85
    $region84: #{tpu_custom_call.1} parent=1 // pred_region
      %188 = dma.done [#allocation16], 256
    $region85: #{tpu_custom_call.1} parent=1 // pred_fallthru
      _
    // Predicated region
    $region86: #{tpu_custom_call.1} parent=1 // pred_check
      _
    $region87: #{tpu_custom_call.1} parent=1 // pred_check_branch
      %190 = sbr.rel (0) target = $region89
    $region88: #{tpu_custom_call.1} parent=1 // pred_region
      %191 = dma.done [#allocation19], 16
    $region89: #{tpu_custom_call.1} parent=1 // pred_fallthru
      _
    // Predicated region
    $region90: #{tpu_custom_call.1} parent=1 // pred_check
      _
    $region91: #{tpu_custom_call.1} parent=1 // pred_check_branch
      %193 = sbr.rel (0) target = $region93
    $region92: #{tpu_custom_call.1} parent=1 // pred_region
      %194 = dma.done [#allocation19], 256
    $region93: #{tpu_custom_call.1} parent=1 // pred_fallthru
      _
    // Predicated region
    $region94: #{tpu_custom_call.1} parent=1 // pred_check
      _
    $region95: #{tpu_custom_call.1} parent=1 // pred_check_branch
      %196 = sbr.rel (0) target = $region97
    $region96: #{tpu_custom_call.1} parent=1 // pred_region
      %197 = dma.done [#allocation22], 16
    $region97: #{tpu_custom_call.1} parent=1 // pred_fallthru
      _
    %v199 = vld [vmem:[#allocation6] sm:$0x1]
    %v200 = vld [vmem:[#allocation6 + $0x1] sm:$0x1]
    %v201 = vld [vmem:[#allocation3] sm:$0xff]
    %v202 = vld [vmem:[#allocation3 + $0x8] sm:$0xff]
    %v203 = vpack.c.bf16 %v202, %v201
    %v204 = vld [vmem:[#allocation8] sm:$0xf]
    %v205 = vld [vmem:[#allocation8 + $0x4] sm:$0xf]
    %v206 = vld [vmem:[#allocation8 + $0x8] sm:$0xf]
    %v207 = vld [vmem:[#allocation8 + $0xc] sm:$0xf]
    %v208 = vld [vmem:[#allocation9] sm:$0x1]
    %v210 = vlaneseq
    %v211 = vshrl.u32 %v210, 7
    %v212 = vsub.s32 0, %v211
    %v213 = vrot.slane %v208, %v212
    %v219 = vunpack.c.l.b16 %v204
    %v220 = vunpack.c.l.b16 %v205
    %v221 = vunpack.c.l.b16 %v206
    %v222 = vunpack.c.l.b16 %v207
    %v223 = vpack.c.b16 %v220, %v219
    %v224 = vpack.c.b16 %v222, %v221
    %vm227 = vcmask 261120
    %v229 = vsel %vm227, %v203, 0
    %231 = vmatprep.subr.bf16.mxu0 0
    %232 = vmatpush1.bf16.msra.mxu0 %v223
    %233 = vmatprep.subr.bf16.mxu0 0
    %234 = vmatpush1.bf16.msra.mxu0 %v224
    %235 = vmatprep.subr.bf16.mxu0 0
    %236 = vmatpush1.bf16.msra.mxu0 0
    %237 = vmatprep.subr.bf16.mxu0 0
    %238 = vmatpush1.bf16.msra.mxu0 0
    %239 = vmatprep.subr.bf16.mxu0 0
    %240 = vmatpush1.bf16.msra.mxu0 0
    %241 = vmatprep.subr.bf16.mxu0 0
    %242 = vmatpush1.bf16.msra.mxu0 0
    %243 = vmatprep.subr.bf16.mxu0 0
    %244 = vmatpush1.bf16.msra.mxu0 0
    %245 = vmatprep.subr.bf16.mxu0 0
    %246 = vmatpush1.bf16.msra.mxu0 0
    %247 = vmatprep.subr.bf16.mxu0 0
    %248 = vmatpush1.bf16.msra.mxu0 0
    %249 = vmatprep.subr.bf16.mxu0 0
    %250 = vmatpush1.bf16.msra.mxu0 0
    %251 = vmatprep.subr.bf16.mxu0 0
    %252 = vmatpush1.bf16.msra.mxu0 0
    %253 = vmatprep.subr.bf16.mxu0 0
    %254 = vmatpush1.bf16.msra.mxu0 0
    %255 = vmatprep.subr.bf16.mxu0 0
    %256 = vmatpush1.bf16.msra.mxu0 0
    %257 = vmatprep.subr.bf16.mxu0 0
    %258 = vmatpush1.bf16.msra.mxu0 0
    %259 = vmatprep.subr.bf16.mxu0 0
    %260 = vmatpush1.bf16.msra.mxu0 0
    %261 = vmatprep.subr.bf16.mxu0 0
    %262 = vmatpush1.bf16.msra.mxu0 0
    %263 = vmatprep.mubr.bf16.mxu0 0
    %264 = vmatmul.mubr.bf16.gmra.mrb[0].mxu0 %v229
    %v265 = vpop.f32.mrb[0].mxu0
    %v266 = vadd.f32 %v213, %v265
    %v267 = vpop.f32.mrb[0].mxu0
    %v268 = vpop.f32.mrb[0].mxu0
    %v269 = vadd.f32 %v213, %v268
    %v270 = vpop.f32.mrb[0].mxu0
    %271 = vdwg.mxu0
    %v272 = vmul.f32 %v266, 0.5
    %v273 = vmul.f32 %v269, 0.5
    %v274 = vpack.c.bf16 %v272, %v272
    %v275 = vpack.c.bf16 %v273, %v273
    %v276 = vpack.c.bf16 %v266, %v266
    %v277 = vpack.c.bf16 %v269, %v269
    %v280 = vlaneseq
    %v281 = vshrl.u32 %v280, 7
    %v282 = vsub.s32 0, %v281
    %v283 = vrot.slane %v199, %v282
    %v284 = vlaneseq
    %v285 = vshrl.u32 %v284, 7
    %v286 = vsub.s32 0, %v285
    %v287 = vrot.slane %v200, %v286
    %291 = vrot.lane.b32.xlu0 %v276, 96
    %v292 = vpop.permute.xlu0 %291
    %vm293 = vcmask 31744
    %v295 = vsel %vm293, %v274, 0
    %v298 = vsel %vm293, %v292, 0
    %300 = vmatprep.subr.bf16.mxu0 0
    %301 = vmatpush1.bf16.xpose.msra.mxu0 %v298
    %302 = vmatprep.subr.bf16.mxu0 0
    %303 = vmatpush1.bf16.xpose.msra.mxu0 0
    %304 = vmatprep.subr.bf16.mxu0 0
    %305 = vmatpush1.bf16.xpose.msra.mxu0 0
    %306 = vmatprep.subr.bf16.mxu0 0
    %307 = vmatpush1.bf16.xpose.msra.mxu0 0
    %308 = vmatprep.subr.bf16.mxu0 0
    %309 = vmatpush1.bf16.xpose.msra.mxu0 0
    %310 = vmatprep.subr.bf16.mxu0 0
    %311 = vmatpush1.bf16.xpose.msra.mxu0 0
    %312 = vmatprep.subr.bf16.mxu0 0
    %313 = vmatpush1.bf16.xpose.msra.mxu0 0
    %314 = vmatprep.subr.bf16.mxu0 0
    %315 = vmatpush1.bf16.xpose.msra.mxu0 0
    %316 = vmatprep.subr.bf16.mxu0 0
    %317 = vmatpush1.bf16.xpose.msra.mxu0 0
    %318 = vmatprep.subr.bf16.mxu0 0
    %319 = vmatpush1.bf16.xpose.msra.mxu0 0
    %320 = vmatprep.subr.bf16.mxu0 0
    %321 = vmatpush1.bf16.xpose.msra.mxu0 0
    %322 = vmatprep.subr.bf16.mxu0 0
    %323 = vmatpush1.bf16.xpose.msra.mxu0 0
    %324 = vmatprep.subr.bf16.mxu0 0
    %325 = vmatpush1.bf16.xpose.msra.mxu0 0
    %326 = vmatprep.subr.bf16.mxu0 0
    %327 = vmatpush1.bf16.xpose.msra.mxu0 0
    %328 = vmatprep.subr.bf16.mxu0 0
    %329 = vmatpush1.bf16.xpose.msra.mxu0 0
    %330 = vmatprep.subr.bf16.mxu0 0
    %331 = vmatpush1.bf16.xpose.msra.mxu0 0
    %332 = vmatprep.mubr.bf16.mxu0 0
    %333 = vmatmul.mubr.bf16.gmra.mrb[0].mxu0 %v295
    %v334 = vpop.f32.mrb[0].mxu0
    %v335 = vadd.f32 %v283, %v334
    %v336 = vpop.f32.mrb[0].mxu0
    %v337 = vpop.f32.mrb[0].mxu0
    %v338 = vpop.f32.mrb[0].mxu0
    %339 = vdwg.mxu0
    %341 = vrot.lane.b32.xlu0 %v277, 96
    %v342 = vpop.permute.xlu0 %341
    %v344 = vsel %vm293, %v275, 0
    %v347 = vsel %vm293, %v342, 0
    %349 = vmatprep.subr.bf16.mxu0 0
    %350 = vmatpush1.bf16.xpose.msra.mxu0 %v347
    %351 = vmatprep.subr.bf16.mxu0 0
    %352 = vmatpush1.bf16.xpose.msra.mxu0 0
    %353 = vmatprep.subr.bf16.mxu0 0
    %354 = vmatpush1.bf16.xpose.msra.mxu0 0
    %355 = vmatprep.subr.bf16.mxu0 0
    %356 = vmatpush1.bf16.xpose.msra.mxu0 0
    %357 = vmatprep.subr.bf16.mxu0 0
    %358 = vmatpush1.bf16.xpose.msra.mxu0 0
    %359 = vmatprep.subr.bf16.mxu0 0
    %360 = vmatpush1.bf16.xpose.msra.mxu0 0
    %361 = vmatprep.subr.bf16.mxu0 0
    %362 = vmatpush1.bf16.xpose.msra.mxu0 0
    %363 = vmatprep.subr.bf16.mxu0 0
    %364 = vmatpush1.bf16.xpose.msra.mxu0 0
    %365 = vmatprep.subr.bf16.mxu0 0
    %366 = vmatpush1.bf16.xpose.msra.mxu0 0
    %367 = vmatprep.subr.bf16.mxu0 0
    %368 = vmatpush1.bf16.xpose.msra.mxu0 0
    %369 = vmatprep.subr.bf16.mxu0 0
    %370 = vmatpush1.bf16.xpose.msra.mxu0 0
    %371 = vmatprep.subr.bf16.mxu0 0
    %372 = vmatpush1.bf16.xpose.msra.mxu0 0
    %373 = vmatprep.subr.bf16.mxu0 0
    %374 = vmatpush1.bf16.xpose.msra.mxu0 0
    %375 = vmatprep.subr.bf16.mxu0 0
    %376 = vmatpush1.bf16.xpose.msra.mxu0 0
    %377 = vmatprep.subr.bf16.mxu0 0
    %378 = vmatpush1.bf16.xpose.msra.mxu0 0
    %379 = vmatprep.subr.bf16.mxu0 0
    %380 = vmatpush1.bf16.xpose.msra.mxu0 0
    %381 = vmatprep.mubr.bf16.mxu0 0
    %382 = vmatmul.mubr.bf16.gmra.mrb[0].mxu0 %v344
    %v383 = vpop.f32.mrb[0].mxu0
    %v384 = vadd.f32 %v287, %v383
    %v385 = vpop.f32.mrb[0].mxu0
    %v386 = vpop.f32.mrb[0].mxu0
    %v387 = vpop.f32.mrb[0].mxu0
    %388 = vdwg.mxu0
    %vm389 = vcmask 64512
    %v390 = vsel %vm389, %v335, -inf
    %391 = vmax.xlane.f32.xlu0 %v390
    %v392 = vpop.xlane.xlu0 %391
    %v393 = vsel %vm389, %v384, -inf
    %394 = vmax.xlane.f32.xlu0 %v393
    %v395 = vpop.xlane.xlu0 %394
    %v396 = vsub.f32 %v335, %v392
    %v397 = vsub.f32 %v384, %v395
    %v398 = vmul.f32 %v396, 1.442695
    %v399 = vpow.pop %v398
    %v400 = vmul.f32 %v397, 1.442695
    %v401 = vpow.pop %v400
    %v402 = vsel %vm389, %v399, 0.0
    %403 = vadd.xlane.f32.xlu0 %v402
    %v404 = vpop.xlane.xlu0 %403
    %v405 = vsel %vm389, %v401, 0.0
    %406 = vadd.xlane.f32.xlu0 %v405
    %v407 = vpop.xlane.xlu0 %406
    %v408 = vrcp.pop %v404
    %v409 = vrcp.pop %v407
    %v410 = vmul.f32 %v399, %v408
    %v411 = vmul.f32 %v401, %v409
    %v412 = vpack.c.bf16 %v410, %v410
    %v413 = vpack.c.bf16 %v411, %v411
    %414 = vrot.lane.b32.xlu0 %v276, 64
    %v415 = vpop.permute.xlu0 %414
    %v417 = vsel %vm389, %v412, 0
    %vm419 = vcmask 1043456
    %v421 = vsel %vm419, %v415, 0
    %423 = vmatprep.subr.bf16.mxu0 0
    %424 = vmatpush1.bf16.msra.mxu0 %v421
    %425 = vmatprep.subr.bf16.mxu0 0
    %426 = vmatpush1.bf16.msra.mxu0 0
    %427 = vmatprep.subr.bf16.mxu0 0
    %428 = vmatpush1.bf16.msra.mxu0 0
    %429 = vmatprep.subr.bf16.mxu0 0
    %430 = vmatpush1.bf16.msra.mxu0 0
    %431 = vmatprep.subr.bf16.mxu0 0
    %432 = vmatpush1.bf16.msra.mxu0 0
    %433 = vmatprep.subr.bf16.mxu0 0
    %434 = vmatpush1.bf16.msra.mxu0 0
    %435 = vmatprep.subr.bf16.mxu0 0
    %436 = vmatpush1.bf16.msra.mxu0 0
    %437 = vmatprep.subr.bf16.mxu0 0
    %438 = vmatpush1.bf16.msra.mxu0 0
    %439 = vmatprep.subr.bf16.mxu0 0
    %440 = vmatpush1.bf16.msra.mxu0 0
    %441 = vmatprep.subr.bf16.mxu0 0
    %442 = vmatpush1.bf16.msra.mxu0 0
    %443 = vmatprep.subr.bf16.mxu0 0
    %444 = vmatpush1.bf16.msra.mxu0 0
    %445 = vmatprep.subr.bf16.mxu0 0
    %446 = vmatpush1.bf16.msra.mxu0 0
    %447 = vmatprep.subr.bf16.mxu0 0
    %448 = vmatpush1.bf16.msra.mxu0 0
    %449 = vmatprep.subr.bf16.mxu0 0
    %450 = vmatpush1.bf16.msra.mxu0 0
    %451 = vmatprep.subr.bf16.mxu0 0
    %452 = vmatpush1.bf16.msra.mxu0 0
    %453 = vmatprep.subr.bf16.mxu0 0
    %454 = vmatpush1.bf16.msra.mxu0 0
    %455 = vmatprep.mubr.bf16.mxu0 0
    %456 = vmatmul.mubr.bf16.gmra.mrb[0].mxu0 %v417
    %v457 = vpop.f32.mrb[0].mxu0
    %v458 = vadd.f32 0.0, %v457
    %v459 = vpop.f32.mrb[0].mxu0
    %v460 = vpop.f32.mrb[0].mxu0
    %v461 = vpop.f32.mrb[0].mxu0
    %462 = vdwg.mxu0
    %463 = vrot.lane.b32.xlu0 %v277, 64
    %v464 = vpop.permute.xlu0 %463
    %v466 = vsel %vm389, %v413, 0
    %v469 = vsel %vm419, %v464, 0
    %471 = vmatprep.subr.bf16.mxu0 0
    %472 = vmatpush1.bf16.msra.mxu0 %v469
    %473 = vmatprep.subr.bf16.mxu0 0
    %474 = vmatpush1.bf16.msra.mxu0 0
    %475 = vmatprep.subr.bf16.mxu0 0
    %476 = vmatpush1.bf16.msra.mxu0 0
    %477 = vmatprep.subr.bf16.mxu0 0
    %478 = vmatpush1.bf16.msra.mxu0 0
    %479 = vmatprep.subr.bf16.mxu0 0
    %480 = vmatpush1.bf16.msra.mxu0 0
    %481 = vmatprep.subr.bf16.mxu0 0
    %482 = vmatpush1.bf16.msra.mxu0 0
    %483 = vmatprep.subr.bf16.mxu0 0
    %484 = vmatpush1.bf16.msra.mxu0 0
    %485 = vmatprep.subr.bf16.mxu0 0
    %486 = vmatpush1.bf16.msra.mxu0 0
    %487 = vmatprep.subr.bf16.mxu0 0
    %488 = vmatpush1.bf16.msra.mxu0 0
    %489 = vmatprep.subr.bf16.mxu0 0
    %490 = vmatpush1.bf16.msra.mxu0 0
    %491 = vmatprep.subr.bf16.mxu0 0
    %492 = vmatpush1.bf16.msra.mxu0 0
    %493 = vmatprep.subr.bf16.mxu0 0
    %494 = vmatpush1.bf16.msra.mxu0 0
    %495 = vmatprep.subr.bf16.mxu0 0
    %496 = vmatpush1.bf16.msra.mxu0 0
    %497 = vmatprep.subr.bf16.mxu0 0
    %498 = vmatpush1.bf16.msra.mxu0 0
    %499 = vmatprep.subr.bf16.mxu0 0
    %500 = vmatpush1.bf16.msra.mxu0 0
    %501 = vmatprep.subr.bf16.mxu0 0
    %502 = vmatpush1.bf16.msra.mxu0 0
    %503 = vmatprep.mubr.bf16.mxu0 0
    %504 = vmatmul.mubr.bf16.gmra.mrb[0].mxu0 %v466
    %v505 = vpop.f32.mrb[0].mxu0
    %v506 = vadd.f32 0.0, %v505
    %v507 = vpop.f32.mrb[0].mxu0
    %v508 = vpop.f32.mrb[0].mxu0
    %v509 = vpop.f32.mrb[0].mxu0
    %510 = vdwg.mxu0
    %511 = vst.msk [vmem:[#allocation2] sm:$0xff] %vm293, %v458
    %512 = vst.msk [vmem:[#allocation2 + $0x8] sm:$0xff] %vm293, %v506
    %514 = vrot.lane.b32.xlu0 %v274, 124
    %v515 = vpop.permute.xlu0 %514
    %516 = vrot.lane.b32.xlu0 %v276, 92
    %v517 = vpop.permute.xlu0 %516
    %v519 = vsel %vm293, %v515, 0
    %v522 = vsel %vm293, %v517, 0
    %524 = vmatprep.subr.bf16.mxu0 0
    %525 = vmatpush1.bf16.xpose.msra.mxu0 %v522
    %526 = vmatprep.subr.bf16.mxu0 0
    %527 = vmatpush1.bf16.xpose.msra.mxu0 0
    %528 = vmatprep.subr.bf16.mxu0 0
    %529 = vmatpush1.bf16.xpose.msra.mxu0 0
    %530 = vmatprep.subr.bf16.mxu0 0
    %531 = vmatpush1.bf16.xpose.msra.mxu0 0
    %532 = vmatprep.subr.bf16.mxu0 0
    %533 = vmatpush1.bf16.xpose.msra.mxu0 0
    %534 = vmatprep.subr.bf16.mxu0 0
    %535 = vmatpush1.bf16.xpose.msra.mxu0 0
    %536 = vmatprep.subr.bf16.mxu0 0
    %537 = vmatpush1.bf16.xpose.msra.mxu0 0
    %538 = vmatprep.subr.bf16.mxu0 0
    %539 = vmatpush1.bf16.xpose.msra.mxu0 0
    %540 = vmatprep.subr.bf16.mxu0 0
    %541 = vmatpush1.bf16.xpose.msra.mxu0 0
    %542 = vmatprep.subr.bf16.mxu0 0
    %543 = vmatpush1.bf16.xpose.msra.mxu0 0
    %544 = vmatprep.subr.bf16.mxu0 0
    %545 = vmatpush1.bf16.xpose.msra.mxu0 0
    %546 = vmatprep.subr.bf16.mxu0 0
    %547 = vmatpush1.bf16.xpose.msra.mxu0 0
    %548 = vmatprep.subr.bf16.mxu0 0
    %549 = vmatpush1.bf16.xpose.msra.mxu0 0
    %550 = vmatprep.subr.bf16.mxu0 0
    %551 = vmatpush1.bf16.xpose.msra.mxu0 0
    %552 = vmatprep.subr.bf16.mxu0 0
    %553 = vmatpush1.bf16.xpose.msra.mxu0 0
    %554 = vmatprep.subr.bf16.mxu0 0
    %555 = vmatpush1.bf16.xpose.msra.mxu0 0
    %556 = vmatprep.mubr.bf16.mxu0 0
    %557 = vmatmul.mubr.bf16.gmra.mrb[0].mxu0 %v519
    %v558 = vpop.f32.mrb[0].mxu0
    %v559 = vadd.f32 %v283, %v558
    %v560 = vpop.f32.mrb[0].mxu0
    %v561 = vpop.f32.mrb[0].mxu0
    %v562 = vpop.f32.mrb[0].mxu0
    %563 = vdwg.mxu0
    %565 = vrot.lane.b32.xlu0 %v275, 124
    %v566 = vpop.permute.xlu0 %565
    %567 = vrot.lane.b32.xlu0 %v277, 92
    %v568 = vpop.permute.xlu0 %567
    %v570 = vsel %vm293, %v566, 0
    %v573 = vsel %vm293, %v568, 0
    %575 = vmatprep.subr.bf16.mxu0 0
    %576 = vmatpush1.bf16.xpose.msra.mxu0 %v573
    %577 = vmatprep.subr.bf16.mxu0 0
    %578 = vmatpush1.bf16.xpose.msra.mxu0 0
    %579 = vmatprep.subr.bf16.mxu0 0
    %580 = vmatpush1.bf16.xpose.msra.mxu0 0
    %581 = vmatprep.subr.bf16.mxu0 0
    %582 = vmatpush1.bf16.xpose.msra.mxu0 0
    %583 = vmatprep.subr.bf16.mxu0 0
    %584 = vmatpush1.bf16.xpose.msra.mxu0 0
    %585 = vmatprep.subr.bf16.mxu0 0
    %586 = vmatpush1.bf16.xpose.msra.mxu0 0
    %587 = vmatprep.subr.bf16.mxu0 0
    %588 = vmatpush1.bf16.xpose.msra.mxu0 0
    %589 = vmatprep.subr.bf16.mxu0 0
    %590 = vmatpush1.bf16.xpose.msra.mxu0 0
    %591 = vmatprep.subr.bf16.mxu0 0
    %592 = vmatpush1.bf16.xpose.msra.mxu0 0
    %593 = vmatprep.subr.bf16.mxu0 0
    %594 = vmatpush1.bf16.xpose.msra.mxu0 0
    %595 = vmatprep.subr.bf16.mxu0 0
    %596 = vmatpush1.bf16.xpose.msra.mxu0 0
    %597 = vmatprep.subr.bf16.mxu0 0
    %598 = vmatpush1.bf16.xpose.msra.mxu0 0
    %599 = vmatprep.subr.bf16.mxu0 0
    %600 = vmatpush1.bf16.xpose.msra.mxu0 0
    %601 = vmatprep.subr.bf16.mxu0 0
    %602 = vmatpush1.bf16.xpose.msra.mxu0 0
    %603 = vmatprep.subr.bf16.mxu0 0
    %604 = vmatpush1.bf16.xpose.msra.mxu0 0
    %605 = vmatprep.subr.bf16.mxu0 0
    %606 = vmatpush1.bf16.xpose.msra.mxu0 0
    %607 = vmatprep.mubr.bf16.mxu0 0
    %608 = vmatmul.mubr.bf16.gmra.mrb[0].mxu0 %v570
    %v609 = vpop.f32.mrb[0].mxu0
    %v610 = vadd.f32 %v287, %v609
    %v611 = vpop.f32.mrb[0].mxu0
    %v612 = vpop.f32.mrb[0].mxu0
    %v613 = vpop.f32.mrb[0].mxu0
    %614 = vdwg.mxu0
    %v615 = vsel %vm389, %v559, -inf
    %616 = vmax.xlane.f32.xlu0 %v615
    %v617 = vpop.xlane.xlu0 %616
    %v618 = vsel %vm389, %v610, -inf
    %619 = vmax.xlane.f32.xlu0 %v618
    %v620 = vpop.xlane.xlu0 %619
    %v621 = vsub.f32 %v559, %v617
    %v622 = vsub.f32 %v610, %v620
    %v623 = vmul.f32 %v621, 1.442695
    %v624 = vpow.pop %v623
    %v625 = vmul.f32 %v622, 1.442695
    %v626 = vpow.pop %v625
    %v627 = vsel %vm389, %v624, 0.0
    %628 = vadd.xlane.f32.xlu0 %v627
    %v629 = vpop.xlane.xlu0 %628
    %v630 = vsel %vm389, %v626, 0.0
    %631 = vadd.xlane.f32.xlu0 %v630
    %v632 = vpop.xlane.xlu0 %631
    %v633 = vrcp.pop %v629
    %v634 = vrcp.pop %v632
    %v635 = vmul.f32 %v624, %v633
    %v636 = vmul.f32 %v626, %v634
    %v637 = vpack.c.bf16 %v635, %v635
    %v638 = vpack.c.bf16 %v636, %v636
    %639 = vrot.lane.b32.xlu0 %v276, 60
    %v640 = vpop.permute.xlu0 %639
    %v642 = vsel %vm389, %v637, 0
    %v645 = vsel %vm419, %v640, 0
    %647 = vmatprep.subr.bf16.mxu0 0
    %648 = vmatpush1.bf16.msra.mxu0 %v645
    %649 = vmatprep.subr.bf16.mxu0 0
    %650 = vmatpush1.bf16.msra.mxu0 0
    %651 = vmatprep.subr.bf16.mxu0 0
    %652 = vmatpush1.bf16.msra.mxu0 0
    %653 = vmatprep.subr.bf16.mxu0 0
    %654 = vmatpush1.bf16.msra.mxu0 0
    %655 = vmatprep.subr.bf16.mxu0 0
    %656 = vmatpush1.bf16.msra.mxu0 0
    %657 = vmatprep.subr.bf16.mxu0 0
    %658 = vmatpush1.bf16.msra.mxu0 0
    %659 = vmatprep.subr.bf16.mxu0 0
    %660 = vmatpush1.bf16.msra.mxu0 0
    %661 = vmatprep.subr.bf16.mxu0 0
    %662 = vmatpush1.bf16.msra.mxu0 0
    %663 = vmatprep.subr.bf16.mxu0 0
    %664 = vmatpush1.bf16.msra.mxu0 0
    %665 = vmatprep.subr.bf16.mxu0 0
    %666 = vmatpush1.bf16.msra.mxu0 0
    %667 = vmatprep.subr.bf16.mxu0 0
    %668 = vmatpush1.bf16.msra.mxu0 0
    %669 = vmatprep.subr.bf16.mxu0 0
    %670 = vmatpush1.bf16.msra.mxu0 0
    %671 = vmatprep.subr.bf16.mxu0 0
    %672 = vmatpush1.bf16.msra.mxu0 0
    %673 = vmatprep.subr.bf16.mxu0 0
    %674 = vmatpush1.bf16.msra.mxu0 0
    %675 = vmatprep.subr.bf16.mxu0 0
    %676 = vmatpush1.bf16.msra.mxu0 0
    %677 = vmatprep.subr.bf16.mxu0 0
    %678 = vmatpush1.bf16.msra.mxu0 0
    %679 = vmatprep.mubr.bf16.mxu0 0
    %680 = vmatmul.mubr.bf16.gmra.mrb[0].mxu0 %v642
    %v681 = vpop.f32.mrb[0].mxu0
    %v682 = vadd.f32 0.0, %v681
    %v683 = vpop.f32.mrb[0].mxu0
    %v684 = vpop.f32.mrb[0].mxu0
    %v685 = vpop.f32.mrb[0].mxu0
    %686 = vdwg.mxu0
    %687 = vrot.lane.b32.xlu0 %v277, 60
    %v688 = vpop.permute.xlu0 %687
    %v690 = vsel %vm389, %v638, 0
    %v693 = vsel %vm419, %v688, 0
    %695 = vmatprep.subr.bf16.mxu0 0
    %696 = vmatpush1.bf16.msra.mxu0 %v693
    %697 = vmatprep.subr.bf16.mxu0 0
    %698 = vmatpush1.bf16.msra.mxu0 0
    %699 = vmatprep.subr.bf16.mxu0 0
    %700 = vmatpush1.bf16.msra.mxu0 0
    %701 = vmatprep.subr.bf16.mxu0 0
    %702 = vmatpush1.bf16.msra.mxu0 0
    %703 = vmatprep.subr.bf16.mxu0 0
    %704 = vmatpush1.bf16.msra.mxu0 0
    %705 = vmatprep.subr.bf16.mxu0 0
    %706 = vmatpush1.bf16.msra.mxu0 0
    %707 = vmatprep.subr.bf16.mxu0 0
    %708 = vmatpush1.bf16.msra.mxu0 0
    %709 = vmatprep.subr.bf16.mxu0 0
    %710 = vmatpush1.bf16.msra.mxu0 0
    %711 = vmatprep.subr.bf16.mxu0 0
    %712 = vmatpush1.bf16.msra.mxu0 0
    %713 = vmatprep.subr.bf16.mxu0 0
    %714 = vmatpush1.bf16.msra.mxu0 0
    %715 = vmatprep.subr.bf16.mxu0 0
    %716 = vmatpush1.bf16.msra.mxu0 0
    %717 = vmatprep.subr.bf16.mxu0 0
    %718 = vmatpush1.bf16.msra.mxu0 0
    %719 = vmatprep.subr.bf16.mxu0 0
    %720 = vmatpush1.bf16.msra.mxu0 0
    %721 = vmatprep.subr.bf16.mxu0 0
    %722 = vmatpush1.bf16.msra.mxu0 0
    %723 = vmatprep.subr.bf16.mxu0 0
    %724 = vmatpush1.bf16.msra.mxu0 0
    %725 = vmatprep.subr.bf16.mxu0 0
    %726 = vmatpush1.bf16.msra.mxu0 0
    %727 = vmatprep.mubr.bf16.mxu0 0
    %728 = vmatmul.mubr.bf16.gmra.mrb[0].mxu0 %v690
    %v729 = vpop.f32.mrb[0].mxu0
    %v730 = vadd.f32 0.0, %v729
    %v731 = vpop.f32.mrb[0].mxu0
    %v732 = vpop.f32.mrb[0].mxu0
    %v733 = vpop.f32.mrb[0].mxu0
    %734 = vdwg.mxu0
    %737 = vrot.lane.b32.xlu0 %v682, 4
    %v738 = vpop.permute.xlu0 %737
    %739 = vrot.lane.b32.xlu0 %v730, 4
    %v740 = vpop.permute.xlu0 %739
    %vm743 = vcmask 64544
    %744 = vst.msk [vmem:[#allocation2] sm:$0xff] %vm743, %v738
    %745 = vst.msk [vmem:[#allocation2 + $0x8] sm:$0xff] %vm743, %v740
    %746 = vrot.lane.b32.xlu0 %v274, 120
    %v747 = vpop.permute.xlu0 %746
    %748 = vrot.lane.b32.xlu0 %v276, 88
    %v749 = vpop.permute.xlu0 %748
    %v751 = vsel %vm293, %v747, 0
    %v754 = vsel %vm293, %v749, 0
    %756 = vmatprep.subr.bf16.mxu0 0
    %757 = vmatpush1.bf16.xpose.msra.mxu0 %v754
    %758 = vmatprep.subr.bf16.mxu0 0
    %759 = vmatpush1.bf16.xpose.msra.mxu0 0
    %760 = vmatprep.subr.bf16.mxu0 0
    %761 = vmatpush1.bf16.xpose.msra.mxu0 0
    %762 = vmatprep.subr.bf16.mxu0 0
    %763 = vmatpush1.bf16.xpose.msra.mxu0 0
    %764 = vmatprep.subr.bf16.mxu0 0
    %765 = vmatpush1.bf16.xpose.msra.mxu0 0
    %766 = vmatprep.subr.bf16.mxu0 0
    %767 = vmatpush1.bf16.xpose.msra.mxu0 0
    %768 = vmatprep.subr.bf16.mxu0 0
    %769 = vmatpush1.bf16.xpose.msra.mxu0 0
    %770 = vmatprep.subr.bf16.mxu0 0
    %771 = vmatpush1.bf16.xpose.msra.mxu0 0
    %772 = vmatprep.subr.bf16.mxu0 0
    %773 = vmatpush1.bf16.xpose.msra.mxu0 0
    %774 = vmatprep.subr.bf16.mxu0 0
    %775 = vmatpush1.bf16.xpose.msra.mxu0 0
    %776 = vmatprep.subr.bf16.mxu0 0
    %777 = vmatpush1.bf16.xpose.msra.mxu0 0
    %778 = vmatprep.subr.bf16.mxu0 0
    %779 = vmatpush1.bf16.xpose.msra.mxu0 0
    %780 = vmatprep.subr.bf16.mxu0 0
    %781 = vmatpush1.bf16.xpose.msra.mxu0 0
    %782 = vmatprep.subr.bf16.mxu0 0
    %783 = vmatpush1.bf16.xpose.msra.mxu0 0
    %784 = vmatprep.subr.bf16.mxu0 0
    %785 = vmatpush1.bf16.xpose.msra.mxu0 0
    %786 = vmatprep.subr.bf16.mxu0 0
    %787 = vmatpush1.bf16.xpose.msra.mxu0 0
    %788 = vmatprep.mubr.bf16.mxu0 0
    %789 = vmatmul.mubr.bf16.gmra.mrb[0].mxu0 %v751
    %v790 = vpop.f32.mrb[0].mxu0
    %v791 = vadd.f32 %v283, %v790
    %v792 = vpop.f32.mrb[0].mxu0
    %v793 = vpop.f32.mrb[0].mxu0
    %v794 = vpop.f32.mrb[0].mxu0
    %795 = vdwg.mxu0
    %796 = vrot.lane.b32.xlu0 %v275, 120
    %v797 = vpop.permute.xlu0 %796
    %798 = vrot.lane.b32.xlu0 %v277, 88
    %v799 = vpop.permute.xlu0 %798
    %v801 = vsel %vm293, %v797, 0
    %v804 = vsel %vm293, %v799, 0
    %806 = vmatprep.subr.bf16.mxu0 0
    %807 = vmatpush1.bf16.xpose.msra.mxu0 %v804
    %808 = vmatprep.subr.bf16.mxu0 0
    %809 = vmatpush1.bf16.xpose.msra.mxu0 0
    %810 = vmatprep.subr.bf16.mxu0 0
    %811 = vmatpush1.bf16.xpose.msra.mxu0 0
    %812 = vmatprep.subr.bf16.mxu0 0
    %813 = vmatpush1.bf16.xpose.msra.mxu0 0
    %814 = vmatprep.subr.bf16.mxu0 0
    %815 = vmatpush1.bf16.xpose.msra.mxu0 0
    %816 = vmatprep.subr.bf16.mxu0 0
    %817 = vmatpush1.bf16.xpose.msra.mxu0 0
    %818 = vmatprep.subr.bf16.mxu0 0
    %819 = vmatpush1.bf16.xpose.msra.mxu0 0
    %820 = vmatprep.subr.bf16.mxu0 0
    %821 = vmatpush1.bf16.xpose.msra.mxu0 0
    %822 = vmatprep.subr.bf16.mxu0 0
    %823 = vmatpush1.bf16.xpose.msra.mxu0 0
    %824 = vmatprep.subr.bf16.mxu0 0
    %825 = vmatpush1.bf16.xpose.msra.mxu0 0
    %826 = vmatprep.subr.bf16.mxu0 0
    %827 = vmatpush1.bf16.xpose.msra.mxu0 0
    %828 = vmatprep.subr.bf16.mxu0 0
    %829 = vmatpush1.bf16.xpose.msra.mxu0 0
    %830 = vmatprep.subr.bf16.mxu0 0
    %831 = vmatpush1.bf16.xpose.msra.mxu0 0
    %832 = vmatprep.subr.bf16.mxu0 0
    %833 = vmatpush1.bf16.xpose.msra.mxu0 0
    %834 = vmatprep.subr.bf16.mxu0 0
    %835 = vmatpush1.bf16.xpose.msra.mxu0 0
    %836 = vmatprep.subr.bf16.mxu0 0
    %837 = vmatpush1.bf16.xpose.msra.mxu0 0
    %838 = vmatprep.mubr.bf16.mxu0 0
    %839 = vmatmul.mubr.bf16.gmra.mrb[0].mxu0 %v801
    %v840 = vpop.f32.mrb[0].mxu0
    %v841 = vadd.f32 %v287, %v840
    %v842 = vpop.f32.mrb[0].mxu0
    %v843 = vpop.f32.mrb[0].mxu0
    %v844 = vpop.f32.mrb[0].mxu0
    %845 = vdwg.mxu0
    %v846 = vsel %vm389, %v791, -inf
    %847 = vmax.xlane.f32.xlu0 %v846
    %v848 = vpop.xlane.xlu0 %847
    %v849 = vsel %vm389, %v841, -inf
    %850 = vmax.xlane.f32.xlu0 %v849
    %v851 = vpop.xlane.xlu0 %850
    %v852 = vsub.f32 %v791, %v848
    %v853 = vsub.f32 %v841, %v851
    %v854 = vmul.f32 %v852, 1.442695
    %v855 = vpow.pop %v854
    %v856 = vmul.f32 %v853, 1.442695
    %v857 = vpow.pop %v856
    %v858 = vsel %vm389, %v855, 0.0
    %859 = vadd.xlane.f32.xlu0 %v858
    %v860 = vpop.xlane.xlu0 %859
    %v861 = vsel %vm389, %v857, 0.0
    %862 = vadd.xlane.f32.xlu0 %v861
    %v863 = vpop.xlane.xlu0 %862
    %v864 = vrcp.pop %v860
    %v865 = vrcp.pop %v863
    %v866 = vmul.f32 %v855, %v864
    %v867 = vmul.f32 %v857, %v865
    %v868 = vpack.c.bf16 %v866, %v866
    %v869 = vpack.c.bf16 %v867, %v867
    %870 = vrot.lane.b32.xlu0 %v276, 56
    %v871 = vpop.permute.xlu0 %870
    %v873 = vsel %vm389, %v868, 0
    %v876 = vsel %vm419, %v871, 0
    %878 = vmatprep.subr.bf16.mxu0 0
    %879 = vmatpush1.bf16.msra.mxu0 %v876
    %880 = vmatprep.subr.bf16.mxu0 0
    %881 = vmatpush1.bf16.msra.mxu0 0
    %882 = vmatprep.subr.bf16.mxu0 0
    %883 = vmatpush1.bf16.msra.mxu0 0
    %884 = vmatprep.subr.bf16.mxu0 0
    %885 = vmatpush1.bf16.msra.mxu0 0
    %886 = vmatprep.subr.bf16.mxu0 0
    %887 = vmatpush1.bf16.msra.mxu0 0
    %888 = vmatprep.subr.bf16.mxu0 0
    %889 = vmatpush1.bf16.msra.mxu0 0
    %890 = vmatprep.subr.bf16.mxu0 0
    %891 = vmatpush1.bf16.msra.mxu0 0
    %892 = vmatprep.subr.bf16.mxu0 0
    %893 = vmatpush1.bf16.msra.mxu0 0
    %894 = vmatprep.subr.bf16.mxu0 0
    %895 = vmatpush1.bf16.msra.mxu0 0
    %896 = vmatprep.subr.bf16.mxu0 0
    %897 = vmatpush1.bf16.msra.mxu0 0
    %898 = vmatprep.subr.bf16.mxu0 0
    %899 = vmatpush1.bf16.msra.mxu0 0
    %900 = vmatprep.subr.bf16.mxu0 0
    %901 = vmatpush1.bf16.msra.mxu0 0
    %902 = vmatprep.subr.bf16.mxu0 0
    %903 = vmatpush1.bf16.msra.mxu0 0
    %904 = vmatprep.subr.bf16.mxu0 0
    %905 = vmatpush1.bf16.msra.mxu0 0
    %906 = vmatprep.subr.bf16.mxu0 0
    %907 = vmatpush1.bf16.msra.mxu0 0
    %908 = vmatprep.subr.bf16.mxu0 0
    %909 = vmatpush1.bf16.msra.mxu0 0
    %910 = vmatprep.mubr.bf16.mxu0 0
    %911 = vmatmul.mubr.bf16.gmra.mrb[0].mxu0 %v873
    %v912 = vpop.f32.mrb[0].mxu0
    %v913 = vadd.f32 0.0, %v912
    %v914 = vpop.f32.mrb[0].mxu0
    %v915 = vpop.f32.mrb[0].mxu0
    %v916 = vpop.f32.mrb[0].mxu0
    %917 = vdwg.mxu0
    %918 = vrot.lane.b32.xlu0 %v277, 56
    %v919 = vpop.permute.xlu0 %918
    %v921 = vsel %vm389, %v869, 0
    %v924 = vsel %vm419, %v919, 0
    %926 = vmatprep.subr.bf16.mxu0 0
    %927 = vmatpush1.bf16.msra.mxu0 %v924
    %928 = vmatprep.subr.bf16.mxu0 0
    %929 = vmatpush1.bf16.msra.mxu0 0
    %930 = vmatprep.subr.bf16.mxu0 0
    %931 = vmatpush1.bf16.msra.mxu0 0
    %932 = vmatprep.subr.bf16.mxu0 0
    %933 = vmatpush1.bf16.msra.mxu0 0
    %934 = vmatprep.subr.bf16.mxu0 0
    %935 = vmatpush1.bf16.msra.mxu0 0
    %936 = vmatprep.subr.bf16.mxu0 0
    %937 = vmatpush1.bf16.msra.mxu0 0
    %938 = vmatprep.subr.bf16.mxu0 0
    %939 = vmatpush1.bf16.msra.mxu0 0
    %940 = vmatprep.subr.bf16.mxu0 0
    %941 = vmatpush1.bf16.msra.mxu0 0
    %942 = vmatprep.subr.bf16.mxu0 0
    %943 = vmatpush1.bf16.msra.mxu0 0
    %944 = vmatprep.subr.bf16.mxu0 0
    %945 = vmatpush1.bf16.msra.mxu0 0
    %946 = vmatprep.subr.bf16.mxu0 0
    %947 = vmatpush1.bf16.msra.mxu0 0
    %948 = vmatprep.subr.bf16.mxu0 0
    %949 = vmatpush1.bf16.msra.mxu0 0
    %950 = vmatprep.subr.bf16.mxu0 0
    %951 = vmatpush1.bf16.msra.mxu0 0
    %952 = vmatprep.subr.bf16.mxu0 0
    %953 = vmatpush1.bf16.msra.mxu0 0
    %954 = vmatprep.subr.bf16.mxu0 0
    %955 = vmatpush1.bf16.msra.mxu0 0
    %956 = vmatprep.subr.bf16.mxu0 0
    %957 = vmatpush1.bf16.msra.mxu0 0
    %958 = vmatprep.mubr.bf16.mxu0 0
    %959 = vmatmul.mubr.bf16.gmra.mrb[0].mxu0 %v921
    %v960 = vpop.f32.mrb[0].mxu0
    %v961 = vadd.f32 0.0, %v960
    %v962 = vpop.f32.mrb[0].mxu0
    %v963 = vpop.f32.mrb[0].mxu0
    %v964 = vpop.f32.mrb[0].mxu0
    %965 = vdwg.mxu0
    %968 = vrot.lane.b32.xlu0 %v913, 8
    %v969 = vpop.permute.xlu0 %968
    %970 = vrot.lane.b32.xlu0 %v961, 8
    %v971 = vpop.permute.xlu0 %970
    %vm974 = vcmask 97344
    %975 = vst.msk [vmem:[#allocation2] sm:$0xff] %vm974, %v969
    %976 = vst.msk [vmem:[#allocation2 + $0x8] sm:$0xff] %vm974, %v971
    %977 = vrot.lane.b32.xlu0 %v274, 116
    %v978 = vpop.permute.xlu0 %977
    %979 = vrot.lane.b32.xlu0 %v276, 84
    %v980 = vpop.permute.xlu0 %979
    %v982 = vsel %vm293, %v978, 0
    %v985 = vsel %vm293, %v980, 0
    %987 = vmatprep.subr.bf16.mxu0 0
    %988 = vmatpush1.bf16.xpose.msra.mxu0 %v985
    %989 = vmatprep.subr.bf16.mxu0 0
    %990 = vmatpush1.bf16.xpose.msra.mxu0 0
    %991 = vmatprep.subr.bf16.mxu0 0
    %992 = vmatpush1.bf16.xpose.msra.mxu0 0
    %993 = vmatprep.subr.bf16.mxu0 0
    %994 = vmatpush1.bf16.xpose.msra.mxu0 0
    %995 = vmatprep.subr.bf16.mxu0 0
    %996 = vmatpush1.bf16.xpose.msra.mxu0 0
    %997 = vmatprep.subr.bf16.mxu0 0
    %998 = vmatpush1.bf16.xpose.msra.mxu0 0
    %999 = vmatprep.subr.bf16.mxu0 0
    %1000 = vmatpush1.bf16.xpose.msra.mxu0 0
    %1001 = vmatprep.subr.bf16.mxu0 0
    %1002 = vmatpush1.bf16.xpose.msra.mxu0 0
    %1003 = vmatprep.subr.bf16.mxu0 0
    %1004 = vmatpush1.bf16.xpose.msra.mxu0 0
    %1005 = vmatprep.subr.bf16.mxu0 0
    %1006 = vmatpush1.bf16.xpose.msra.mxu0 0
    %1007 = vmatprep.subr.bf16.mxu0 0
    %1008 = vmatpush1.bf16.xpose.msra.mxu0 0
    %1009 = vmatprep.subr.bf16.mxu0 0
    %1010 = vmatpush1.bf16.xpose.msra.mxu0 0
    %1011 = vmatprep.subr.bf16.mxu0 0
    %1012 = vmatpush1.bf16.xpose.msra.mxu0 0
    %1013 = vmatprep.subr.bf16.mxu0 0
    %1014 = vmatpush1.bf16.xpose.msra.mxu0 0
    %1015 = vmatprep.subr.bf16.mxu0 0
    %1016 = vmatpush1.bf16.xpose.msra.mxu0 0
    %1017 = vmatprep.subr.bf16.mxu0 0
    %1018 = vmatpush1.bf16.xpose.msra.mxu0 0
    %1019 = vmatprep.mubr.bf16.mxu0 0
    %1020 = vmatmul.mubr.bf16.gmra.mrb[0].mxu0 %v982
    %v1021 = vpop.f32.mrb[0].mxu0
    %v1022 = vadd.f32 %v283, %v1021
    %v1023 = vpop.f32.mrb[0].mxu0
    %v1024 = vpop.f32.mrb[0].mxu0
    %v1025 = vpop.f32.mrb[0].mxu0
    %1026 = vdwg.mxu0
    %1027 = vrot.lane.b32.xlu0 %v275, 116
    %v1028 = vpop.permute.xlu0 %1027
    %1029 = vrot.lane.b32.xlu0 %v277, 84
    %v1030 = vpop.permute.xlu0 %1029
    %v1032 = vsel %vm293, %v1028, 0
    %v1035 = vsel %vm293, %v1030, 0
    %1037 = vmatprep.subr.bf16.mxu0 0
    %1038 = vmatpush1.bf16.xpose.msra.mxu0 %v1035
    %1039 = vmatprep.subr.bf16.mxu0 0
    %1040 = vmatpush1.bf16.xpose.msra.mxu0 0
    %1041 = vmatprep.subr.bf16.mxu0 0
    %1042 = vmatpush1.bf16.xpose.msra.mxu0 0
    %1043 = vmatprep.subr.bf16.mxu0 0
    %1044 = vmatpush1.bf16.xpose.msra.mxu0 0
    %1045 = vmatprep.subr.bf16.mxu0 0
    %1046 = vmatpush1.bf16.xpose.msra.mxu0 0
    %1047 = vmatprep.subr.bf16.mxu0 0
    %1048 = vmatpush1.bf16.xpose.msra.mxu0 0
    %1049 = vmatprep.subr.bf16.mxu0 0
    %1050 = vmatpush1.bf16.xpose.msra.mxu0 0
    %1051 = vmatprep.subr.bf16.mxu0 0
    %1052 = vmatpush1.bf16.xpose.msra.mxu0 0
    %1053 = vmatprep.subr.bf16.mxu0 0
    %1054 = vmatpush1.bf16.xpose.msra.mxu0 0
    %1055 = vmatprep.subr.bf16.mxu0 0
    %1056 = vmatpush1.bf16.xpose.msra.mxu0 0
    %1057 = vmatprep.subr.bf16.mxu0 0
    %1058 = vmatpush1.bf16.xpose.msra.mxu0 0
    %1059 = vmatprep.subr.bf16.mxu0 0
    %1060 = vmatpush1.bf16.xpose.msra.mxu0 0
    %1061 = vmatprep.subr.bf16.mxu0 0
    %1062 = vmatpush1.bf16.xpose.msra.mxu0 0
    %1063 = vmatprep.subr.bf16.mxu0 0
    %1064 = vmatpush1.bf16.xpose.msra.mxu0 0
    %1065 = vmatprep.subr.bf16.mxu0 0
    %1066 = vmatpush1.bf16.xpose.msra.mxu0 0
    %1067 = vmatprep.subr.bf16.mxu0 0
    %1068 = vmatpush1.bf16.xpose.msra.mxu0 0
    %1069 = vmatprep.mubr.bf16.mxu0 0
    %1070 = vmatmul.mubr.bf16.gmra.mrb[0].mxu0 %v1032
    %v1071 = vpop.f32.mrb[0].mxu0
    %v1072 = vadd.f32 %v287, %v1071
    %v1073 = vpop.f32.mrb[0].mxu0
    %v1074 = vpop.f32.mrb[0].mxu0
    %v1075 = vpop.f32.mrb[0].mxu0
    %1076 = vdwg.mxu0
    %v1077 = vsel %vm389, %v1022, -inf
    %1078 = vmax.xlane.f32.xlu0 %v1077
    %v1079 = vpop.xlane.xlu0 %1078
    %v1080 = vsel %vm389, %v1072, -inf
    %1081 = vmax.xlane.f32.xlu0 %v1080
    %v1082 = vpop.xlane.xlu0 %1081
    %v1083 = vsub.f32 %v1022, %v1079
    %v1084 = vsub.f32 %v1072, %v1082
    %v1085 = vmul.f32 %v1083, 1.442695
    %v1086 = vpow.pop %v1085
    %v1087 = vmul.f32 %v1084, 1.442695
    %v1088 = vpow.pop %v1087
    %v1089 = vsel %vm389, %v1086, 0.0
    %1090 = vadd.xlane.f32.xlu0 %v1089
    %v1091 = vpop.xlane.xlu0 %1090
    %v1092 = vsel %vm389, %v1088, 0.0
    %1093 = vadd.xlane.f32.xlu0 %v1092
    %v1094 = vpop.xlane.xlu0 %1093
    %v1095 = vrcp.pop %v1091
    %v1096 = vrcp.pop %v1094
    %v1097 = vmul.f32 %v1086, %v1095
    %v1098 = vmul.f32 %v1088, %v1096
    %v1099 = vpack.c.bf16 %v1097, %v1097
    %v1100 = vpack.c.bf16 %v1098, %v1098
    %1101 = vrot.lane.b32.xlu0 %v276, 52
    %v1102 = vpop.permute.xlu0 %1101
    %v1104 = vsel %vm389, %v1099, 0
    %v1107 = vsel %vm419, %v1102, 0
    %1109 = vmatprep.subr.bf16.mxu0 0
    %1110 = vmatpush1.bf16.msra.mxu0 %v1107
    %1111 = vmatprep.subr.bf16.mxu0 0
    %1112 = vmatpush1.bf16.msra.mxu0 0
    %1113 = vmatprep.subr.bf16.mxu0 0
    %1114 = vmatpush1.bf16.msra.mxu0 0
    %1115 = vmatprep.subr.bf16.mxu0 0
    %1116 = vmatpush1.bf16.msra.mxu0 0
    %1117 = vmatprep.subr.bf16.mxu0 0
    %1118 = vmatpush1.bf16.msra.mxu0 0
    %1119 = vmatprep.subr.bf16.mxu0 0
    %1120 = vmatpush1.bf16.msra.mxu0 0
    %1121 = vmatprep.subr.bf16.mxu0 0
    %1122 = vmatpush1.bf16.msra.mxu0 0
    %1123 = vmatprep.subr.bf16.mxu0 0
    %1124 = vmatpush1.bf16.msra.mxu0 0
    %1125 = vmatprep.subr.bf16.mxu0 0
    %1126 = vmatpush1.bf16.msra.mxu0 0
    %1127 = vmatprep.subr.bf16.mxu0 0
    %1128 = vmatpush1.bf16.msra.mxu0 0
    %1129 = vmatprep.subr.bf16.mxu0 0
    %1130 = vmatpush1.bf16.msra.mxu0 0
    %1131 = vmatprep.subr.bf16.mxu0 0
    %1132 = vmatpush1.bf16.msra.mxu0 0
    %1133 = vmatprep.subr.bf16.mxu0 0
    %1134 = vmatpush1.bf16.msra.mxu0 0
    %1135 = vmatprep.subr.bf16.mxu0 0
    %1136 = vmatpush1.bf16.msra.mxu0 0
    %1137 = vmatprep.subr.bf16.mxu0 0
    %1138 = vmatpush1.bf16.msra.mxu0 0
    %1139 = vmatprep.subr.bf16.mxu0 0
    %1140 = vmatpush1.bf16.msra.mxu0 0
    %1141 = vmatprep.mubr.bf16.mxu0 0
    %1142 = vmatmul.mubr.bf16.gmra.mrb[0].mxu0 %v1104
    %v1143 = vpop.f32.mrb[0].mxu0
    %v1144 = vadd.f32 0.0, %v1143
    %v1145 = vpop.f32.mrb[0].mxu0
    %v1146 = vpop.f32.mrb[0].mxu0
    %v1147 = vpop.f32.mrb[0].mxu0
    %1148 = vdwg.mxu0
    %1149 = vrot.lane.b32.xlu0 %v277, 52
    %v1150 = vpop.permute.xlu0 %1149
    %v1152 = vsel %vm389, %v1100, 0
    %v1155 = vsel %vm419, %v1150, 0
    %1157 = vmatprep.subr.bf16.mxu0 0
    %1158 = vmatpush1.bf16.msra.mxu0 %v1155
    %1159 = vmatprep.subr.bf16.mxu0 0
    %1160 = vmatpush1.bf16.msra.mxu0 0
    %1161 = vmatprep.subr.bf16.mxu0 0
    %1162 = vmatpush1.bf16.msra.mxu0 0
    %1163 = vmatprep.subr.bf16.mxu0 0
    %1164 = vmatpush1.bf16.msra.mxu0 0
    %1165 = vmatprep.subr.bf16.mxu0 0
    %1166 = vmatpush1.bf16.msra.mxu0 0
    %1167 = vmatprep.subr.bf16.mxu0 0
    %1168 = vmatpush1.bf16.msra.mxu0 0
    %1169 = vmatprep.subr.bf16.mxu0 0
    %1170 = vmatpush1.bf16.msra.mxu0 0
    %1171 = vmatprep.subr.bf16.mxu0 0
    %1172 = vmatpush1.bf16.msra.mxu0 0
    %1173 = vmatprep.subr.bf16.mxu0 0
    %1174 = vmatpush1.bf16.msra.mxu0 0
    %1175 = vmatprep.subr.bf16.mxu0 0
    %1176 = vmatpush1.bf16.msra.mxu0 0
    %1177 = vmatprep.subr.bf16.mxu0 0
    %1178 = vmatpush1.bf16.msra.mxu0 0
    %1179 = vmatprep.subr.bf16.mxu0 0
    %1180 = vmatpush1.bf16.msra.mxu0 0
    %1181 = vmatprep.subr.bf16.mxu0 0
    %1182 = vmatpush1.bf16.msra.mxu0 0
    %1183 = vmatprep.subr.bf16.mxu0 0
    %1184 = vmatpush1.bf16.msra.mxu0 0
    %1185 = vmatprep.subr.bf16.mxu0 0
    %1186 = vmatpush1.bf16.msra.mxu0 0
    %1187 = vmatprep.subr.bf16.mxu0 0
    %1188 = vmatpush1.bf16.msra.mxu0 0
    %1189 = vmatprep.mubr.bf16.mxu0 0
    %1190 = vmatmul.mubr.bf16.gmra.mrb[0].mxu0 %v1152
    %v1191 = vpop.f32.mrb[0].mxu0
    %v1192 = vadd.f32 0.0, %v1191
    %v1193 = vpop.f32.mrb[0].mxu0
    %v1194 = vpop.f32.mrb[0].mxu0
    %v1195 = vpop.f32.mrb[0].mxu0
    %1196 = vdwg.mxu0
    %1199 = vrot.lane.b32.xlu0 %v1144, 12
    %v1200 = vpop.permute.xlu0 %1199
    %1201 = vrot.lane.b32.xlu0 %v1192, 12
    %v1202 = vpop.permute.xlu0 %1201
    %vm1205 = vcmask 130144
    %1206 = vst.msk [vmem:[#allocation2] sm:$0xff] %vm1205, %v1200
    %1207 = vst.msk [vmem:[#allocation2 + $0x8] sm:$0xff] %vm1205, %v1202
    %1208 = vrot.lane.b32.xlu0 %v274, 112
    %v1209 = vpop.permute.xlu0 %1208
    %1210 = vrot.lane.b32.xlu0 %v276, 80
    %v1211 = vpop.permute.xlu0 %1210
    %v1213 = vsel %vm293, %v1209, 0
    %v1216 = vsel %vm293, %v1211, 0
    %1218 = vmatprep.subr.bf16.mxu0 0
    %1219 = vmatpush1.bf16.xpose.msra.mxu0 %v1216
    %1220 = vmatprep.subr.bf16.mxu0 0
    %1221 = vmatpush1.bf16.xpose.msra.mxu0 0
    %1222 = vmatprep.subr.bf16.mxu0 0
    %1223 = vmatpush1.bf16.xpose.msra.mxu0 0
    %1224 = vmatprep.subr.bf16.mxu0 0
    %1225 = vmatpush1.bf16.xpose.msra.mxu0 0
    %1226 = vmatprep.subr.bf16.mxu0 0
    %1227 = vmatpush1.bf16.xpose.msra.mxu0 0
    %1228 = vmatprep.subr.bf16.mxu0 0
    %1229 = vmatpush1.bf16.xpose.msra.mxu0 0
    %1230 = vmatprep.subr.bf16.mxu0 0
    %1231 = vmatpush1.bf16.xpose.msra.mxu0 0
    %1232 = vmatprep.subr.bf16.mxu0 0
    %1233 = vmatpush1.bf16.xpose.msra.mxu0 0
    %1234 = vmatprep.subr.bf16.mxu0 0
    %1235 = vmatpush1.bf16.xpose.msra.mxu0 0
    %1236 = vmatprep.subr.bf16.mxu0 0
    %1237 = vmatpush1.bf16.xpose.msra.mxu0 0
    %1238 = vmatprep.subr.bf16.mxu0 0
    %1239 = vmatpush1.bf16.xpose.msra.mxu0 0
    %1240 = vmatprep.subr.bf16.mxu0 0
    %1241 = vmatpush1.bf16.xpose.msra.mxu0 0
    %1242 = vmatprep.subr.bf16.mxu0 0
    %1243 = vmatpush1.bf16.xpose.msra.mxu0 0
    %1244 = vmatprep.subr.bf16.mxu0 0
    %1245 = vmatpush1.bf16.xpose.msra.mxu0 0
    %1246 = vmatprep.subr.bf16.mxu0 0
    %1247 = vmatpush1.bf16.xpose.msra.mxu0 0
    %1248 = vmatprep.subr.bf16.mxu0 0
    %1249 = vmatpush1.bf16.xpose.msra.mxu0 0
    %1250 = vmatprep.mubr.bf16.mxu0 0
    %1251 = vmatmul.mubr.bf16.gmra.mrb[0].mxu0 %v1213
    %v1252 = vpop.f32.mrb[0].mxu0
    %v1253 = vadd.f32 %v283, %v1252
    %v1254 = vpop.f32.mrb[0].mxu0
    %v1255 = vpop.f32.mrb[0].mxu0
    %v1256 = vpop.f32.mrb[0].mxu0
    %1257 = vdwg.mxu0
    %1258 = vrot.lane.b32.xlu0 %v275, 112
    %v1259 = vpop.permute.xlu0 %1258
    %1260 = vrot.lane.b32.xlu0 %v277, 80
    %v1261 = vpop.permute.xlu0 %1260
    %v1263 = vsel %vm293, %v1259, 0
    %v1266 = vsel %vm293, %v1261, 0
    %1268 = vmatprep.subr.bf16.mxu0 0
    %1269 = vmatpush1.bf16.xpose.msra.mxu0 %v1266
    %1270 = vmatprep.subr.bf16.mxu0 0
    %1271 = vmatpush1.bf16.xpose.msra.mxu0 0
    %1272 = vmatprep.subr.bf16.mxu0 0
    %1273 = vmatpush1.bf16.xpose.msra.mxu0 0
    %1274 = vmatprep.subr.bf16.mxu0 0
    %1275 = vmatpush1.bf16.xpose.msra.mxu0 0
    %1276 = vmatprep.subr.bf16.mxu0 0
    %1277 = vmatpush1.bf16.xpose.msra.mxu0 0
    %1278 = vmatprep.subr.bf16.mxu0 0
    %1279 = vmatpush1.bf16.xpose.msra.mxu0 0
    %1280 = vmatprep.subr.bf16.mxu0 0
    %1281 = vmatpush1.bf16.xpose.msra.mxu0 0
    %1282 = vmatprep.subr.bf16.mxu0 0
    %1283 = vmatpush1.bf16.xpose.msra.mxu0 0
    %1284 = vmatprep.subr.bf16.mxu0 0
    %1285 = vmatpush1.bf16.xpose.msra.mxu0 0
    %1286 = vmatprep.subr.bf16.mxu0 0
    %1287 = vmatpush1.bf16.xpose.msra.mxu0 0
    %1288 = vmatprep.subr.bf16.mxu0 0
    %1289 = vmatpush1.bf16.xpose.msra.mxu0 0
    %1290 = vmatprep.subr.bf16.mxu0 0
    %1291 = vmatpush1.bf16.xpose.msra.mxu0 0
    %1292 = vmatprep.subr.bf16.mxu0 0
    %1293 = vmatpush1.bf16.xpose.msra.mxu0 0
    %1294 = vmatprep.subr.bf16.mxu0 0
    %1295 = vmatpush1.bf16.xpose.msra.mxu0 0
    %1296 = vmatprep.subr.bf16.mxu0 0
    %1297 = vmatpush1.bf16.xpose.msra.mxu0 0
    %1298 = vmatprep.subr.bf16.mxu0 0
    %1299 = vmatpush1.bf16.xpose.msra.mxu0 0
    %1300 = vmatprep.mubr.bf16.mxu0 0
    %1301 = vmatmul.mubr.bf16.gmra.mrb[0].mxu0 %v1263
    %v1302 = vpop.f32.mrb[0].mxu0
    %v1303 = vadd.f32 %v287, %v1302
    %v1304 = vpop.f32.mrb[0].mxu0
    %v1305 = vpop.f32.mrb[0].mxu0
    %v1306 = vpop.f32.mrb[0].mxu0
    %1307 = vdwg.mxu0
    %v1308 = vsel %vm389, %v1253, -inf
    %1309 = vmax.xlane.f32.xlu0 %v1308
    %v1310 = vpop.xlane.xlu0 %1309
    %v1311 = vsel %vm389, %v1303, -inf
    %1312 = vmax.xlane.f32.xlu0 %v1311
    %v1313 = vpop.xlane.xlu0 %1312
    %v1314 = vsub.f32 %v1253, %v1310
    %v1315 = vsub.f32 %v1303, %v1313
    %v1316 = vmul.f32 %v1314, 1.442695
    %v1317 = vpow.pop %v1316
    %v1318 = vmul.f32 %v1315, 1.442695
    %v1319 = vpow.pop %v1318
    %v1320 = vsel %vm389, %v1317, 0.0
    %1321 = vadd.xlane.f32.xlu0 %v1320
    %v1322 = vpop.xlane.xlu0 %1321
    %v1323 = vsel %vm389, %v1319, 0.0
    %1324 = vadd.xlane.f32.xlu0 %v1323
    %v1325 = vpop.xlane.xlu0 %1324
    %v1326 = vrcp.pop %v1322
    %v1327 = vrcp.pop %v1325
    %v1328 = vmul.f32 %v1317, %v1326
    %v1329 = vmul.f32 %v1319, %v1327
    %v1330 = vpack.c.bf16 %v1328, %v1328
    %v1331 = vpack.c.bf16 %v1329, %v1329
    %1332 = vrot.lane.b32.xlu0 %v276, 48
    %v1333 = vpop.permute.xlu0 %1332
    %v1335 = vsel %vm389, %v1330, 0
    %v1338 = vsel %vm419, %v1333, 0
    %1340 = vmatprep.subr.bf16.mxu0 0
    %1341 = vmatpush1.bf16.msra.mxu0 %v1338
    %1342 = vmatprep.subr.bf16.mxu0 0
    %1343 = vmatpush1.bf16.msra.mxu0 0
    %1344 = vmatprep.subr.bf16.mxu0 0
    %1345 = vmatpush1.bf16.msra.mxu0 0
    %1346 = vmatprep.subr.bf16.mxu0 0
    %1347 = vmatpush1.bf16.msra.mxu0 0
    %1348 = vmatprep.subr.bf16.mxu0 0
    %1349 = vmatpush1.bf16.msra.mxu0 0
    %1350 = vmatprep.subr.bf16.mxu0 0
    %1351 = vmatpush1.bf16.msra.mxu0 0
    %1352 = vmatprep.subr.bf16.mxu0 0
    %1353 = vmatpush1.bf16.msra.mxu0 0
    %1354 = vmatprep.subr.bf16.mxu0 0
    %1355 = vmatpush1.bf16.msra.mxu0 0
    %1356 = vmatprep.subr.bf16.mxu0 0
    %1357 = vmatpush1.bf16.msra.mxu0 0
    %1358 = vmatprep.subr.bf16.mxu0 0
    %1359 = vmatpush1.bf16.msra.mxu0 0
    %1360 = vmatprep.subr.bf16.mxu0 0
    %1361 = vmatpush1.bf16.msra.mxu0 0
    %1362 = vmatprep.subr.bf16.mxu0 0
    %1363 = vmatpush1.bf16.msra.mxu0 0
    %1364 = vmatprep.subr.bf16.mxu0 0
    %1365 = vmatpush1.bf16.msra.mxu0 0
    %1366 = vmatprep.subr.bf16.mxu0 0
    %1367 = vmatpush1.bf16.msra.mxu0 0
    %1368 = vmatprep.subr.bf16.mxu0 0
    %1369 = vmatpush1.bf16.msra.mxu0 0
    %1370 = vmatprep.subr.bf16.mxu0 0
    %1371 = vmatpush1.bf16.msra.mxu0 0
    %1372 = vmatprep.mubr.bf16.mxu0 0
    %1373 = vmatmul.mubr.bf16.gmra.mrb[0].mxu0 %v1335
    %v1374 = vpop.f32.mrb[0].mxu0
    %v1375 = vadd.f32 0.0, %v1374
    %v1376 = vpop.f32.mrb[0].mxu0
    %v1377 = vpop.f32.mrb[0].mxu0
    %v1378 = vpop.f32.mrb[0].mxu0
    %1379 = vdwg.mxu0
    %1380 = vrot.lane.b32.xlu0 %v277, 48
    %v1381 = vpop.permute.xlu0 %1380
    %v1383 = vsel %vm389, %v1331, 0
    %v1386 = vsel %vm419, %v1381, 0
    %1388 = vmatprep.subr.bf16.mxu0 0
    %1389 = vmatpush1.bf16.msra.mxu0 %v1386
    %1390 = vmatprep.subr.bf16.mxu0 0
    %1391 = vmatpush1.bf16.msra.mxu0 0
    %1392 = vmatprep.subr.bf16.mxu0 0
    %1393 = vmatpush1.bf16.msra.mxu0 0
    %1394 = vmatprep.subr.bf16.mxu0 0
    %1395 = vmatpush1.bf16.msra.mxu0 0
    %1396 = vmatprep.subr.bf16.mxu0 0
    %1397 = vmatpush1.bf16.msra.mxu0 0
    %1398 = vmatprep.subr.bf16.mxu0 0
    %1399 = vmatpush1.bf16.msra.mxu0 0
    %1400 = vmatprep.subr.bf16.mxu0 0
    %1401 = vmatpush1.bf16.msra.mxu0 0
    %1402 = vmatprep.subr.bf16.mxu0 0
    %1403 = vmatpush1.bf16.msra.mxu0 0
    %1404 = vmatprep.subr.bf16.mxu0 0
    %1405 = vmatpush1.bf16.msra.mxu0 0
    %1406 = vmatprep.subr.bf16.mxu0 0
    %1407 = vmatpush1.bf16.msra.mxu0 0
    %1408 = vmatprep.subr.bf16.mxu0 0
    %1409 = vmatpush1.bf16.msra.mxu0 0
    %1410 = vmatprep.subr.bf16.mxu0 0
    %1411 = vmatpush1.bf16.msra.mxu0 0
    %1412 = vmatprep.subr.bf16.mxu0 0
    %1413 = vmatpush1.bf16.msra.mxu0 0
    %1414 = vmatprep.subr.bf16.mxu0 0
    %1415 = vmatpush1.bf16.msra.mxu0 0
    %1416 = vmatprep.subr.bf16.mxu0 0
    %1417 = vmatpush1.bf16.msra.mxu0 0
    %1418 = vmatprep.subr.bf16.mxu0 0
    %1419 = vmatpush1.bf16.msra.mxu0 0
    %1420 = vmatprep.mubr.bf16.mxu0 0
    %1421 = vmatmul.mubr.bf16.gmra.mrb[0].mxu0 %v1383
    %v1422 = vpop.f32.mrb[0].mxu0
    %v1423 = vadd.f32 0.0, %v1422
    %v1424 = vpop.f32.mrb[0].mxu0
    %v1425 = vpop.f32.mrb[0].mxu0
    %v1426 = vpop.f32.mrb[0].mxu0
    %1427 = vdwg.mxu0
    %1430 = vrot.lane.b32.xlu0 %v1375, 16
    %v1431 = vpop.permute.xlu0 %1430
    %1432 = vrot.lane.b32.xlu0 %v1423, 16
    %v1433 = vpop.permute.xlu0 %1432
    %vm1436 = vcmask 162944
    %1437 = vst.msk [vmem:[#allocation2] sm:$0xff] %vm1436, %v1431
    %1438 = vst.msk [vmem:[#allocation2 + $0x8] sm:$0xff] %vm1436, %v1433
    %1439 = vrot.lane.b32.xlu0 %v274, 108
    %v1440 = vpop.permute.xlu0 %1439
    %1441 = vrot.lane.b32.xlu0 %v276, 76
    %v1442 = vpop.permute.xlu0 %1441
    %v1444 = vsel %vm293, %v1440, 0
    %v1447 = vsel %vm293, %v1442, 0
    %1449 = vmatprep.subr.bf16.mxu0 0
    %1450 = vmatpush1.bf16.xpose.msra.mxu0 %v1447
    %1451 = vmatprep.subr.bf16.mxu0 0
    %1452 = vmatpush1.bf16.xpose.msra.mxu0 0
    %1453 = vmatprep.subr.bf16.mxu0 0
    %1454 = vmatpush1.bf16.xpose.msra.mxu0 0
    %1455 = vmatprep.subr.bf16.mxu0 0
    %1456 = vmatpush1.bf16.xpose.msra.mxu0 0
    %1457 = vmatprep.subr.bf16.mxu0 0
    %1458 = vmatpush1.bf16.xpose.msra.mxu0 0
    %1459 = vmatprep.subr.bf16.mxu0 0
    %1460 = vmatpush1.bf16.xpose.msra.mxu0 0
    %1461 = vmatprep.subr.bf16.mxu0 0
    %1462 = vmatpush1.bf16.xpose.msra.mxu0 0
    %1463 = vmatprep.subr.bf16.mxu0 0
    %1464 = vmatpush1.bf16.xpose.msra.mxu0 0
    %1465 = vmatprep.subr.bf16.mxu0 0
    %1466 = vmatpush1.bf16.xpose.msra.mxu0 0
    %1467 = vmatprep.subr.bf16.mxu0 0
    %1468 = vmatpush1.bf16.xpose.msra.mxu0 0
    %1469 = vmatprep.subr.bf16.mxu0 0
    %1470 = vmatpush1.bf16.xpose.msra.mxu0 0
    %1471 = vmatprep.subr.bf16.mxu0 0
    %1472 = vmatpush1.bf16.xpose.msra.mxu0 0
    %1473 = vmatprep.subr.bf16.mxu0 0
    %1474 = vmatpush1.bf16.xpose.msra.mxu0 0
    %1475 = vmatprep.subr.bf16.mxu0 0
    %1476 = vmatpush1.bf16.xpose.msra.mxu0 0
    %1477 = vmatprep.subr.bf16.mxu0 0
    %1478 = vmatpush1.bf16.xpose.msra.mxu0 0
    %1479 = vmatprep.subr.bf16.mxu0 0
    %1480 = vmatpush1.bf16.xpose.msra.mxu0 0
    %1481 = vmatprep.mubr.bf16.mxu0 0
    %1482 = vmatmul.mubr.bf16.gmra.mrb[0].mxu0 %v1444
    %v1483 = vpop.f32.mrb[0].mxu0
    %v1484 = vadd.f32 %v283, %v1483
    %v1485 = vpop.f32.mrb[0].mxu0
    %v1486 = vpop.f32.mrb[0].mxu0
    %v1487 = vpop.f32.mrb[0].mxu0
    %1488 = vdwg.mxu0
    %1489 = vrot.lane.b32.xlu0 %v275, 108
    %v1490 = vpop.permute.xlu0 %1489
    %1491 = vrot.lane.b32.xlu0 %v277, 76
    %v1492 = vpop.permute.xlu0 %1491
    %v1494 = vsel %vm293, %v1490, 0
    %v1497 = vsel %vm293, %v1492, 0
    %1499 = vmatprep.subr.bf16.mxu0 0
    %1500 = vmatpush1.bf16.xpose.msra.mxu0 %v1497
    %1501 = vmatprep.subr.bf16.mxu0 0
    %1502 = vmatpush1.bf16.xpose.msra.mxu0 0
    %1503 = vmatprep.subr.bf16.mxu0 0
    %1504 = vmatpush1.bf16.xpose.msra.mxu0 0
    %1505 = vmatprep.subr.bf16.mxu0 0
    %1506 = vmatpush1.bf16.xpose.msra.mxu0 0
    %1507 = vmatprep.subr.bf16.mxu0 0
    %1508 = vmatpush1.bf16.xpose.msra.mxu0 0
    %1509 = vmatprep.subr.bf16.mxu0 0
    %1510 = vmatpush1.bf16.xpose.msra.mxu0 0
    %1511 = vmatprep.subr.bf16.mxu0 0
    %1512 = vmatpush1.bf16.xpose.msra.mxu0 0
    %1513 = vmatprep.subr.bf16.mxu0 0
    %1514 = vmatpush1.bf16.xpose.msra.mxu0 0
    %1515 = vmatprep.subr.bf16.mxu0 0
    %1516 = vmatpush1.bf16.xpose.msra.mxu0 0
    %1517 = vmatprep.subr.bf16.mxu0 0
    %1518 = vmatpush1.bf16.xpose.msra.mxu0 0
    %1519 = vmatprep.subr.bf16.mxu0 0
    %1520 = vmatpush1.bf16.xpose.msra.mxu0 0
    %1521 = vmatprep.subr.bf16.mxu0 0
    %1522 = vmatpush1.bf16.xpose.msra.mxu0 0
    %1523 = vmatprep.subr.bf16.mxu0 0
    %1524 = vmatpush1.bf16.xpose.msra.mxu0 0
    %1525 = vmatprep.subr.bf16.mxu0 0
    %1526 = vmatpush1.bf16.xpose.msra.mxu0 0
    %1527 = vmatprep.subr.bf16.mxu0 0
    %1528 = vmatpush1.bf16.xpose.msra.mxu0 0
    %1529 = vmatprep.subr.bf16.mxu0 0
    %1530 = vmatpush1.bf16.xpose.msra.mxu0 0
    %1531 = vmatprep.mubr.bf16.mxu0 0
    %1532 = vmatmul.mubr.bf16.gmra.mrb[0].mxu0 %v1494
    %v1533 = vpop.f32.mrb[0].mxu0
    %v1534 = vadd.f32 %v287, %v1533
    %v1535 = vpop.f32.mrb[0].mxu0
    %v1536 = vpop.f32.mrb[0].mxu0
    %v1537 = vpop.f32.mrb[0].mxu0
    %1538 = vdwg.mxu0
    %v1539 = vsel %vm389, %v1484, -inf
    %1540 = vmax.xlane.f32.xlu0 %v1539
    %v1541 = vpop.xlane.xlu0 %1540
    %v1542 = vsel %vm389, %v1534, -inf
    %1543 = vmax.xlane.f32.xlu0 %v1542
    %v1544 = vpop.xlane.xlu0 %1543
    %v1545 = vsub.f32 %v1484, %v1541
    %v1546 = vsub.f32 %v1534, %v1544
    %v1547 = vmul.f32 %v1545, 1.442695
    %v1548 = vpow.pop %v1547
    %v1549 = vmul.f32 %v1546, 1.442695
    %v1550 = vpow.pop %v1549
    %v1551 = vsel %vm389, %v1548, 0.0
    %1552 = vadd.xlane.f32.xlu0 %v1551
    %v1553 = vpop.xlane.xlu0 %1552
    %v1554 = vsel %vm389, %v1550, 0.0
    %1555 = vadd.xlane.f32.xlu0 %v1554
    %v1556 = vpop.xlane.xlu0 %1555
    %v1557 = vrcp.pop %v1553
    %v1558 = vrcp.pop %v1556
    %v1559 = vmul.f32 %v1548, %v1557
    %v1560 = vmul.f32 %v1550, %v1558
    %v1561 = vpack.c.bf16 %v1559, %v1559
    %v1562 = vpack.c.bf16 %v1560, %v1560
    %1563 = vrot.lane.b32.xlu0 %v276, 44
    %v1564 = vpop.permute.xlu0 %1563
    %v1566 = vsel %vm389, %v1561, 0
    %v1569 = vsel %vm419, %v1564, 0
    %1571 = vmatprep.subr.bf16.mxu0 0
    %1572 = vmatpush1.bf16.msra.mxu0 %v1569
    %1573 = vmatprep.subr.bf16.mxu0 0
    %1574 = vmatpush1.bf16.msra.mxu0 0
    %1575 = vmatprep.subr.bf16.mxu0 0
    %1576 = vmatpush1.bf16.msra.mxu0 0
    %1577 = vmatprep.subr.bf16.mxu0 0
    %1578 = vmatpush1.bf16.msra.mxu0 0
    %1579 = vmatprep.subr.bf16.mxu0 0
    %1580 = vmatpush1.bf16.msra.mxu0 0
    %1581 = vmatprep.subr.bf16.mxu0 0
    %1582 = vmatpush1.bf16.msra.mxu0 0
    %1583 = vmatprep.subr.bf16.mxu0 0
    %1584 = vmatpush1.bf16.msra.mxu0 0
    %1585 = vmatprep.subr.bf16.mxu0 0
    %1586 = vmatpush1.bf16.msra.mxu0 0
    %1587 = vmatprep.subr.bf16.mxu0 0
    %1588 = vmatpush1.bf16.msra.mxu0 0
    %1589 = vmatprep.subr.bf16.mxu0 0
    %1590 = vmatpush1.bf16.msra.mxu0 0
    %1591 = vmatprep.subr.bf16.mxu0 0
    %1592 = vmatpush1.bf16.msra.mxu0 0
    %1593 = vmatprep.subr.bf16.mxu0 0
    %1594 = vmatpush1.bf16.msra.mxu0 0
    %1595 = vmatprep.subr.bf16.mxu0 0
    %1596 = vmatpush1.bf16.msra.mxu0 0
    %1597 = vmatprep.subr.bf16.mxu0 0
    %1598 = vmatpush1.bf16.msra.mxu0 0
    %1599 = vmatprep.subr.bf16.mxu0 0
    %1600 = vmatpush1.bf16.msra.mxu0 0
    %1601 = vmatprep.subr.bf16.mxu0 0
    %1602 = vmatpush1.bf16.msra.mxu0 0
    %1603 = vmatprep.mubr.bf16.mxu0 0
    %1604 = vmatmul.mubr.bf16.gmra.mrb[0].mxu0 %v1566
    %v1605 = vpop.f32.mrb[0].mxu0
    %v1606 = vadd.f32 0.0, %v1605
    %v1607 = vpop.f32.mrb[0].mxu0
    %v1608 = vpop.f32.mrb[0].mxu0
    %v1609 = vpop.f32.mrb[0].mxu0
    %1610 = vdwg.mxu0
    %1611 = vrot.lane.b32.xlu0 %v277, 44
    %v1612 = vpop.permute.xlu0 %1611
    %v1614 = vsel %vm389, %v1562, 0
    %v1617 = vsel %vm419, %v1612, 0
    %1619 = vmatprep.subr.bf16.mxu0 0
    %1620 = vmatpush1.bf16.msra.mxu0 %v1617
    %1621 = vmatprep.subr.bf16.mxu0 0
    %1622 = vmatpush1.bf16.msra.mxu0 0
    %1623 = vmatprep.subr.bf16.mxu0 0
    %1624 = vmatpush1.bf16.msra.mxu0 0
    %1625 = vmatprep.subr.bf16.mxu0 0
    %1626 = vmatpush1.bf16.msra.mxu0 0
    %1627 = vmatprep.subr.bf16.mxu0 0
    %1628 = vmatpush1.bf16.msra.mxu0 0
    %1629 = vmatprep.subr.bf16.mxu0 0
    %1630 = vmatpush1.bf16.msra.mxu0 0
    %1631 = vmatprep.subr.bf16.mxu0 0
    %1632 = vmatpush1.bf16.msra.mxu0 0
    %1633 = vmatprep.subr.bf16.mxu0 0
    %1634 = vmatpush1.bf16.msra.mxu0 0
    %1635 = vmatprep.subr.bf16.mxu0 0
    %1636 = vmatpush1.bf16.msra.mxu0 0
    %1637 = vmatprep.subr.bf16.mxu0 0
    %1638 = vmatpush1.bf16.msra.mxu0 0
    %1639 = vmatprep.subr.bf16.mxu0 0
    %1640 = vmatpush1.bf16.msra.mxu0 0
    %1641 = vmatprep.subr.bf16.mxu0 0
    %1642 = vmatpush1.bf16.msra.mxu0 0
    %1643 = vmatprep.subr.bf16.mxu0 0
    %1644 = vmatpush1.bf16.msra.mxu0 0
    %1645 = vmatprep.subr.bf16.mxu0 0
    %1646 = vmatpush1.bf16.msra.mxu0 0
    %1647 = vmatprep.subr.bf16.mxu0 0
    %1648 = vmatpush1.bf16.msra.mxu0 0
    %1649 = vmatprep.subr.bf16.mxu0 0
    %1650 = vmatpush1.bf16.msra.mxu0 0
    %1651 = vmatprep.mubr.bf16.mxu0 0
    %1652 = vmatmul.mubr.bf16.gmra.mrb[0].mxu0 %v1614
    %v1653 = vpop.f32.mrb[0].mxu0
    %v1654 = vadd.f32 0.0, %v1653
    %v1655 = vpop.f32.mrb[0].mxu0
    %v1656 = vpop.f32.mrb[0].mxu0
    %v1657 = vpop.f32.mrb[0].mxu0
    %1658 = vdwg.mxu0
    %1661 = vrot.lane.b32.xlu0 %v1606, 20
    %v1662 = vpop.permute.xlu0 %1661
    %1663 = vrot.lane.b32.xlu0 %v1654, 20
    %v1664 = vpop.permute.xlu0 %1663
    %vm1667 = vcmask 195744
    %1668 = vst.msk [vmem:[#allocation2] sm:$0xff] %vm1667, %v1662
    %1669 = vst.msk [vmem:[#allocation2 + $0x8] sm:$0xff] %vm1667, %v1664
    %1670 = vrot.lane.b32.xlu0 %v274, 104
    %v1671 = vpop.permute.xlu0 %1670
    %1672 = vrot.lane.b32.xlu0 %v276, 72
    %v1673 = vpop.permute.xlu0 %1672
    %v1675 = vsel %vm293, %v1671, 0
    %v1678 = vsel %vm293, %v1673, 0
    %1680 = vmatprep.subr.bf16.mxu0 0
    %1681 = vmatpush1.bf16.xpose.msra.mxu0 %v1678
    %1682 = vmatprep.subr.bf16.mxu0 0
    %1683 = vmatpush1.bf16.xpose.msra.mxu0 0
    %1684 = vmatprep.subr.bf16.mxu0 0
    %1685 = vmatpush1.bf16.xpose.msra.mxu0 0
    %1686 = vmatprep.subr.bf16.mxu0 0
    %1687 = vmatpush1.bf16.xpose.msra.mxu0 0
    %1688 = vmatprep.subr.bf16.mxu0 0
    %1689 = vmatpush1.bf16.xpose.msra.mxu0 0
    %1690 = vmatprep.subr.bf16.mxu0 0
    %1691 = vmatpush1.bf16.xpose.msra.mxu0 0
    %1692 = vmatprep.subr.bf16.mxu0 0
    %1693 = vmatpush1.bf16.xpose.msra.mxu0 0
    %1694 = vmatprep.subr.bf16.mxu0 0
    %1695 = vmatpush1.bf16.xpose.msra.mxu0 0
    %1696 = vmatprep.subr.bf16.mxu0 0
    %1697 = vmatpush1.bf16.xpose.msra.mxu0 0
    %1698 = vmatprep.subr.bf16.mxu0 0
    %1699 = vmatpush1.bf16.xpose.msra.mxu0 0
    %1700 = vmatprep.subr.bf16.mxu0 0
    %1701 = vmatpush1.bf16.xpose.msra.mxu0 0
    %1702 = vmatprep.subr.bf16.mxu0 0
    %1703 = vmatpush1.bf16.xpose.msra.mxu0 0
    %1704 = vmatprep.subr.bf16.mxu0 0
    %1705 = vmatpush1.bf16.xpose.msra.mxu0 0
    %1706 = vmatprep.subr.bf16.mxu0 0
    %1707 = vmatpush1.bf16.xpose.msra.mxu0 0
    %1708 = vmatprep.subr.bf16.mxu0 0
    %1709 = vmatpush1.bf16.xpose.msra.mxu0 0
    %1710 = vmatprep.subr.bf16.mxu0 0
    %1711 = vmatpush1.bf16.xpose.msra.mxu0 0
    %1712 = vmatprep.mubr.bf16.mxu0 0
    %1713 = vmatmul.mubr.bf16.gmra.mrb[0].mxu0 %v1675
    %v1714 = vpop.f32.mrb[0].mxu0
    %v1715 = vadd.f32 %v283, %v1714
    %v1716 = vpop.f32.mrb[0].mxu0
    %v1717 = vpop.f32.mrb[0].mxu0
    %v1718 = vpop.f32.mrb[0].mxu0
    %1719 = vdwg.mxu0
    %1720 = vrot.lane.b32.xlu0 %v275, 104
    %v1721 = vpop.permute.xlu0 %1720
    %1722 = vrot.lane.b32.xlu0 %v277, 72
    %v1723 = vpop.permute.xlu0 %1722
    %v1725 = vsel %vm293, %v1721, 0
    %v1728 = vsel %vm293, %v1723, 0
    %1730 = vmatprep.subr.bf16.mxu0 0
    %1731 = vmatpush1.bf16.xpose.msra.mxu0 %v1728
    %1732 = vmatprep.subr.bf16.mxu0 0
    %1733 = vmatpush1.bf16.xpose.msra.mxu0 0
    %1734 = vmatprep.subr.bf16.mxu0 0
    %1735 = vmatpush1.bf16.xpose.msra.mxu0 0
    %1736 = vmatprep.subr.bf16.mxu0 0
    %1737 = vmatpush1.bf16.xpose.msra.mxu0 0
    %1738 = vmatprep.subr.bf16.mxu0 0
    %1739 = vmatpush1.bf16.xpose.msra.mxu0 0
    %1740 = vmatprep.subr.bf16.mxu0 0
    %1741 = vmatpush1.bf16.xpose.msra.mxu0 0
    %1742 = vmatprep.subr.bf16.mxu0 0
    %1743 = vmatpush1.bf16.xpose.msra.mxu0 0
    %1744 = vmatprep.subr.bf16.mxu0 0
    %1745 = vmatpush1.bf16.xpose.msra.mxu0 0
    %1746 = vmatprep.subr.bf16.mxu0 0
    %1747 = vmatpush1.bf16.xpose.msra.mxu0 0
    %1748 = vmatprep.subr.bf16.mxu0 0
    %1749 = vmatpush1.bf16.xpose.msra.mxu0 0
    %1750 = vmatprep.subr.bf16.mxu0 0
    %1751 = vmatpush1.bf16.xpose.msra.mxu0 0
    %1752 = vmatprep.subr.bf16.mxu0 0
    %1753 = vmatpush1.bf16.xpose.msra.mxu0 0
    %1754 = vmatprep.subr.bf16.mxu0 0
    %1755 = vmatpush1.bf16.xpose.msra.mxu0 0
    %1756 = vmatprep.subr.bf16.mxu0 0
    %1757 = vmatpush1.bf16.xpose.msra.mxu0 0
    %1758 = vmatprep.subr.bf16.mxu0 0
    %1759 = vmatpush1.bf16.xpose.msra.mxu0 0
    %1760 = vmatprep.subr.bf16.mxu0 0
    %1761 = vmatpush1.bf16.xpose.msra.mxu0 0
    %1762 = vmatprep.mubr.bf16.mxu0 0
    %1763 = vmatmul.mubr.bf16.gmra.mrb[0].mxu0 %v1725
    %v1764 = vpop.f32.mrb[0].mxu0
    %v1765 = vadd.f32 %v287, %v1764
    %v1766 = vpop.f32.mrb[0].mxu0
    %v1767 = vpop.f32.mrb[0].mxu0
    %v1768 = vpop.f32.mrb[0].mxu0
    %1769 = vdwg.mxu0
    %v1770 = vsel %vm389, %v1715, -inf
    %1771 = vmax.xlane.f32.xlu0 %v1770
    %v1772 = vpop.xlane.xlu0 %1771
    %v1773 = vsel %vm389, %v1765, -inf
    %1774 = vmax.xlane.f32.xlu0 %v1773
    %v1775 = vpop.xlane.xlu0 %1774
    %v1776 = vsub.f32 %v1715, %v1772
    %v1777 = vsub.f32 %v1765, %v1775
    %v1778 = vmul.f32 %v1776, 1.442695
    %v1779 = vpow.pop %v1778
    %v1780 = vmul.f32 %v1777, 1.442695
    %v1781 = vpow.pop %v1780
    %v1782 = vsel %vm389, %v1779, 0.0
    %1783 = vadd.xlane.f32.xlu0 %v1782
    %v1784 = vpop.xlane.xlu0 %1783
    %v1785 = vsel %vm389, %v1781, 0.0
    %1786 = vadd.xlane.f32.xlu0 %v1785
    %v1787 = vpop.xlane.xlu0 %1786
    %v1788 = vrcp.pop %v1784
    %v1789 = vrcp.pop %v1787
    %v1790 = vmul.f32 %v1779, %v1788
    %v1791 = vmul.f32 %v1781, %v1789
    %v1792 = vpack.c.bf16 %v1790, %v1790
    %v1793 = vpack.c.bf16 %v1791, %v1791
    %1794 = vrot.lane.b32.xlu0 %v276, 40
    %v1795 = vpop.permute.xlu0 %1794
    %v1797 = vsel %vm389, %v1792, 0
    %v1800 = vsel %vm419, %v1795, 0
    %1802 = vmatprep.subr.bf16.mxu0 0
    %1803 = vmatpush1.bf16.msra.mxu0 %v1800
    %1804 = vmatprep.subr.bf16.mxu0 0
    %1805 = vmatpush1.bf16.msra.mxu0 0
    %1806 = vmatprep.subr.bf16.mxu0 0
    %1807 = vmatpush1.bf16.msra.mxu0 0
    %1808 = vmatprep.subr.bf16.mxu0 0
    %1809 = vmatpush1.bf16.msra.mxu0 0
    %1810 = vmatprep.subr.bf16.mxu0 0
    %1811 = vmatpush1.bf16.msra.mxu0 0
    %1812 = vmatprep.subr.bf16.mxu0 0
    %1813 = vmatpush1.bf16.msra.mxu0 0
    %1814 = vmatprep.subr.bf16.mxu0 0
    %1815 = vmatpush1.bf16.msra.mxu0 0
    %1816 = vmatprep.subr.bf16.mxu0 0
    %1817 = vmatpush1.bf16.msra.mxu0 0
    %1818 = vmatprep.subr.bf16.mxu0 0
    %1819 = vmatpush1.bf16.msra.mxu0 0
    %1820 = vmatprep.subr.bf16.mxu0 0
    %1821 = vmatpush1.bf16.msra.mxu0 0
    %1822 = vmatprep.subr.bf16.mxu0 0
    %1823 = vmatpush1.bf16.msra.mxu0 0
    %1824 = vmatprep.subr.bf16.mxu0 0
    %1825 = vmatpush1.bf16.msra.mxu0 0
    %1826 = vmatprep.subr.bf16.mxu0 0
    %1827 = vmatpush1.bf16.msra.mxu0 0
    %1828 = vmatprep.subr.bf16.mxu0 0
    %1829 = vmatpush1.bf16.msra.mxu0 0
    %1830 = vmatprep.subr.bf16.mxu0 0
    %1831 = vmatpush1.bf16.msra.mxu0 0
    %1832 = vmatprep.subr.bf16.mxu0 0
    %1833 = vmatpush1.bf16.msra.mxu0 0
    %1834 = vmatprep.mubr.bf16.mxu0 0
    %1835 = vmatmul.mubr.bf16.gmra.mrb[0].mxu0 %v1797
    %v1836 = vpop.f32.mrb[0].mxu0
    %v1837 = vadd.f32 0.0, %v1836
    %v1838 = vpop.f32.mrb[0].mxu0
    %v1839 = vpop.f32.mrb[0].mxu0
    %v1840 = vpop.f32.mrb[0].mxu0
    %1841 = vdwg.mxu0
    %1842 = vrot.lane.b32.xlu0 %v277, 40
    %v1843 = vpop.permute.xlu0 %1842
    %v1845 = vsel %vm389, %v1793, 0
    %v1848 = vsel %vm419, %v1843, 0
    %1850 = vmatprep.subr.bf16.mxu0 0
    %1851 = vmatpush1.bf16.msra.mxu0 %v1848
    %1852 = vmatprep.subr.bf16.mxu0 0
    %1853 = vmatpush1.bf16.msra.mxu0 0
    %1854 = vmatprep.subr.bf16.mxu0 0
    %1855 = vmatpush1.bf16.msra.mxu0 0
    %1856 = vmatprep.subr.bf16.mxu0 0
    %1857 = vmatpush1.bf16.msra.mxu0 0
    %1858 = vmatprep.subr.bf16.mxu0 0
    %1859 = vmatpush1.bf16.msra.mxu0 0
    %1860 = vmatprep.subr.bf16.mxu0 0
    %1861 = vmatpush1.bf16.msra.mxu0 0
    %1862 = vmatprep.subr.bf16.mxu0 0
    %1863 = vmatpush1.bf16.msra.mxu0 0
    %1864 = vmatprep.subr.bf16.mxu0 0
    %1865 = vmatpush1.bf16.msra.mxu0 0
    %1866 = vmatprep.subr.bf16.mxu0 0
    %1867 = vmatpush1.bf16.msra.mxu0 0
    %1868 = vmatprep.subr.bf16.mxu0 0
    %1869 = vmatpush1.bf16.msra.mxu0 0
    %1870 = vmatprep.subr.bf16.mxu0 0
    %1871 = vmatpush1.bf16.msra.mxu0 0
    %1872 = vmatprep.subr.bf16.mxu0 0
    %1873 = vmatpush1.bf16.msra.mxu0 0
    %1874 = vmatprep.subr.bf16.mxu0 0
    %1875 = vmatpush1.bf16.msra.mxu0 0
    %1876 = vmatprep.subr.bf16.mxu0 0
    %1877 = vmatpush1.bf16.msra.mxu0 0
    %1878 = vmatprep.subr.bf16.mxu0 0
    %1879 = vmatpush1.bf16.msra.mxu0 0
    %1880 = vmatprep.subr.bf16.mxu0 0
    %1881 = vmatpush1.bf16.msra.mxu0 0
    %1882 = vmatprep.mubr.bf16.mxu0 0
    %1883 = vmatmul.mubr.bf16.gmra.mrb[0].mxu0 %v1845
    %v1884 = vpop.f32.mrb[0].mxu0
    %v1885 = vadd.f32 0.0, %v1884
    %v1886 = vpop.f32.mrb[0].mxu0
    %v1887 = vpop.f32.mrb[0].mxu0
    %v1888 = vpop.f32.mrb[0].mxu0
    %1889 = vdwg.mxu0
    %1892 = vrot.lane.b32.xlu0 %v1837, 24
    %v1893 = vpop.permute.xlu0 %1892
    %1894 = vrot.lane.b32.xlu0 %v1885, 24
    %v1895 = vpop.permute.xlu0 %1894
    %vm1898 = vcmask 228544
    %1899 = vst.msk [vmem:[#allocation2] sm:$0xff] %vm1898, %v1893
    %1900 = vst.msk [vmem:[#allocation2 + $0x8] sm:$0xff] %vm1898, %v1895
    %1901 = vrot.lane.b32.xlu0 %v274, 100
    %v1902 = vpop.permute.xlu0 %1901
    %1903 = vrot.lane.b32.xlu0 %v276, 68
    %v1904 = vpop.permute.xlu0 %1903
    %v1906 = vsel %vm293, %v1902, 0
    %v1909 = vsel %vm293, %v1904, 0
    %1911 = vmatprep.subr.bf16.mxu0 0
    %1912 = vmatpush1.bf16.xpose.msra.mxu0 %v1909
    %1913 = vmatprep.subr.bf16.mxu0 0
    %1914 = vmatpush1.bf16.xpose.msra.mxu0 0
    %1915 = vmatprep.subr.bf16.mxu0 0
    %1916 = vmatpush1.bf16.xpose.msra.mxu0 0
    %1917 = vmatprep.subr.bf16.mxu0 0
    %1918 = vmatpush1.bf16.xpose.msra.mxu0 0
    %1919 = vmatprep.subr.bf16.mxu0 0
    %1920 = vmatpush1.bf16.xpose.msra.mxu0 0
    %1921 = vmatprep.subr.bf16.mxu0 0
    %1922 = vmatpush1.bf16.xpose.msra.mxu0 0
    %1923 = vmatprep.subr.bf16.mxu0 0
    %1924 = vmatpush1.bf16.xpose.msra.mxu0 0
    %1925 = vmatprep.subr.bf16.mxu0 0
    %1926 = vmatpush1.bf16.xpose.msra.mxu0 0
    %1927 = vmatprep.subr.bf16.mxu0 0
    %1928 = vmatpush1.bf16.xpose.msra.mxu0 0
    %1929 = vmatprep.subr.bf16.mxu0 0
    %1930 = vmatpush1.bf16.xpose.msra.mxu0 0
    %1931 = vmatprep.subr.bf16.mxu0 0
    %1932 = vmatpush1.bf16.xpose.msra.mxu0 0
    %1933 = vmatprep.subr.bf16.mxu0 0
    %1934 = vmatpush1.bf16.xpose.msra.mxu0 0
    %1935 = vmatprep.subr.bf16.mxu0 0
    %1936 = vmatpush1.bf16.xpose.msra.mxu0 0
    %1937 = vmatprep.subr.bf16.mxu0 0
    %1938 = vmatpush1.bf16.xpose.msra.mxu0 0
    %1939 = vmatprep.subr.bf16.mxu0 0
    %1940 = vmatpush1.bf16.xpose.msra.mxu0 0
    %1941 = vmatprep.subr.bf16.mxu0 0
    %1942 = vmatpush1.bf16.xpose.msra.mxu0 0
    %1943 = vmatprep.mubr.bf16.mxu0 0
    %1944 = vmatmul.mubr.bf16.gmra.mrb[0].mxu0 %v1906
    %v1945 = vpop.f32.mrb[0].mxu0
    %v1946 = vadd.f32 %v283, %v1945
    %v1947 = vpop.f32.mrb[0].mxu0
    %v1948 = vpop.f32.mrb[0].mxu0
    %v1949 = vpop.f32.mrb[0].mxu0
    %1950 = vdwg.mxu0
    %1951 = vrot.lane.b32.xlu0 %v275, 100
    %v1952 = vpop.permute.xlu0 %1951
    %1953 = vrot.lane.b32.xlu0 %v277, 68
    %v1954 = vpop.permute.xlu0 %1953
    %v1956 = vsel %vm293, %v1952, 0
    %v1959 = vsel %vm293, %v1954, 0
    %1961 = vmatprep.subr.bf16.mxu0 0
    %1962 = vmatpush1.bf16.xpose.msra.mxu0 %v1959
    %1963 = vmatprep.subr.bf16.mxu0 0
    %1964 = vmatpush1.bf16.xpose.msra.mxu0 0
    %1965 = vmatprep.subr.bf16.mxu0 0
    %1966 = vmatpush1.bf16.xpose.msra.mxu0 0
    %1967 = vmatprep.subr.bf16.mxu0 0
    %1968 = vmatpush1.bf16.xpose.msra.mxu0 0
    %1969 = vmatprep.subr.bf16.mxu0 0
    %1970 = vmatpush1.bf16.xpose.msra.mxu0 0
    %1971 = vmatprep.subr.bf16.mxu0 0
    %1972 = vmatpush1.bf16.xpose.msra.mxu0 0
    %1973 = vmatprep.subr.bf16.mxu0 0
    %1974 = vmatpush1.bf16.xpose.msra.mxu0 0
    %1975 = vmatprep.subr.bf16.mxu0 0
    %1976 = vmatpush1.bf16.xpose.msra.mxu0 0
    %1977 = vmatprep.subr.bf16.mxu0 0
    %1978 = vmatpush1.bf16.xpose.msra.mxu0 0
    %1979 = vmatprep.subr.bf16.mxu0 0
    %1980 = vmatpush1.bf16.xpose.msra.mxu0 0
    %1981 = vmatprep.subr.bf16.mxu0 0
    %1982 = vmatpush1.bf16.xpose.msra.mxu0 0
    %1983 = vmatprep.subr.bf16.mxu0 0
    %1984 = vmatpush1.bf16.xpose.msra.mxu0 0
    %1985 = vmatprep.subr.bf16.mxu0 0
    %1986 = vmatpush1.bf16.xpose.msra.mxu0 0
    %1987 = vmatprep.subr.bf16.mxu0 0
    %1988 = vmatpush1.bf16.xpose.msra.mxu0 0
    %1989 = vmatprep.subr.bf16.mxu0 0
    %1990 = vmatpush1.bf16.xpose.msra.mxu0 0
    %1991 = vmatprep.subr.bf16.mxu0 0
    %1992 = vmatpush1.bf16.xpose.msra.mxu0 0
    %1993 = vmatprep.mubr.bf16.mxu0 0
    %1994 = vmatmul.mubr.bf16.gmra.mrb[0].mxu0 %v1956
    %v1995 = vpop.f32.mrb[0].mxu0
    %v1996 = vadd.f32 %v287, %v1995
    %v1997 = vpop.f32.mrb[0].mxu0
    %v1998 = vpop.f32.mrb[0].mxu0
    %v1999 = vpop.f32.mrb[0].mxu0
    %2000 = vdwg.mxu0
    %v2001 = vsel %vm389, %v1946, -inf
    %2002 = vmax.xlane.f32.xlu0 %v2001
    %v2003 = vpop.xlane.xlu0 %2002
    %v2004 = vsel %vm389, %v1996, -inf
    %2005 = vmax.xlane.f32.xlu0 %v2004
    %v2006 = vpop.xlane.xlu0 %2005
    %v2007 = vsub.f32 %v1946, %v2003
    %v2008 = vsub.f32 %v1996, %v2006
    %v2009 = vmul.f32 %v2007, 1.442695
    %v2010 = vpow.pop %v2009
    %v2011 = vmul.f32 %v2008, 1.442695
    %v2012 = vpow.pop %v2011
    %v2013 = vsel %vm389, %v2010, 0.0
    %2014 = vadd.xlane.f32.xlu0 %v2013
    %v2015 = vpop.xlane.xlu0 %2014
    %v2016 = vsel %vm389, %v2012, 0.0
    %2017 = vadd.xlane.f32.xlu0 %v2016
    %v2018 = vpop.xlane.xlu0 %2017
    %v2019 = vrcp.pop %v2015
    %v2020 = vrcp.pop %v2018
    %v2021 = vmul.f32 %v2010, %v2019
    %v2022 = vmul.f32 %v2012, %v2020
    %v2023 = vpack.c.bf16 %v2021, %v2021
    %v2024 = vpack.c.bf16 %v2022, %v2022
    %2025 = vrot.lane.b32.xlu0 %v276, 36
    %v2026 = vpop.permute.xlu0 %2025
    %v2028 = vsel %vm389, %v2023, 0
    %v2031 = vsel %vm419, %v2026, 0
    %2033 = vmatprep.subr.bf16.mxu0 0
    %2034 = vmatpush1.bf16.msra.mxu0 %v2031
    %2035 = vmatprep.subr.bf16.mxu0 0
    %2036 = vmatpush1.bf16.msra.mxu0 0
    %2037 = vmatprep.subr.bf16.mxu0 0
    %2038 = vmatpush1.bf16.msra.mxu0 0
    %2039 = vmatprep.subr.bf16.mxu0 0
    %2040 = vmatpush1.bf16.msra.mxu0 0
    %2041 = vmatprep.subr.bf16.mxu0 0
    %2042 = vmatpush1.bf16.msra.mxu0 0
    %2043 = vmatprep.subr.bf16.mxu0 0
    %2044 = vmatpush1.bf16.msra.mxu0 0
    %2045 = vmatprep.subr.bf16.mxu0 0
    %2046 = vmatpush1.bf16.msra.mxu0 0
    %2047 = vmatprep.subr.bf16.mxu0 0
    %2048 = vmatpush1.bf16.msra.mxu0 0
    %2049 = vmatprep.subr.bf16.mxu0 0
    %2050 = vmatpush1.bf16.msra.mxu0 0
    %2051 = vmatprep.subr.bf16.mxu0 0
    %2052 = vmatpush1.bf16.msra.mxu0 0
    %2053 = vmatprep.subr.bf16.mxu0 0
    %2054 = vmatpush1.bf16.msra.mxu0 0
    %2055 = vmatprep.subr.bf16.mxu0 0
    %2056 = vmatpush1.bf16.msra.mxu0 0
    %2057 = vmatprep.subr.bf16.mxu0 0
    %2058 = vmatpush1.bf16.msra.mxu0 0
    %2059 = vmatprep.subr.bf16.mxu0 0
    %2060 = vmatpush1.bf16.msra.mxu0 0
    %2061 = vmatprep.subr.bf16.mxu0 0
    %2062 = vmatpush1.bf16.msra.mxu0 0
    %2063 = vmatprep.subr.bf16.mxu0 0
    %2064 = vmatpush1.bf16.msra.mxu0 0
    %2065 = vmatprep.mubr.bf16.mxu0 0
    %2066 = vmatmul.mubr.bf16.gmra.mrb[0].mxu0 %v2028
    %v2067 = vpop.f32.mrb[0].mxu0
    %v2068 = vadd.f32 0.0, %v2067
    %v2069 = vpop.f32.mrb[0].mxu0
    %v2070 = vpop.f32.mrb[0].mxu0
    %v2071 = vpop.f32.mrb[0].mxu0
    %2072 = vdwg.mxu0
    %2073 = vrot.lane.b32.xlu0 %v277, 36
    %v2074 = vpop.permute.xlu0 %2073
    %v2076 = vsel %vm389, %v2024, 0
    %v2079 = vsel %vm419, %v2074, 0
    %2081 = vmatprep.subr.bf16.mxu0 0
    %2082 = vmatpush1.bf16.msra.mxu0 %v2079
    %2083 = vmatprep.subr.bf16.mxu0 0
    %2084 = vmatpush1.bf16.msra.mxu0 0
    %2085 = vmatprep.subr.bf16.mxu0 0
    %2086 = vmatpush1.bf16.msra.mxu0 0
    %2087 = vmatprep.subr.bf16.mxu0 0
    %2088 = vmatpush1.bf16.msra.mxu0 0
    %2089 = vmatprep.subr.bf16.mxu0 0
    %2090 = vmatpush1.bf16.msra.mxu0 0
    %2091 = vmatprep.subr.bf16.mxu0 0
    %2092 = vmatpush1.bf16.msra.mxu0 0
    %2093 = vmatprep.subr.bf16.mxu0 0
    %2094 = vmatpush1.bf16.msra.mxu0 0
    %2095 = vmatprep.subr.bf16.mxu0 0
    %2096 = vmatpush1.bf16.msra.mxu0 0
    %2097 = vmatprep.subr.bf16.mxu0 0
    %2098 = vmatpush1.bf16.msra.mxu0 0
    %2099 = vmatprep.subr.bf16.mxu0 0
    %2100 = vmatpush1.bf16.msra.mxu0 0
    %2101 = vmatprep.subr.bf16.mxu0 0
    %2102 = vmatpush1.bf16.msra.mxu0 0
    %2103 = vmatprep.subr.bf16.mxu0 0
    %2104 = vmatpush1.bf16.msra.mxu0 0
    %2105 = vmatprep.subr.bf16.mxu0 0
    %2106 = vmatpush1.bf16.msra.mxu0 0
    %2107 = vmatprep.subr.bf16.mxu0 0
    %2108 = vmatpush1.bf16.msra.mxu0 0
    %2109 = vmatprep.subr.bf16.mxu0 0
    %2110 = vmatpush1.bf16.msra.mxu0 0
    %2111 = vmatprep.subr.bf16.mxu0 0
    %2112 = vmatpush1.bf16.msra.mxu0 0
    %2113 = vmatprep.mubr.bf16.mxu0 0
    %2114 = vmatmul.mubr.bf16.gmra.mrb[0].mxu0 %v2076
    %v2115 = vpop.f32.mrb[0].mxu0
    %v2116 = vadd.f32 0.0, %v2115
    %v2117 = vpop.f32.mrb[0].mxu0
    %v2118 = vpop.f32.mrb[0].mxu0
    %v2119 = vpop.f32.mrb[0].mxu0
    %2120 = vdwg.mxu0
    %2123 = vrot.lane.b32.xlu0 %v2068, 28
    %v2124 = vpop.permute.xlu0 %2123
    %2125 = vrot.lane.b32.xlu0 %v2116, 28
    %v2126 = vpop.permute.xlu0 %2125
    %vm2129 = vcmask 261344
    %2130 = vst.msk [vmem:[#allocation2] sm:$0xff] %vm2129, %v2124
    %2131 = vst.msk [vmem:[#allocation2 + $0x8] sm:$0xff] %vm2129, %v2126
    %v2132 = vld [vmem:[#allocation2] sm:$0xff]
    %v2133 = vld [vmem:[#allocation2 + $0x8] sm:$0xff]
    %v2134 = vpack.c.bf16 %v2133, %v2132
    %v2135 = vld [vmem:[#allocation11] sm:$0xf]
    %v2136 = vld [vmem:[#allocation11 + $0x4] sm:$0xf]
    %v2137 = vld [vmem:[#allocation11 + $0x8] sm:$0xf]
    %v2138 = vld [vmem:[#allocation11 + $0xc] sm:$0xf]
    %v2139 = vld [vmem:[#allocation12] sm:$0x1]
    %v2141 = vlaneseq
    %v2142 = vshrl.u32 %v2141, 7
    %v2143 = vsub.s32 0, %v2142
    %v2144 = vrot.slane %v2139, %v2143
    %v2150 = vunpack.c.l.b16 %v2135
    %v2151 = vunpack.c.l.b16 %v2136
    %v2152 = vunpack.c.l.b16 %v2137
    %v2153 = vunpack.c.l.b16 %v2138
    %v2154 = vpack.c.b16 %v2151, %v2150
    %v2155 = vpack.c.b16 %v2153, %v2152
    %v2159 = vsel %vm227, %v2134, 0
    %2161 = vmatprep.subr.bf16.mxu0 0
    %2162 = vmatpush1.bf16.msra.mxu0 %v2154
    %2163 = vmatprep.subr.bf16.mxu0 0
    %2164 = vmatpush1.bf16.msra.mxu0 %v2155
    %2165 = vmatprep.subr.bf16.mxu0 0
    %2166 = vmatpush1.bf16.msra.mxu0 0
    %2167 = vmatprep.subr.bf16.mxu0 0
    %2168 = vmatpush1.bf16.msra.mxu0 0
    %2169 = vmatprep.subr.bf16.mxu0 0
    %2170 = vmatpush1.bf16.msra.mxu0 0
    %2171 = vmatprep.subr.bf16.mxu0 0
    %2172 = vmatpush1.bf16.msra.mxu0 0
    %2173 = vmatprep.subr.bf16.mxu0 0
    %2174 = vmatpush1.bf16.msra.mxu0 0
    %2175 = vmatprep.subr.bf16.mxu0 0
    %2176 = vmatpush1.bf16.msra.mxu0 0
    %2177 = vmatprep.subr.bf16.mxu0 0
    %2178 = vmatpush1.bf16.msra.mxu0 0
    %2179 = vmatprep.subr.bf16.mxu0 0
    %2180 = vmatpush1.bf16.msra.mxu0 0
    %2181 = vmatprep.subr.bf16.mxu0 0
    %2182 = vmatpush1.bf16.msra.mxu0 0
    %2183 = vmatprep.subr.bf16.mxu0 0
    %2184 = vmatpush1.bf16.msra.mxu0 0
    %2185 = vmatprep.subr.bf16.mxu0 0
    %2186 = vmatpush1.bf16.msra.mxu0 0
    %2187 = vmatprep.subr.bf16.mxu0 0
    %2188 = vmatpush1.bf16.msra.mxu0 0
    %2189 = vmatprep.subr.bf16.mxu0 0
    %2190 = vmatpush1.bf16.msra.mxu0 0
    %2191 = vmatprep.subr.bf16.mxu0 0
    %2192 = vmatpush1.bf16.msra.mxu0 0
    %2193 = vmatprep.mubr.bf16.mxu0 0
    %2194 = vmatmul.mubr.bf16.gmra.mrb[0].mxu0 %v2159
    %v2195 = vpop.f32.mrb[0].mxu0
    %v2196 = vadd.f32 %v2144, %v2195
    %v2197 = vpop.f32.mrb[0].mxu0
    %v2198 = vpop.f32.mrb[0].mxu0
    %v2199 = vadd.f32 %v2144, %v2198
    %v2200 = vpop.f32.mrb[0].mxu0
    %2201 = vdwg.mxu0
    %v2202 = vpack.c.bf16 %v2199, %v2196
    %v2203 = vld [vmem:[#allocation14] sm:$0xf]
    %v2204 = vld [vmem:[#allocation14 + $0x4] sm:$0xf]
    %v2205 = vld [vmem:[#allocation14 + $0x8] sm:$0xf]
    %v2206 = vld [vmem:[#allocation14 + $0xc] sm:$0xf]
    %v2207 = vld [vmem:[#allocation15] sm:$0x1]
    %v2209 = vlaneseq
    %v2210 = vshrl.u32 %v2209, 7
    %v2211 = vsub.s32 0, %v2210
    %v2212 = vrot.slane %v2207, %v2211
    %v2218 = vunpack.c.l.b16 %v2203
    %v2219 = vunpack.c.l.b16 %v2204
    %v2220 = vunpack.c.l.b16 %v2205
    %v2221 = vunpack.c.l.b16 %v2206
    %v2222 = vpack.c.b16 %v2219, %v2218
    %v2223 = vpack.c.b16 %v2221, %v2220
    %v2227 = vsel %vm227, %v2202, 0
    %2229 = vmatprep.subr.bf16.mxu0 0
    %2230 = vmatpush1.bf16.msra.mxu0 %v2222
    %2231 = vmatprep.subr.bf16.mxu0 0
    %2232 = vmatpush1.bf16.msra.mxu0 %v2223
    %2233 = vmatprep.subr.bf16.mxu0 0
    %2234 = vmatpush1.bf16.msra.mxu0 0
    %2235 = vmatprep.subr.bf16.mxu0 0
    %2236 = vmatpush1.bf16.msra.mxu0 0
    %2237 = vmatprep.subr.bf16.mxu0 0
    %2238 = vmatpush1.bf16.msra.mxu0 0
    %2239 = vmatprep.subr.bf16.mxu0 0
    %2240 = vmatpush1.bf16.msra.mxu0 0
    %2241 = vmatprep.subr.bf16.mxu0 0
    %2242 = vmatpush1.bf16.msra.mxu0 0
    %2243 = vmatprep.subr.bf16.mxu0 0
    %2244 = vmatpush1.bf16.msra.mxu0 0
    %2245 = vmatprep.subr.bf16.mxu0 0
    %2246 = vmatpush1.bf16.msra.mxu0 0
    %2247 = vmatprep.subr.bf16.mxu0 0
    %2248 = vmatpush1.bf16.msra.mxu0 0
    %2249 = vmatprep.subr.bf16.mxu0 0
    %2250 = vmatpush1.bf16.msra.mxu0 0
    %2251 = vmatprep.subr.bf16.mxu0 0
    %2252 = vmatpush1.bf16.msra.mxu0 0
    %2253 = vmatprep.subr.bf16.mxu0 0
    %2254 = vmatpush1.bf16.msra.mxu0 0
    %2255 = vmatprep.subr.bf16.mxu0 0
    %2256 = vmatpush1.bf16.msra.mxu0 0
    %2257 = vmatprep.subr.bf16.mxu0 0
    %2258 = vmatpush1.bf16.msra.mxu0 0
    %2259 = vmatprep.subr.bf16.mxu0 0
    %2260 = vmatpush1.bf16.msra.mxu0 0
    %2261 = vmatprep.mubr.bf16.mxu0 0
    %2262 = vmatmul.mubr.bf16.gmra.mrb[0].mxu0 %v2227
    %v2263 = vpop.f32.mrb[0].mxu0
    %v2264 = vadd.f32 %v2212, %v2263
    %v2265 = vpop.f32.mrb[0].mxu0
    %v2266 = vpop.f32.mrb[0].mxu0
    %v2267 = vadd.f32 %v2212, %v2266
    %v2268 = vpop.f32.mrb[0].mxu0
    %2269 = vdwg.mxu0
    %v2270 = vmul.f32 %v2264, 0.17677669
    %v2271 = vmul.f32 %v2267, 0.17677669
    %v2272 = vpack.c.bf16 %v2270, %v2270
    %v2273 = vpack.c.bf16 %v2271, %v2271
    %v2274 = vpack.c.bf16 %v2264, %v2264
    %v2275 = vpack.c.bf16 %v2267, %v2267
    %2277 = vrot.lane.b32.xlu0 %v2274, 96
    %v2278 = vpop.permute.xlu0 %2277
    %v2280 = vsel %vm227, %v2272, 0
    %v2283 = vsel %vm227, %v2278, 0
    %2285 = vmatprep.subr.bf16.mxu0 0
    %2286 = vmatpush1.bf16.xpose.msra.mxu0 %v2283
    %2287 = vmatprep.subr.bf16.mxu0 0
    %2288 = vmatpush1.bf16.xpose.msra.mxu0 0
    %2289 = vmatprep.subr.bf16.mxu0 0
    %2290 = vmatpush1.bf16.xpose.msra.mxu0 0
    %2291 = vmatprep.subr.bf16.mxu0 0
    %2292 = vmatpush1.bf16.xpose.msra.mxu0 0
    %2293 = vmatprep.subr.bf16.mxu0 0
    %2294 = vmatpush1.bf16.xpose.msra.mxu0 0
    %2295 = vmatprep.subr.bf16.mxu0 0
    %2296 = vmatpush1.bf16.xpose.msra.mxu0 0
    %2297 = vmatprep.subr.bf16.mxu0 0
    %2298 = vmatpush1.bf16.xpose.msra.mxu0 0
    %2299 = vmatprep.subr.bf16.mxu0 0
    %2300 = vmatpush1.bf16.xpose.msra.mxu0 0
    %2301 = vmatprep.subr.bf16.mxu0 0
    %2302 = vmatpush1.bf16.xpose.msra.mxu0 0
    %2303 = vmatprep.subr.bf16.mxu0 0
    %2304 = vmatpush1.bf16.xpose.msra.mxu0 0
    %2305 = vmatprep.subr.bf16.mxu0 0
    %2306 = vmatpush1.bf16.xpose.msra.mxu0 0
    %2307 = vmatprep.subr.bf16.mxu0 0
    %2308 = vmatpush1.bf16.xpose.msra.mxu0 0
    %2309 = vmatprep.subr.bf16.mxu0 0
    %2310 = vmatpush1.bf16.xpose.msra.mxu0 0
    %2311 = vmatprep.subr.bf16.mxu0 0
    %2312 = vmatpush1.bf16.xpose.msra.mxu0 0
    %2313 = vmatprep.subr.bf16.mxu0 0
    %2314 = vmatpush1.bf16.xpose.msra.mxu0 0
    %2315 = vmatprep.subr.bf16.mxu0 0
    %2316 = vmatpush1.bf16.xpose.msra.mxu0 0
    %2317 = vmatprep.mubr.bf16.mxu0 0
    %2318 = vmatmul.mubr.bf16.gmra.mrb[0].mxu0 %v2280
    %v2319 = vpop.f32.mrb[0].mxu0
    %v2320 = vadd.f32 %v283, %v2319
    %v2321 = vpop.f32.mrb[0].mxu0
    %v2322 = vpop.f32.mrb[0].mxu0
    %v2323 = vpop.f32.mrb[0].mxu0
    %2324 = vdwg.mxu0
    %2326 = vrot.lane.b32.xlu0 %v2275, 96
    %v2327 = vpop.permute.xlu0 %2326
    %v2329 = vsel %vm227, %v2273, 0
    %v2332 = vsel %vm227, %v2327, 0
    %2334 = vmatprep.subr.bf16.mxu0 0
    %2335 = vmatpush1.bf16.xpose.msra.mxu0 %v2332
    %2336 = vmatprep.subr.bf16.mxu0 0
    %2337 = vmatpush1.bf16.xpose.msra.mxu0 0
    %2338 = vmatprep.subr.bf16.mxu0 0
    %2339 = vmatpush1.bf16.xpose.msra.mxu0 0
    %2340 = vmatprep.subr.bf16.mxu0 0
    %2341 = vmatpush1.bf16.xpose.msra.mxu0 0
    %2342 = vmatprep.subr.bf16.mxu0 0
    %2343 = vmatpush1.bf16.xpose.msra.mxu0 0
    %2344 = vmatprep.subr.bf16.mxu0 0
    %2345 = vmatpush1.bf16.xpose.msra.mxu0 0
    %2346 = vmatprep.subr.bf16.mxu0 0
    %2347 = vmatpush1.bf16.xpose.msra.mxu0 0
    %2348 = vmatprep.subr.bf16.mxu0 0
    %2349 = vmatpush1.bf16.xpose.msra.mxu0 0
    %2350 = vmatprep.subr.bf16.mxu0 0
    %2351 = vmatpush1.bf16.xpose.msra.mxu0 0
    %2352 = vmatprep.subr.bf16.mxu0 0
    %2353 = vmatpush1.bf16.xpose.msra.mxu0 0
    %2354 = vmatprep.subr.bf16.mxu0 0
    %2355 = vmatpush1.bf16.xpose.msra.mxu0 0
    %2356 = vmatprep.subr.bf16.mxu0 0
    %2357 = vmatpush1.bf16.xpose.msra.mxu0 0
    %2358 = vmatprep.subr.bf16.mxu0 0
    %2359 = vmatpush1.bf16.xpose.msra.mxu0 0
    %2360 = vmatprep.subr.bf16.mxu0 0
    %2361 = vmatpush1.bf16.xpose.msra.mxu0 0
    %2362 = vmatprep.subr.bf16.mxu0 0
    %2363 = vmatpush1.bf16.xpose.msra.mxu0 0
    %2364 = vmatprep.subr.bf16.mxu0 0
    %2365 = vmatpush1.bf16.xpose.msra.mxu0 0
    %2366 = vmatprep.mubr.bf16.mxu0 0
    %2367 = vmatmul.mubr.bf16.gmra.mrb[0].mxu0 %v2329
    %v2368 = vpop.f32.mrb[0].mxu0
    %v2369 = vadd.f32 %v287, %v2368
    %v2370 = vpop.f32.mrb[0].mxu0
    %v2371 = vpop.f32.mrb[0].mxu0
    %v2372 = vpop.f32.mrb[0].mxu0
    %2373 = vdwg.mxu0
    %v2374 = vsel %vm389, %v2320, -inf
    %2375 = vmax.xlane.f32.xlu0 %v2374
    %v2376 = vpop.xlane.xlu0 %2375
    %v2377 = vsel %vm389, %v2369, -inf
    %2378 = vmax.xlane.f32.xlu0 %v2377
    %v2379 = vpop.xlane.xlu0 %2378
    %v2380 = vsub.f32 %v2320, %v2376
    %v2381 = vsub.f32 %v2369, %v2379
    %v2382 = vmul.f32 %v2380, 1.442695
    %v2383 = vpow.pop %v2382
    %v2384 = vmul.f32 %v2381, 1.442695
    %v2385 = vpow.pop %v2384
    %v2386 = vsel %vm389, %v2383, 0.0
    %2387 = vadd.xlane.f32.xlu0 %v2386
    %v2388 = vpop.xlane.xlu0 %2387
    %v2389 = vsel %vm389, %v2385, 0.0
    %2390 = vadd.xlane.f32.xlu0 %v2389
    %v2391 = vpop.xlane.xlu0 %2390
    %v2392 = vrcp.pop %v2388
    %v2393 = vrcp.pop %v2391
    %v2394 = vmul.f32 %v2383, %v2392
    %v2395 = vmul.f32 %v2385, %v2393
    %2396 = vst.msk [vmem:[#allocation23] sm:$0xff] %vm389, %v2394
    %2397 = vst.msk [vmem:[#allocation23 + $0x8] sm:$0xff] %vm389, %v2395
    %v2398 = vld [vmem:[#allocation17] sm:$0xf]
    %v2399 = vld [vmem:[#allocation17 + $0x4] sm:$0xf]
    %v2400 = vld [vmem:[#allocation17 + $0x8] sm:$0xf]
    %v2401 = vld [vmem:[#allocation17 + $0xc] sm:$0xf]
    %v2402 = vld [vmem:[#allocation18] sm:$0x1]
    %v2404 = vlaneseq
    %v2405 = vshrl.u32 %v2404, 7
    %v2406 = vsub.s32 0, %v2405
    %v2407 = vrot.slane %v2402, %v2406
    %v2413 = vunpack.c.l.b16 %v2398
    %v2414 = vunpack.c.l.b16 %v2399
    %v2415 = vunpack.c.l.b16 %v2400
    %v2416 = vunpack.c.l.b16 %v2401
    %v2417 = vpack.c.b16 %v2414, %v2413
    %v2418 = vpack.c.b16 %v2416, %v2415
    %2421 = vmatprep.subr.bf16.mxu0 0
    %2422 = vmatpush1.bf16.msra.mxu0 %v2417
    %2423 = vmatprep.subr.bf16.mxu0 0
    %2424 = vmatpush1.bf16.msra.mxu0 %v2418
    %2425 = vmatprep.subr.bf16.mxu0 0
    %2426 = vmatpush1.bf16.msra.mxu0 0
    %2427 = vmatprep.subr.bf16.mxu0 0
    %2428 = vmatpush1.bf16.msra.mxu0 0
    %2429 = vmatprep.subr.bf16.mxu0 0
    %2430 = vmatpush1.bf16.msra.mxu0 0
    %2431 = vmatprep.subr.bf16.mxu0 0
    %2432 = vmatpush1.bf16.msra.mxu0 0
    %2433 = vmatprep.subr.bf16.mxu0 0
    %2434 = vmatpush1.bf16.msra.mxu0 0
    %2435 = vmatprep.subr.bf16.mxu0 0
    %2436 = vmatpush1.bf16.msra.mxu0 0
    %2437 = vmatprep.subr.bf16.mxu0 0
    %2438 = vmatpush1.bf16.msra.mxu0 0
    %2439 = vmatprep.subr.bf16.mxu0 0
    %2440 = vmatpush1.bf16.msra.mxu0 0
    %2441 = vmatprep.subr.bf16.mxu0 0
    %2442 = vmatpush1.bf16.msra.mxu0 0
    %2443 = vmatprep.subr.bf16.mxu0 0
    %2444 = vmatpush1.bf16.msra.mxu0 0
    %2445 = vmatprep.subr.bf16.mxu0 0
    %2446 = vmatpush1.bf16.msra.mxu0 0
    %2447 = vmatprep.subr.bf16.mxu0 0
    %2448 = vmatpush1.bf16.msra.mxu0 0
    %2449 = vmatprep.subr.bf16.mxu0 0
    %2450 = vmatpush1.bf16.msra.mxu0 0
    %2451 = vmatprep.subr.bf16.mxu0 0
    %2452 = vmatpush1.bf16.msra.mxu0 0
    %2453 = vmatprep.mubr.bf16.mxu0 0
    %2454 = vmatmul.mubr.bf16.gmra.mrb[0].mxu0 %v229
    %v2455 = vpop.f32.mrb[0].mxu0
    %v2456 = vadd.f32 %v2407, %v2455
    %v2457 = vpop.f32.mrb[0].mxu0
    %v2458 = vpop.f32.mrb[0].mxu0
    %v2459 = vadd.f32 %v2407, %v2458
    %v2460 = vpop.f32.mrb[0].mxu0
    %2461 = vdwg.mxu0
    %v2462 = vmax.f32 %v2456, 0.0
    %v2463 = vmax.f32 %v2459, 0.0
    %v2464 = vpack.c.bf16 %v2463, %v2462
    %v2465 = vld [vmem:[#allocation20] sm:$0xf]
    %v2466 = vld [vmem:[#allocation20 + $0x4] sm:$0xf]
    %v2467 = vld [vmem:[#allocation20 + $0x8] sm:$0xf]
    %v2468 = vld [vmem:[#allocation20 + $0xc] sm:$0xf]
    %v2469 = vld [vmem:[#allocation21] sm:$0x1]
    %v2471 = vlaneseq
    %v2472 = vshrl.u32 %v2471, 7
    %v2473 = vsub.s32 0, %v2472
    %v2474 = vrot.slane %v2469, %v2473
    %v2480 = vunpack.c.l.b16 %v2465
    %v2481 = vunpack.c.l.b16 %v2466
    %v2482 = vunpack.c.l.b16 %v2467
    %v2483 = vunpack.c.l.b16 %v2468
    %v2484 = vpack.c.b16 %v2481, %v2480
    %v2485 = vpack.c.b16 %v2483, %v2482
    %v2489 = vsel %vm227, %v2464, 0
    %2491 = vmatprep.subr.bf16.mxu0 0
    %2492 = vmatpush1.bf16.msra.mxu0 %v2484
    %2493 = vmatprep.subr.bf16.mxu0 0
    %2494 = vmatpush1.bf16.msra.mxu0 %v2485
    %2495 = vmatprep.subr.bf16.mxu0 0
    %2496 = vmatpush1.bf16.msra.mxu0 0
    %2497 = vmatprep.subr.bf16.mxu0 0
    %2498 = vmatpush1.bf16.msra.mxu0 0
    %2499 = vmatprep.subr.bf16.mxu0 0
    %2500 = vmatpush1.bf16.msra.mxu0 0
    %2501 = vmatprep.subr.bf16.mxu0 0
    %2502 = vmatpush1.bf16.msra.mxu0 0
    %2503 = vmatprep.subr.bf16.mxu0 0
    %2504 = vmatpush1.bf16.msra.mxu0 0
    %2505 = vmatprep.subr.bf16.mxu0 0
    %2506 = vmatpush1.bf16.msra.mxu0 0
    %2507 = vmatprep.subr.bf16.mxu0 0
    %2508 = vmatpush1.bf16.msra.mxu0 0
    %2509 = vmatprep.subr.bf16.mxu0 0
    %2510 = vmatpush1.bf16.msra.mxu0 0
    %2511 = vmatprep.subr.bf16.mxu0 0
    %2512 = vmatpush1.bf16.msra.mxu0 0
    %2513 = vmatprep.subr.bf16.mxu0 0
    %2514 = vmatpush1.bf16.msra.mxu0 0
    %2515 = vmatprep.subr.bf16.mxu0 0
    %2516 = vmatpush1.bf16.msra.mxu0 0
    %2517 = vmatprep.subr.bf16.mxu0 0
    %2518 = vmatpush1.bf16.msra.mxu0 0
    %2519 = vmatprep.subr.bf16.mxu0 0
    %2520 = vmatpush1.bf16.msra.mxu0 0
    %2521 = vmatprep.subr.bf16.mxu0 0
    %2522 = vmatpush1.bf16.msra.mxu0 0
    %2523 = vmatprep.mubr.bf16.mxu0 0
    %2524 = vmatmul.mubr.bf16.gmra.mrb[0].mxu0 %v2489
    %v2525 = vpop.f32.mrb[0].mxu0
    %v2526 = vadd.f32 %v2474, %v2525
    %v2527 = vpop.f32.mrb[0].mxu0
    %v2528 = vpop.f32.mrb[0].mxu0
    %v2529 = vadd.f32 %v2474, %v2528
    %v2530 = vpop.f32.mrb[0].mxu0
    %2531 = vdwg.mxu0
    %2532 = vst [vmem:[#allocation24] sm:$0xff] %v2526
    %2533 = vst [vmem:[#allocation24 + $0x8] sm:$0xff] %v2529
    // Predicated region
    $region98: #{tpu_custom_call.1} parent=1 // pred_check
      _
    $region99: #{tpu_custom_call.1} parent=1 // pred_check_branch
      %2535 = sbr.rel (0) target = $region101
    $region100: #{tpu_custom_call.1} parent=1 // pred_region
      %s2537 = ssub.s32 256, 256
      %2538 = vsyncadd [#allocation5], %s2537
      %s2539 = sshll.u32 [#allocation23], 4
      %s2540 = int_to_ptr.vmem [resolvable:$true] %s2539
      %2545 = dma.vmem_to_hbm [thread:$0]  %s2540, 256, %s12, [#allocation5], 128, 128, 8
    $region101: #{tpu_custom_call.1} parent=1 // pred_fallthru
      _
    // Predicated region
    $region102: #{tpu_custom_call.1} parent=1 // pred_check
      _
    $region103: #{tpu_custom_call.1} parent=1 // pred_check_branch
      %2547 = sbr.rel (0) target = $region105
    $region104: #{tpu_custom_call.1} parent=1 // pred_region
      %s2549 = ssub.s32 256, 256
      %2550 = vsyncadd [#allocation25], %s2549
      %s2551 = sshll.u32 [#allocation24], 4
      %s2552 = int_to_ptr.vmem [resolvable:$true] %s2551
      %2557 = dma.vmem_to_hbm [thread:$0]  %s2552, 256, %s13, [#allocation25], 128, 128, 8
    $region105: #{tpu_custom_call.1} parent=1 // pred_fallthru
      _
    // Predicated region
    $region106: #{tpu_custom_call.1} parent=1 // pred_check
      _
    $region107: #{tpu_custom_call.1} parent=1 // pred_check_branch
      %2559 = sbr.rel (0) target = $region109
    $region108: #{tpu_custom_call.1} parent=1 // pred_region
      %2560 = dma.done [#allocation5], 256
    $region109: #{tpu_custom_call.1} parent=1 // pred_fallthru
      _
    // Predicated region
    $region110: #{tpu_custom_call.1} parent=1 // pred_check
      _
    $region111: #{tpu_custom_call.1} parent=1 // pred_check_branch
      %2562 = sbr.rel (0) target = $region113
    $region112: #{tpu_custom_call.1} parent=1 // pred_region
      %2563 = dma.done [#allocation25], 256
    $region113: #{tpu_custom_call.1} parent=1 // pred_fallthru
      _
    %2564 = vsyncpa [#allocation4], 1
    %2565 = vsyncpa [#allocation7], 1
    %2566 = vsyncpa [#allocation10], 1
    %2567 = vsyncpa [#allocation13], 1
    %2568 = vsyncpa [#allocation16], 1
    %2569 = vsyncpa [#allocation19], 1
    %2570 = vsyncpa [#allocation22], 1
    %2571 = vsyncpa [#allocation5], 1
    %2572 = vsyncpa [#allocation25], 1

</llo_original>
